<compile_context>
chip_gen: v7x
topology: tpu7x:2x2x1
jax: 0.10.0
libtpu: 0.0.40
codegen_flags: <defaults>
</compile_context>

<pallas_src>
import jax
import jax.numpy as jnp
from jax.experimental import pallas as pl
from jax.experimental.pallas import tpu as pltpu

IN_DIM = 100          # logical input features
HID = 784             # logical hidden / output features
IN_PAD = 128          # 100 padded to one full lane group
HID_PAD = 896         # 784 padded to 7 * 128 lanes


def g_mlp_kernel(x_ref, w1_ref, b1_ref, w2_ref, b2_ref, w3_ref, b3_ref, o_ref):
    # Layer 1: Linear(128 -> 896) + ReLU.  bf16 x bf16 -> f32 accumulate.
    h = jnp.dot(x_ref[...], w1_ref[...], preferred_element_type=jnp.float32)
    h = jnp.maximum(h + b1_ref[...], 0.0).astype(jnp.bfloat16)
    # Layer 2: Linear(896 -> 896) + ReLU
    h = jnp.dot(h, w2_ref[...], preferred_element_type=jnp.float32)
    h = jnp.maximum(h + b2_ref[...], 0.0).astype(jnp.bfloat16)
    # Layer 3: Linear(896 -> 896) + tanh  (EUP transcendental, f32 out)
    h = jnp.dot(h, w3_ref[...], preferred_element_type=jnp.float32)
    o_ref[...] = jnp.tanh(h + b3_ref[...])


def _round_up(n, m):
    return ((n + m - 1) // m) * m


def _chip_traits():
    """(batch_tile_cap, split_single_tile) from the local TPU generation."""
    try:
        kind = jax.devices()[0].device_kind.lower()
    except Exception:
        kind = ""
    is_v5e = ("v5e" in kind) or ("v5 lite" in kind) or ("v5litepod" in kind)
    dual_tc = ("v7" in kind) or ("7x" in kind)          # v7x: 2 TCs per chip
    cap = 128 if is_v5e else 256                        # match MXU M-height
    # Only single-TC chips benefit from splitting an already-fitting tile:
    # the grid is a sequential loop there, weights are not re-fetched, and
    # the extra step overlaps output writeback with the next matmul.
    return cap, (not dual_tc)


def _choose_batch_tile(batch):
    cap, split_single_tile = _chip_traits()
    b8 = _round_up(batch, 8)
    bt = min(b8, cap)
    if split_single_tile and b8 == bt and b8 >= 16:
        bt = _round_up((b8 + 1) // 2, 8)
    return bt


def _vmem_limit_bytes(batch_tile):
    """Tight-but-safe scoped VMEM: 2x the analytic block footprint."""
    w_bytes = (IN_PAD * HID_PAD + 2 * HID_PAD * HID_PAD) * 2   # bf16, single-buf
    b_bytes = 3 * HID_PAD * 4                                  # f32 biases
    x_bytes = 2 * batch_tile * IN_PAD * 2                      # double-buf bf16
    o_bytes = 2 * batch_tile * HID_PAD * 4                     # double-buf f32
    h_bytes = 3 * batch_tile * HID_PAD * 4                     # f32 + bf16 temps
    need = w_bytes + b_bytes + x_bytes + o_bytes + h_bytes
    return int(min(max(2 * need, 16 * 1024 * 1024), 32 * 1024 * 1024))


def _build_g_call(padded_batch, batch_tile):
    def const_spec(shape):
        # Grid-invariant weight/bias blocks: single-buffered (constant index).
        return pl.BlockSpec(shape, lambda i: (0, 0), pipeline_mode=pl.Buffered(1))

    in_specs = [
        pl.BlockSpec((batch_tile, IN_PAD), lambda i: (i, 0)),   # x tile
        const_spec((IN_PAD, HID_PAD)),    # w1
        const_spec((1, HID_PAD)),         # b1
        const_spec((HID_PAD, HID_PAD)),   # w2
        const_spec((1, HID_PAD)),         # b2
        const_spec((HID_PAD, HID_PAD)),   # w3
        const_spec((1, HID_PAD)),         # b3
    ]
    out_spec = pl.BlockSpec((batch_tile, HID_PAD), lambda i: (i, 0))

    flops = 2 * padded_batch * (IN_PAD * HID_PAD + 2 * HID_PAD * HID_PAD)
    bytes_accessed = (
        padded_batch * IN_PAD * 2                            # x (bf16)
        + (IN_PAD * HID_PAD + 2 * HID_PAD * HID_PAD) * 2     # weights (bf16)
        + 3 * HID_PAD * 4                                    # biases (f32)
        + padded_batch * HID_PAD * 4                         # out (f32)
    )

    return pl.pallas_call(
        g_mlp_kernel,
        out_shape=jax.ShapeDtypeStruct((padded_batch, HID_PAD), jnp.float32),
        grid_spec=pltpu.PrefetchScalarGridSpec(
            num_scalar_prefetch=0,
            grid=(padded_batch // batch_tile,),
            in_specs=in_specs,
            out_specs=out_spec,
        ),
        compiler_params=pltpu.CompilerParams(
            dimension_semantics=("parallel",),
            vmem_limit_bytes=_vmem_limit_bytes(batch_tile),
        ),
        cost_estimate=pl.CostEstimate(
            flops=flops,
            transcendentals=padded_batch * HID_PAD,
            bytes_accessed=bytes_accessed,
        ),
    )


def g_forward(x, padded_params, *, batch_tile=None, padded_io=False):
    """Generator forward pass.

    x:              (B, 100) float32   (or (Bp, 128) bf16 if padded_io=True)
    padded_params:  dict from pad_params(): w* bf16 zero-padded, b* f32.
    returns:        (B, 784) float32   (or (Bp, 896) f32 if padded_io=True)
    """
    if padded_io:
        # Hot path: caller supplies lane-dense bf16 input and consumes the
        # padded output directly (skips the wrapper pad / strided slice).
        xp = x
        B = None
        Bp, d_in = x.shape
        assert d_in == IN_PAD and xp.dtype == jnp.bfloat16
        bt = _choose_batch_tile(Bp) if batch_tile is None else batch_tile
        assert Bp % bt == 0
    else:
        B, d_in = x.shape
        assert d_in == IN_DIM
        bt = _choose_batch_tile(B) if batch_tile is None else batch_tile
        assert bt % 8 == 0, "batch_tile must be a multiple of 8 sublanes"
        Bp = _round_up(B, bt)
        # Zero-pad batch rows + feature lanes, cast matmul operand to bf16.
        xp = jnp.pad(x, ((0, Bp - B), (0, IN_PAD - IN_DIM))).astype(jnp.bfloat16)

    args = (xp,
            padded_params["w1"], padded_params["b1"],
            padded_params["w2"], padded_params["b2"],
            padded_params["w3"], padded_params["b3"])

    out = _build_g_call(Bp, bt)(*args)

    if padded_io:
        return out
    return out[:B, :HID]


def init_params(key):
    """Deterministic init matching nn.Linear; weights stored as (in, out) f32."""
    ks = jax.random.split(key, 6)

    def linear(kw, kb, fan_in, fan_out):
        bound = 1.0 / jnp.sqrt(fan_in)
        # PyTorch stores W as (out, in); generate (out, in) then transpose.
        w = jax.random.uniform(kw, (fan_out, fan_in), jnp.float32, -bound, bound)
        b = jax.random.uniform(kb, (fan_out,), jnp.float32, -bound, bound)
        return w.T, b.reshape(1, fan_out)

    w1, b1 = linear(ks[0], ks[1], IN_DIM, HID)
    w2, b2 = linear(ks[2], ks[3], HID, HID)
    w3, b3 = linear(ks[4], ks[5], HID, HID)
    return dict(w1=w1, b1=b1, w2=w2, b2=b2, w3=w3, b3=b3)


def pad_params(p):
    """One-time zero-pad to lane-dense shapes; weights -> bf16, biases stay f32."""
    dh = HID_PAD - HID
    di = IN_PAD - IN_DIM
    return dict(
        w1=jnp.pad(p["w1"], ((0, di), (0, dh))).astype(jnp.bfloat16),
        b1=jnp.pad(p["b1"], ((0, 0), (0, dh))),
        w2=jnp.pad(p["w2"], ((0, dh), (0, dh))).astype(jnp.bfloat16),
        b2=jnp.pad(p["b2"], ((0, 0), (0, dh))),
        w3=jnp.pad(p["w3"], ((0, dh), (0, dh))).astype(jnp.bfloat16),
        b3=jnp.pad(p["b3"], ((0, 0), (0, dh))),
    )


def g_forward_ref_bf16(x, p):
    """Reference mimicking the kernel's bf16-operand / f32-accumulate precision."""
    def mm(a, w):
        return jnp.dot(a.astype(jnp.bfloat16), w.astype(jnp.bfloat16),
                       preferred_element_type=jnp.float32)
    h = jax.nn.relu(mm(x, p["w1"]) + p["b1"])
    h = jax.nn.relu(mm(h, p["w2"]) + p["b2"])
    return jnp.tanh(mm(h, p["w3"]) + p["b3"])


def g_forward_ref_f32(x, p):
    h = jax.nn.relu(x @ p["w1"] + p["b1"])
    h = jax.nn.relu(h @ p["w2"] + p["b2"])
    return jnp.tanh(h @ p["w3"] + p["b3"])


if __name__ == "__main__":
    key = jax.random.PRNGKey(0)
    k_param, k_x1, k_x2 = jax.random.split(key, 3)
    params = init_params(k_param)
    pparams = pad_params(params)

    # Small batch, auto (generation-aware) tiling.
    x1 = jax.random.normal(k_x1, (8, IN_DIM), jnp.float32)
    out1 = jax.block_until_ready(g_forward(x1, pparams))
    assert out1.shape == (8, HID)
    ref1_bf16 = g_forward_ref_bf16(x1, params)
    ref1_f32 = g_forward_ref_f32(x1, params)
    assert jnp.allclose(out1, ref1_bf16, atol=5e-3, rtol=5e-3)
    assert jnp.allclose(out1, ref1_f32, atol=6e-2, rtol=6e-2)

    # Ragged batch exercising multi-step grid + batch padding.
    x2 = jax.random.normal(k_x2, (20, IN_DIM), jnp.float32)
    out2 = jax.block_until_ready(g_forward(x2, pparams, batch_tile=8))
    assert out2.shape == (20, HID)
    ref2_bf16 = g_forward_ref_bf16(x2, params)
    assert jnp.allclose(out2, ref2_bf16, atol=5e-3, rtol=5e-3)

    print("KERNEL_OK")
</pallas_src>

<mosaic_0001>
module attributes {stable_mosaic.version = 11 : i64} {
  func.func @g_mlp_kernel(%arg0: i32, %arg1: memref<8x128xbf16, #tpu.memory_space<vmem>>, %arg2: memref<128x896xbf16, #tpu.memory_space<vmem>>, %arg3: memref<1x896xf32, #tpu.memory_space<vmem>>, %arg4: memref<896x896xbf16, #tpu.memory_space<vmem>>, %arg5: memref<1x896xf32, #tpu.memory_space<vmem>>, %arg6: memref<896x896xbf16, #tpu.memory_space<vmem>>, %arg7: memref<1x896xf32, #tpu.memory_space<vmem>>, %arg8: memref<8x896xf32, #tpu.memory_space<vmem>>) attributes {dimension_semantics = [#tpu.dimension_semantics<parallel>], iteration_bounds = array<i64: 1>, scalar_prefetch = 0 : i64, scratch_operands = 0 : i64, tpu.core_type = #tpu.core_type<tc>, window_params = [{transform_indices = @transform_0, window_bounds = array<i64: 8, 128>}, {pipeline_mode = #tpu.pipeline_mode<synchronous>, transform_indices = @transform_1, window_bounds = array<i64: 128, 896>}, {pipeline_mode = #tpu.pipeline_mode<synchronous>, transform_indices = @transform_2, window_bounds = array<i64: 1, 896>}, {pipeline_mode = #tpu.pipeline_mode<synchronous>, transform_indices = @transform_3, window_bounds = array<i64: 896, 896>}, {pipeline_mode = #tpu.pipeline_mode<synchronous>, transform_indices = @transform_4, window_bounds = array<i64: 1, 896>}, {pipeline_mode = #tpu.pipeline_mode<synchronous>, transform_indices = @transform_5, window_bounds = array<i64: 896, 896>}, {pipeline_mode = #tpu.pipeline_mode<synchronous>, transform_indices = @transform_6, window_bounds = array<i64: 1, 896>}, {transform_indices = @transform_7, window_bounds = array<i64: 8, 896>}]} {
    %c0 = arith.constant 0 : index
    %c0_0 = arith.constant 0 : index
    %0 = vector.load %arg1[%c0, %c0_0] : memref<8x128xbf16, #tpu.memory_space<vmem>>, vector<8x128xbf16>
    %c0_1 = arith.constant 0 : index
    %c0_2 = arith.constant 0 : index
    %1 = vector.load %arg2[%c0_1, %c0_2] : memref<128x896xbf16, #tpu.memory_space<vmem>>, vector<128x896xbf16>
    %cst = arith.constant dense<0.000000e+00> : vector<8x896xf32>
    %2 = tpu.matmul %0, %1, %cst {dimension_numbers = #tpu.dot_dimension_numbers<[1], [0], [0], [1], [0, 0, 1, 1], [], []>} : vector<8x128xbf16>, vector<128x896xbf16>, vector<8x896xf32> -> vector<8x896xf32>
    %c0_3 = arith.constant 0 : index
    %c0_4 = arith.constant 0 : index
    %3 = vector.load %arg3[%c0_3, %c0_4] : memref<1x896xf32, #tpu.memory_space<vmem>>, vector<1x896xf32>
    %4 = vector.broadcast %3 : vector<1x896xf32> to vector<8x896xf32>
    %5 = arith.addf %2, %4 : vector<8x896xf32>
    %cst_5 = arith.constant 0.000000e+00 : f32
    %6 = vector.broadcast %cst_5 : f32 to vector<8x896xf32>
    %7 = arith.maximumf %5, %6 : vector<8x896xf32>
    %8 = arith.truncf %7 : vector<8x896xf32> to vector<8x896xbf16>
    %c0_6 = arith.constant 0 : index
    %c0_7 = arith.constant 0 : index
    %9 = vector.load %arg4[%c0_6, %c0_7] : memref<896x896xbf16, #tpu.memory_space<vmem>>, vector<896x896xbf16>
    %cst_8 = arith.constant dense<0.000000e+00> : vector<8x896xf32>
    %10 = tpu.matmul %8, %9, %cst_8 {dimension_numbers = #tpu.dot_dimension_numbers<[1], [0], [0], [1], [0, 0, 1, 1], [], []>} : vector<8x896xbf16>, vector<896x896xbf16>, vector<8x896xf32> -> vector<8x896xf32>
    %c0_9 = arith.constant 0 : index
    %c0_10 = arith.constant 0 : index
    %11 = vector.load %arg5[%c0_9, %c0_10] : memref<1x896xf32, #tpu.memory_space<vmem>>, vector<1x896xf32>
    %12 = vector.broadcast %11 : vector<1x896xf32> to vector<8x896xf32>
    %13 = arith.addf %10, %12 : vector<8x896xf32>
    %cst_11 = arith.constant 0.000000e+00 : f32
    %14 = vector.broadcast %cst_11 : f32 to vector<8x896xf32>
    %15 = arith.maximumf %13, %14 : vector<8x896xf32>
    %16 = arith.truncf %15 : vector<8x896xf32> to vector<8x896xbf16>
    %c0_12 = arith.constant 0 : index
    %c0_13 = arith.constant 0 : index
    %17 = vector.load %arg6[%c0_12, %c0_13] : memref<896x896xbf16, #tpu.memory_space<vmem>>, vector<896x896xbf16>
    %cst_14 = arith.constant dense<0.000000e+00> : vector<8x896xf32>
    %18 = tpu.matmul %16, %17, %cst_14 {dimension_numbers = #tpu.dot_dimension_numbers<[1], [0], [0], [1], [0, 0, 1, 1], [], []>} : vector<8x896xbf16>, vector<896x896xbf16>, vector<8x896xf32> -> vector<8x896xf32>
    %c0_15 = arith.constant 0 : index
    %c0_16 = arith.constant 0 : index
    %19 = vector.load %arg7[%c0_15, %c0_16] : memref<1x896xf32, #tpu.memory_space<vmem>>, vector<1x896xf32>
    %20 = vector.broadcast %19 : vector<1x896xf32> to vector<8x896xf32>
    %21 = arith.addf %18, %20 : vector<8x896xf32>
    %22 = math.tanh %21 : vector<8x896xf32>
    %c0_17 = arith.constant 0 : index
    %c0_18 = arith.constant 0 : index
    %23 = vector.load %arg8[%c0_17, %c0_18] : memref<8x896xf32, #tpu.memory_space<vmem>>, vector<8x896xf32>
    tpu.vector_store %arg8[%c0_17, %c0_18], %22 {strides = array<i32>} : memref<8x896xf32, #tpu.memory_space<vmem>>, vector<8x896xf32>,
    return
  }
  func.func @transform_0(%arg0: i32) -> (i32, i32) {
    %c0_i32 = arith.constant 0 : i32
    %c0_i32_0 = arith.constant 0 : i32
    return %arg0, %c0_i32 : i32, i32
  }
  func.func @transform_1(%arg0: i32) -> (i32, i32) {
    %c0_i32 = arith.constant 0 : i32
    %c0_i32_0 = arith.constant 0 : i32
    %c0_i32_1 = arith.constant 0 : i32
    return %c0_i32, %c0_i32_0 : i32, i32
  }
  func.func @transform_2(%arg0: i32) -> (i32, i32) {
    %c0_i32 = arith.constant 0 : i32
    %c0_i32_0 = arith.constant 0 : i32
    %c0_i32_1 = arith.constant 0 : i32
    return %c0_i32, %c0_i32_0 : i32, i32
  }
  func.func @transform_3(%arg0: i32) -> (i32, i32) {
    %c0_i32 = arith.constant 0 : i32
    %c0_i32_0 = arith.constant 0 : i32
    %c0_i32_1 = arith.constant 0 : i32
    return %c0_i32, %c0_i32_0 : i32, i32
  }
  func.func @transform_4(%arg0: i32) -> (i32, i32) {
    %c0_i32 = arith.constant 0 : i32
    %c0_i32_0 = arith.constant 0 : i32
    %c0_i32_1 = arith.constant 0 : i32
    return %c0_i32, %c0_i32_0 : i32, i32
  }
  func.func @transform_5(%arg0: i32) -> (i32, i32) {
    %c0_i32 = arith.constant 0 : i32
    %c0_i32_0 = arith.constant 0 : i32
    %c0_i32_1 = arith.constant 0 : i32
    return %c0_i32, %c0_i32_0 : i32, i32
  }
  func.func @transform_6(%arg0: i32) -> (i32, i32) {
    %c0_i32 = arith.constant 0 : i32
    %c0_i32_0 = arith.constant 0 : i32
    %c0_i32_1 = arith.constant 0 : i32
    return %c0_i32, %c0_i32_0 : i32, i32
  }
  func.func @transform_7(%arg0: i32) -> (i32, i32) {
    %c0_i32 = arith.constant 0 : i32
    %c0_i32_0 = arith.constant 0 : i32
    return %arg0, %c0_i32 : i32, i32
  }
}

</mosaic_0001>

<llo_original>
// kernel: tpu_custom_call.1
$region0: #{tpu_custom_call.1}
  #allocation0 [shape = 'u32[]', space=smem, size = 0x4, offset = 0x4, fixed_abs, tag = 'smem constant byte address 0x4 - core index']
  #allocation1 [shape = 'u32[144,128]{1,0:T(1,128)}', space=vmem, size = 0x12000, scoped, tag = 'internal scratch']
  %s0 = inlined_call_operand.hbm [shape: bf16[8,128], index: 0, kind: input, shape index: {}]
  %s1 = inlined_call_operand.hbm [shape: bf16[128,896], index: 1, kind: input, shape index: {}]
  %s2 = inlined_call_operand.hbm [shape: f32[1,896], index: 2, kind: input, shape index: {}]
  %s3 = inlined_call_operand.hbm [shape: bf16[896,896], index: 3, kind: input, shape index: {}]
  %s4 = inlined_call_operand.hbm [shape: f32[1,896], index: 4, kind: input, shape index: {}]
  %s5 = inlined_call_operand.hbm [shape: bf16[896,896], index: 5, kind: input, shape index: {}]
  %s6 = inlined_call_operand.hbm [shape: f32[1,896], index: 6, kind: input, shape index: {}]
  %s7 = inlined_call_operand.hbm [shape: f32[8,896], index: 7, kind: output, shape index: {}]
  %s8 = sld [smem:[#allocation0]]
  $region66: #{tpu_custom_call.1} parent=0
    _
  %s10 = ssub.s32 1, %s8
  %s11 = scalar_select 0, %s10, %s8
  $region1: #{tpu_custom_call.1} parent=0
    #allocation2 [shape = 'u8[2048]{0}', space=vmem, size = 0x800, scoped, tag = 'input window, operand 0, single buffered']
    #allocation3 [shape = 's32[1]{0}', space=sflag, size = 0x4, scoped, tag = 'scoped memory for tpu_custom_call.1']
    #allocation4 [shape = 's32[1]{0}', space=sflag, size = 0x4, scoped, tag = 'scoped memory for tpu_custom_call.1']
    #allocation5 [shape = 'u8[229376]{0}', space=vmem, size = 0x38000, scoped, tag = 'input window, operand 1, single buffered']
    #allocation6 [shape = 's32[1]{0}', space=sflag, size = 0x4, scoped, tag = 'scoped memory for tpu_custom_call.1']
    #allocation7 [shape = 'u8[3584]{0}', space=vmem, size = 0x1000, scoped, tag = 'input window, operand 2, single buffered']
    #allocation8 [shape = 'u8[1605632]{0}', space=vmem, size = 0x188000, scoped, tag = 'input window, operand 3, single buffered']
    #allocation9 [shape = 's32[1]{0}', space=sflag, size = 0x4, scoped, tag = 'scoped memory for tpu_custom_call.1']
    #allocation10 [shape = 'u8[3584]{0}', space=vmem, size = 0x1000, scoped, tag = 'input window, operand 4, single buffered']
    #allocation11 [shape = 'u8[1605632]{0}', space=vmem, size = 0x188000, scoped, tag = 'input window, operand 5, single buffered']
    #allocation12 [shape = 's32[1]{0}', space=sflag, size = 0x4, scoped, tag = 'scoped memory for tpu_custom_call.1']
    #allocation13 [shape = 'u8[3584]{0}', space=vmem, size = 0x1000, scoped, tag = 'input window, operand 6, single buffered']
    #allocation14 [shape = 'u8[28672]{0}', space=vmem, size = 0x7000, scoped, tag = 'output window, operand 0, single buffered']
    %12 = vsyncpa [#allocation3], 0
    %13 = vsyncpa [#allocation6], 0
    %14 = vsyncpa [#allocation9], 0
    %15 = vsyncpa [#allocation12], 0
    %16 = vsyncpa [#allocation4], 0
    // Predicated region
    $region2: #{tpu_custom_call.1} parent=1 // pred_check
      _
    $region3: #{tpu_custom_call.1} parent=1 // pred_check_branch
      %18 = sbr.rel (0) target = $region5
    $region4: #{tpu_custom_call.1} parent=1 // pred_region
      %s20 = ssub.s32 64, 64
      %21 = vsyncadd [#allocation3], %s20
      %s23 = sshll.u32 [#allocation2], 4
      %s24 = int_to_ptr.vmem [resolvable:$true] %s23
      %26 = dma.hbm_to_vmem [thread:$0]  %s0, 64, %s24, [#allocation3]
    $region5: #{tpu_custom_call.1} parent=1 // pred_fallthru
      _
    // Predicated region
    $region6: #{tpu_custom_call.1} parent=1 // pred_check
      _
    $region7: #{tpu_custom_call.1} parent=1 // pred_check_branch
      %28 = sbr.rel (0) target = $region9
    $region8: #{tpu_custom_call.1} parent=1 // pred_region
      %s30 = ssub.s32 7168, 7168
      %31 = vsyncadd [#allocation6], %s30
      %s32 = sshll.u32 [#allocation5], 4
      %s33 = int_to_ptr.vmem [resolvable:$true] %s32
      %38 = dma.hbm_to_vmem [thread:$0]  %s1, 7168, %s33, [#allocation6], 448, 448, 28
    $region9: #{tpu_custom_call.1} parent=1 // pred_fallthru
      _
    // Predicated region
    $region10: #{tpu_custom_call.1} parent=1 // pred_check
      _
    $region11: #{tpu_custom_call.1} parent=1 // pred_check_branch
      %40 = sbr.rel (0) target = $region13
    $region12: #{tpu_custom_call.1} parent=1 // pred_region
      %s42 = ssub.s32 112, 112
      %43 = vsyncadd [#allocation6], %s42
      %s45 = sshll.u32 [#allocation7], 4
      %s46 = int_to_ptr.vmem [resolvable:$true] %s45
      %48 = dma.hbm_to_vmem [thread:$0]  %s2, 112, %s46, [#allocation6]
    $region13: #{tpu_custom_call.1} parent=1 // pred_fallthru
      _
    // Predicated region
    $region14: #{tpu_custom_call.1} parent=1 // pred_check
      _
    $region15: #{tpu_custom_call.1} parent=1 // pred_check_branch
      %50 = sbr.rel (0) target = $region17
    $region16: #{tpu_custom_call.1} parent=1 // pred_region
      %s52 = ssub.s32 50176, 50176
      %53 = vsyncadd [#allocation9], %s52
      %s54 = sshll.u32 [#allocation8], 4
      %s55 = int_to_ptr.vmem [resolvable:$true] %s54
      %60 = dma.hbm_to_vmem [thread:$0]  %s3, 50176, %s55, [#allocation9], 448, 448, 28
    $region17: #{tpu_custom_call.1} parent=1 // pred_fallthru
      _
    // Predicated region
    $region18: #{tpu_custom_call.1} parent=1 // pred_check
      _
    $region19: #{tpu_custom_call.1} parent=1 // pred_check_branch
      %62 = sbr.rel (0) target = $region21
    $region20: #{tpu_custom_call.1} parent=1 // pred_region
      %s64 = ssub.s32 112, 112
      %65 = vsyncadd [#allocation9], %s64
      %s67 = sshll.u32 [#allocation10], 4
      %s68 = int_to_ptr.vmem [resolvable:$true] %s67
      %70 = dma.hbm_to_vmem [thread:$0]  %s4, 112, %s68, [#allocation9]
    $region21: #{tpu_custom_call.1} parent=1 // pred_fallthru
      _
    // Predicated region
    $region22: #{tpu_custom_call.1} parent=1 // pred_check
      _
    $region23: #{tpu_custom_call.1} parent=1 // pred_check_branch
      %72 = sbr.rel (0) target = $region25
    $region24: #{tpu_custom_call.1} parent=1 // pred_region
      %s74 = ssub.s32 50176, 50176
      %75 = vsyncadd [#allocation12], %s74
      %s76 = sshll.u32 [#allocation11], 4
      %s77 = int_to_ptr.vmem [resolvable:$true] %s76
      %82 = dma.hbm_to_vmem [thread:$0]  %s5, 50176, %s77, [#allocation12], 448, 448, 28
    $region25: #{tpu_custom_call.1} parent=1 // pred_fallthru
      _
    // Predicated region
    $region26: #{tpu_custom_call.1} parent=1 // pred_check
      _
    $region27: #{tpu_custom_call.1} parent=1 // pred_check_branch
      %84 = sbr.rel (0) target = $region29
    $region28: #{tpu_custom_call.1} parent=1 // pred_region
      %s86 = ssub.s32 112, 112
      %87 = vsyncadd [#allocation12], %s86
      %s89 = sshll.u32 [#allocation13], 4
      %s90 = int_to_ptr.vmem [resolvable:$true] %s89
      %92 = dma.hbm_to_vmem [thread:$0]  %s6, 112, %s90, [#allocation12]
    $region29: #{tpu_custom_call.1} parent=1 // pred_fallthru
      _
    // Predicated region
    $region30: #{tpu_custom_call.1} parent=1 // pred_check
      _
    $region31: #{tpu_custom_call.1} parent=1 // pred_check_branch
      %94 = sbr.rel (0) target = $region33
    $region32: #{tpu_custom_call.1} parent=1 // pred_region
      %95 = dma.done [#allocation3], 64
    $region33: #{tpu_custom_call.1} parent=1 // pred_fallthru
      _
    // Predicated region
    $region34: #{tpu_custom_call.1} parent=1 // pred_check
      _
    $region35: #{tpu_custom_call.1} parent=1 // pred_check_branch
      %97 = sbr.rel (0) target = $region37
    $region36: #{tpu_custom_call.1} parent=1 // pred_region
      %98 = dma.done [#allocation6], 7168
    $region37: #{tpu_custom_call.1} parent=1 // pred_fallthru
      _
    // Predicated region
    $region38: #{tpu_custom_call.1} parent=1 // pred_check
      _
    $region39: #{tpu_custom_call.1} parent=1 // pred_check_branch
      %100 = sbr.rel (0) target = $region41
    $region40: #{tpu_custom_call.1} parent=1 // pred_region
      %101 = dma.done [#allocation6], 112
    $region41: #{tpu_custom_call.1} parent=1 // pred_fallthru
      _
    // Predicated region
    $region42: #{tpu_custom_call.1} parent=1 // pred_check
      _
    $region43: #{tpu_custom_call.1} parent=1 // pred_check_branch
      %103 = sbr.rel (0) target = $region45
    $region44: #{tpu_custom_call.1} parent=1 // pred_region
      %104 = dma.done [#allocation9], 50176
    $region45: #{tpu_custom_call.1} parent=1 // pred_fallthru
      _
    // Predicated region
    $region46: #{tpu_custom_call.1} parent=1 // pred_check
      _
    $region47: #{tpu_custom_call.1} parent=1 // pred_check_branch
      %106 = sbr.rel (0) target = $region49
    $region48: #{tpu_custom_call.1} parent=1 // pred_region
      %107 = dma.done [#allocation9], 112
    $region49: #{tpu_custom_call.1} parent=1 // pred_fallthru
      _
    // Predicated region
    $region50: #{tpu_custom_call.1} parent=1 // pred_check
      _
    $region51: #{tpu_custom_call.1} parent=1 // pred_check_branch
      %109 = sbr.rel (0) target = $region53
    $region52: #{tpu_custom_call.1} parent=1 // pred_region
      %110 = dma.done [#allocation12], 50176
    $region53: #{tpu_custom_call.1} parent=1 // pred_fallthru
      _
    // Predicated region
    $region54: #{tpu_custom_call.1} parent=1 // pred_check
      _
    $region55: #{tpu_custom_call.1} parent=1 // pred_check_branch
      %112 = sbr.rel (0) target = $region57
    $region56: #{tpu_custom_call.1} parent=1 // pred_region
      %113 = dma.done [#allocation12], 112
    $region57: #{tpu_custom_call.1} parent=1 // pred_fallthru
      _
    %v115 = vld [vmem:[#allocation2] sm:$0xf]
    %v116 = vld [vmem:[#allocation5] sm:$0xff]
    %v117 = vld [vmem:[#allocation5 + $0x8] sm:$0xff]
    %v118 = vld [vmem:[#allocation5 + $0x10] sm:$0xff]
    %v119 = vld [vmem:[#allocation5 + $0x18] sm:$0xf]
    %v120 = vld [vmem:[#allocation5 + $0x1c] sm:$0xff]
    %v121 = vld [vmem:[#allocation5 + $0x24] sm:$0xff]
    %v122 = vld [vmem:[#allocation5 + $0x2c] sm:$0xff]
    %v123 = vld [vmem:[#allocation5 + $0x34] sm:$0xf]
    %v124 = vld [vmem:[#allocation5 + $0x38] sm:$0xff]
    %v125 = vld [vmem:[#allocation5 + $0x40] sm:$0xff]
    %v126 = vld [vmem:[#allocation5 + $0x48] sm:$0xff]
    %v127 = vld [vmem:[#allocation5 + $0x50] sm:$0xf]
    %v128 = vld [vmem:[#allocation5 + $0x54] sm:$0xff]
    %v129 = vld [vmem:[#allocation5 + $0x5c] sm:$0xff]
    %v130 = vld [vmem:[#allocation5 + $0x64] sm:$0xff]
    %v131 = vld [vmem:[#allocation5 + $0x6c] sm:$0xf]
    %v132 = vld [vmem:[#allocation5 + $0x70] sm:$0xff]
    %v133 = vld [vmem:[#allocation5 + $0x78] sm:$0xff]
    %v134 = vld [vmem:[#allocation5 + $0x80] sm:$0xff]
    %v135 = vld [vmem:[#allocation5 + $0x88] sm:$0xf]
    %v136 = vld [vmem:[#allocation5 + $0x8c] sm:$0xff]
    %v137 = vld [vmem:[#allocation5 + $0x94] sm:$0xff]
    %v138 = vld [vmem:[#allocation5 + $0x9c] sm:$0xff]
    %v139 = vld [vmem:[#allocation5 + $0xa4] sm:$0xf]
    %v140 = vld [vmem:[#allocation5 + $0xa8] sm:$0xff]
    %v141 = vld [vmem:[#allocation5 + $0xb0] sm:$0xff]
    %v142 = vld [vmem:[#allocation5 + $0xb8] sm:$0xff]
    %v143 = vld [vmem:[#allocation5 + $0xc0] sm:$0xf]
    %v144 = vld [vmem:[#allocation5 + $0xc4] sm:$0xff]
    %v145 = vld [vmem:[#allocation5 + $0xcc] sm:$0xff]
    %v146 = vld [vmem:[#allocation5 + $0xd4] sm:$0xff]
    %v147 = vld [vmem:[#allocation5 + $0xdc] sm:$0xf]
    %v148 = vld [vmem:[#allocation5 + $0xe0] sm:$0xff]
    %v149 = vld [vmem:[#allocation5 + $0xe8] sm:$0xff]
    %v150 = vld [vmem:[#allocation5 + $0xf0] sm:$0xff]
    %v151 = vld [vmem:[#allocation5 + $0xf8] sm:$0xf]
    %v152 = vld [vmem:[#allocation5 + $0xfc] sm:$0xff]
    %v153 = vld [vmem:[#allocation5 + $0x104] sm:$0xff]
    %v154 = vld [vmem:[#allocation5 + $0x10c] sm:$0xff]
    %v155 = vld [vmem:[#allocation5 + $0x114] sm:$0xf]
    %v156 = vld [vmem:[#allocation5 + $0x118] sm:$0xff]
    %v157 = vld [vmem:[#allocation5 + $0x120] sm:$0xff]
    %v158 = vld [vmem:[#allocation5 + $0x128] sm:$0xff]
    %v159 = vld [vmem:[#allocation5 + $0x130] sm:$0xf]
    %v160 = vld [vmem:[#allocation5 + $0x134] sm:$0xff]
    %v161 = vld [vmem:[#allocation5 + $0x13c] sm:$0xff]
    %v162 = vld [vmem:[#allocation5 + $0x144] sm:$0xff]
    %v163 = vld [vmem:[#allocation5 + $0x14c] sm:$0xf]
    %v164 = vld [vmem:[#allocation5 + $0x150] sm:$0xff]
    %v165 = vld [vmem:[#allocation5 + $0x158] sm:$0xff]
    %v166 = vld [vmem:[#allocation5 + $0x160] sm:$0xff]
    %v167 = vld [vmem:[#allocation5 + $0x168] sm:$0xf]
    %v168 = vld [vmem:[#allocation5 + $0x16c] sm:$0xff]
    %v169 = vld [vmem:[#allocation5 + $0x174] sm:$0xff]
    %v170 = vld [vmem:[#allocation5 + $0x17c] sm:$0xff]
    %v171 = vld [vmem:[#allocation5 + $0x184] sm:$0xf]
    %v172 = vld [vmem:[#allocation5 + $0x188] sm:$0xff]
    %v173 = vld [vmem:[#allocation5 + $0x190] sm:$0xff]
    %v174 = vld [vmem:[#allocation5 + $0x198] sm:$0xff]
    %v175 = vld [vmem:[#allocation5 + $0x1a0] sm:$0xf]
    %v176 = vld [vmem:[#allocation5 + $0x1a4] sm:$0xff]
    %v177 = vld [vmem:[#allocation5 + $0x1ac] sm:$0xff]
    %v178 = vld [vmem:[#allocation5 + $0x1b4] sm:$0xff]
    %v179 = vld [vmem:[#allocation5 + $0x1bc] sm:$0xf]
    %v180 = vld [vmem:[#allocation7] sm:$0xff]
    %v182 = vlaneseq
    %v183 = vshrl.u32 %v182, 7
    %v184 = vsub.s32 0, %v183
    %v185 = vrot.slane %v180, %v184
    %v186 = vlaneseq
    %v187 = vshrl.u32 %v186, 7
    %v188 = vsub.s32 1, %v187
    %v189 = vrot.slane %v180, %v188
    %v190 = vlaneseq
    %v191 = vshrl.u32 %v190, 7
    %v192 = vsub.s32 2, %v191
    %v193 = vrot.slane %v180, %v192
    %v194 = vlaneseq
    %v195 = vshrl.u32 %v194, 7
    %v196 = vsub.s32 3, %v195
    %v197 = vrot.slane %v180, %v196
    %v198 = vlaneseq
    %v199 = vshrl.u32 %v198, 7
    %v200 = vsub.s32 4, %v199
    %v201 = vrot.slane %v180, %v200
    %v202 = vlaneseq
    %v203 = vshrl.u32 %v202, 7
    %v204 = vsub.s32 5, %v203
    %v205 = vrot.slane %v180, %v204
    %v206 = vlaneseq
    %v207 = vshrl.u32 %v206, 7
    %v208 = vsub.s32 6, %v207
    %v209 = vrot.slane %v180, %v208
    %v281 = vunpack.c.l.b16 %v116
    %v282 = vunpack.c.h.b16 %v116
    %v283 = vunpack.c.l.b16 %v117
    %v284 = vunpack.c.h.b16 %v117
    %v285 = vunpack.c.l.b16 %v118
    %v286 = vunpack.c.h.b16 %v118
    %v287 = vunpack.c.l.b16 %v119
    %v288 = vunpack.c.l.b16 %v120
    %v289 = vunpack.c.h.b16 %v120
    %v290 = vunpack.c.l.b16 %v121
    %v291 = vunpack.c.h.b16 %v121
    %v292 = vunpack.c.l.b16 %v122
    %v293 = vunpack.c.h.b16 %v122
    %v294 = vunpack.c.l.b16 %v123
    %v295 = vunpack.c.l.b16 %v124
    %v296 = vunpack.c.h.b16 %v124
    %v297 = vunpack.c.l.b16 %v125
    %v298 = vunpack.c.h.b16 %v125
    %v299 = vunpack.c.l.b16 %v126
    %v300 = vunpack.c.h.b16 %v126
    %v301 = vunpack.c.l.b16 %v127
    %v302 = vunpack.c.l.b16 %v128
    %v303 = vunpack.c.h.b16 %v128
    %v304 = vunpack.c.l.b16 %v129
    %v305 = vunpack.c.h.b16 %v129
    %v306 = vunpack.c.l.b16 %v130
    %v307 = vunpack.c.h.b16 %v130
    %v308 = vunpack.c.l.b16 %v131
    %v309 = vunpack.c.l.b16 %v132
    %v310 = vunpack.c.h.b16 %v132
    %v311 = vunpack.c.l.b16 %v133
    %v312 = vunpack.c.h.b16 %v133
    %v313 = vunpack.c.l.b16 %v134
    %v314 = vunpack.c.h.b16 %v134
    %v315 = vunpack.c.l.b16 %v135
    %v316 = vunpack.c.l.b16 %v136
    %v317 = vunpack.c.h.b16 %v136
    %v318 = vunpack.c.l.b16 %v137
    %v319 = vunpack.c.h.b16 %v137
    %v320 = vunpack.c.l.b16 %v138
    %v321 = vunpack.c.h.b16 %v138
    %v322 = vunpack.c.l.b16 %v139
    %v323 = vunpack.c.l.b16 %v140
    %v324 = vunpack.c.h.b16 %v140
    %v325 = vunpack.c.l.b16 %v141
    %v326 = vunpack.c.h.b16 %v141
    %v327 = vunpack.c.l.b16 %v142
    %v328 = vunpack.c.h.b16 %v142
    %v329 = vunpack.c.l.b16 %v143
    %v330 = vunpack.c.l.b16 %v144
    %v331 = vunpack.c.h.b16 %v144
    %v332 = vunpack.c.l.b16 %v145
    %v333 = vunpack.c.h.b16 %v145
    %v334 = vunpack.c.l.b16 %v146
    %v335 = vunpack.c.h.b16 %v146
    %v336 = vunpack.c.l.b16 %v147
    %v337 = vunpack.c.l.b16 %v148
    %v338 = vunpack.c.h.b16 %v148
    %v339 = vunpack.c.l.b16 %v149
    %v340 = vunpack.c.h.b16 %v149
    %v341 = vunpack.c.l.b16 %v150
    %v342 = vunpack.c.h.b16 %v150
    %v343 = vunpack.c.l.b16 %v151
    %v344 = vunpack.c.l.b16 %v152
    %v345 = vunpack.c.h.b16 %v152
    %v346 = vunpack.c.l.b16 %v153
    %v347 = vunpack.c.h.b16 %v153
    %v348 = vunpack.c.l.b16 %v154
    %v349 = vunpack.c.h.b16 %v154
    %v350 = vunpack.c.l.b16 %v155
    %v351 = vunpack.c.l.b16 %v156
    %v352 = vunpack.c.h.b16 %v156
    %v353 = vunpack.c.l.b16 %v157
    %v354 = vunpack.c.h.b16 %v157
    %v355 = vunpack.c.l.b16 %v158
    %v356 = vunpack.c.h.b16 %v158
    %v357 = vunpack.c.l.b16 %v159
    %v358 = vunpack.c.l.b16 %v160
    %v359 = vunpack.c.h.b16 %v160
    %v360 = vunpack.c.l.b16 %v161
    %v361 = vunpack.c.h.b16 %v161
    %v362 = vunpack.c.l.b16 %v162
    %v363 = vunpack.c.h.b16 %v162
    %v364 = vunpack.c.l.b16 %v163
    %v365 = vunpack.c.l.b16 %v164
    %v366 = vunpack.c.h.b16 %v164
    %v367 = vunpack.c.l.b16 %v165
    %v368 = vunpack.c.h.b16 %v165
    %v369 = vunpack.c.l.b16 %v166
    %v370 = vunpack.c.h.b16 %v166
    %v371 = vunpack.c.l.b16 %v167
    %v372 = vunpack.c.l.b16 %v168
    %v373 = vunpack.c.h.b16 %v168
    %v374 = vunpack.c.l.b16 %v169
    %v375 = vunpack.c.h.b16 %v169
    %v376 = vunpack.c.l.b16 %v170
    %v377 = vunpack.c.h.b16 %v170
    %v378 = vunpack.c.l.b16 %v171
    %v379 = vunpack.c.l.b16 %v172
    %v380 = vunpack.c.h.b16 %v172
    %v381 = vunpack.c.l.b16 %v173
    %v382 = vunpack.c.h.b16 %v173
    %v383 = vunpack.c.l.b16 %v174
    %v384 = vunpack.c.h.b16 %v174
    %v385 = vunpack.c.l.b16 %v175
    %v386 = vunpack.c.l.b16 %v176
    %v387 = vunpack.c.h.b16 %v176
    %v388 = vunpack.c.l.b16 %v177
    %v389 = vunpack.c.h.b16 %v177
    %v390 = vunpack.c.l.b16 %v178
    %v391 = vunpack.c.h.b16 %v178
    %v392 = vunpack.c.l.b16 %v179
    %v393 = vpack.c.b16 %v288, %v281
    %v394 = vpack.c.b16 %v289, %v282
    %v395 = vpack.c.b16 %v290, %v283
    %v396 = vpack.c.b16 %v291, %v284
    %v397 = vpack.c.b16 %v292, %v285
    %v398 = vpack.c.b16 %v293, %v286
    %v399 = vpack.c.b16 %v294, %v287
    %v400 = vpack.c.b16 %v302, %v295
    %v401 = vpack.c.b16 %v303, %v296
    %v402 = vpack.c.b16 %v304, %v297
    %v403 = vpack.c.b16 %v305, %v298
    %v404 = vpack.c.b16 %v306, %v299
    %v405 = vpack.c.b16 %v307, %v300
    %v406 = vpack.c.b16 %v308, %v301
    %v407 = vpack.c.b16 %v316, %v309
    %v408 = vpack.c.b16 %v317, %v310
    %v409 = vpack.c.b16 %v318, %v311
    %v410 = vpack.c.b16 %v319, %v312
    %v411 = vpack.c.b16 %v320, %v313
    %v412 = vpack.c.b16 %v321, %v314
    %v413 = vpack.c.b16 %v322, %v315
    %v414 = vpack.c.b16 %v330, %v323
    %v415 = vpack.c.b16 %v331, %v324
    %v416 = vpack.c.b16 %v332, %v325
    %v417 = vpack.c.b16 %v333, %v326
    %v418 = vpack.c.b16 %v334, %v327
    %v419 = vpack.c.b16 %v335, %v328
    %v420 = vpack.c.b16 %v336, %v329
    %v421 = vpack.c.b16 %v344, %v337
    %v422 = vpack.c.b16 %v345, %v338
    %v423 = vpack.c.b16 %v346, %v339
    %v424 = vpack.c.b16 %v347, %v340
    %v425 = vpack.c.b16 %v348, %v341
    %v426 = vpack.c.b16 %v349, %v342
    %v427 = vpack.c.b16 %v350, %v343
    %v428 = vpack.c.b16 %v358, %v351
    %v429 = vpack.c.b16 %v359, %v352
    %v430 = vpack.c.b16 %v360, %v353
    %v431 = vpack.c.b16 %v361, %v354
    %v432 = vpack.c.b16 %v362, %v355
    %v433 = vpack.c.b16 %v363, %v356
    %v434 = vpack.c.b16 %v364, %v357
    %v435 = vpack.c.b16 %v372, %v365
    %v436 = vpack.c.b16 %v373, %v366
    %v437 = vpack.c.b16 %v374, %v367
    %v438 = vpack.c.b16 %v375, %v368
    %v439 = vpack.c.b16 %v376, %v369
    %v440 = vpack.c.b16 %v377, %v370
    %v441 = vpack.c.b16 %v378, %v371
    %v442 = vpack.c.b16 %v386, %v379
    %v443 = vpack.c.b16 %v387, %v380
    %v444 = vpack.c.b16 %v388, %v381
    %v445 = vpack.c.b16 %v389, %v382
    %v446 = vpack.c.b16 %v390, %v383
    %v447 = vpack.c.b16 %v391, %v384
    %v448 = vpack.c.b16 %v392, %v385
    %505 = vmatprep.subr.bf16.mxu0 %v394
    %506 = vmatpush1.bf16.msra.mxu0 %v393
    %507 = vmatprep.subr.bf16.mxu0 %v401
    %508 = vmatpush1.bf16.msra.mxu0 %v400
    %509 = vmatprep.subr.bf16.mxu0 %v408
    %510 = vmatpush1.bf16.msra.mxu0 %v407
    %511 = vmatprep.subr.bf16.mxu0 %v415
    %512 = vmatpush1.bf16.msra.mxu0 %v414
    %513 = vmatprep.subr.bf16.mxu0 %v422
    %514 = vmatpush1.bf16.msra.mxu0 %v421
    %515 = vmatprep.subr.bf16.mxu0 %v429
    %516 = vmatpush1.bf16.msra.mxu0 %v428
    %517 = vmatprep.subr.bf16.mxu0 %v436
    %518 = vmatpush1.bf16.msra.mxu0 %v435
    %519 = vmatprep.subr.bf16.mxu0 %v443
    %520 = vmatpush1.bf16.msra.mxu0 %v442
    %521 = vmatprep.subr.bf16.mxu0 0
    %522 = vmatpush1.bf16.msra.mxu0 0
    %523 = vmatprep.subr.bf16.mxu0 0
    %524 = vmatpush1.bf16.msra.mxu0 0
    %525 = vmatprep.subr.bf16.mxu0 0
    %526 = vmatpush1.bf16.msra.mxu0 0
    %527 = vmatprep.subr.bf16.mxu0 0
    %528 = vmatpush1.bf16.msra.mxu0 0
    %529 = vmatprep.subr.bf16.mxu0 0
    %530 = vmatpush1.bf16.msra.mxu0 0
    %531 = vmatprep.subr.bf16.mxu0 0
    %532 = vmatpush1.bf16.msra.mxu0 0
    %533 = vmatprep.subr.bf16.mxu0 0
    %534 = vmatpush1.bf16.msra.mxu0 0
    %535 = vmatprep.subr.bf16.mxu0 0
    %536 = vmatpush1.bf16.msra.mxu0 0
    %537 = vmatprep.mubr.bf16.mxu0 0
    %538 = vmatmul.mubr.bf16.gmra.mrb[0].mxu0 %v115
    %v539 = vpop.f32.mrb[0].mxu0
    %v540 = vadd.f32 %v185, %v539
    %v541 = vpop.f32.mrb[0].mxu0
    %v542 = vadd.f32 %v189, %v541
    %v543 = vpop.f32.mrb[0].mxu0
    %v544 = vpop.f32.mrb[0].mxu0
    %545 = vdwg.mxu0
    %546 = vmatprep.subr.bf16.mxu0 %v396
    %547 = vmatpush1.bf16.msra.mxu0 %v395
    %548 = vmatprep.subr.bf16.mxu0 %v403
    %549 = vmatpush1.bf16.msra.mxu0 %v402
    %550 = vmatprep.subr.bf16.mxu0 %v410
    %551 = vmatpush1.bf16.msra.mxu0 %v409
    %552 = vmatprep.subr.bf16.mxu0 %v417
    %553 = vmatpush1.bf16.msra.mxu0 %v416
    %554 = vmatprep.subr.bf16.mxu0 %v424
    %555 = vmatpush1.bf16.msra.mxu0 %v423
    %556 = vmatprep.subr.bf16.mxu0 %v431
    %557 = vmatpush1.bf16.msra.mxu0 %v430
    %558 = vmatprep.subr.bf16.mxu0 %v438
    %559 = vmatpush1.bf16.msra.mxu0 %v437
    %560 = vmatprep.subr.bf16.mxu0 %v445
    %561 = vmatpush1.bf16.msra.mxu0 %v444
    %562 = vmatprep.subr.bf16.mxu0 0
    %563 = vmatpush1.bf16.msra.mxu0 0
    %564 = vmatprep.subr.bf16.mxu0 0
    %565 = vmatpush1.bf16.msra.mxu0 0
    %566 = vmatprep.subr.bf16.mxu0 0
    %567 = vmatpush1.bf16.msra.mxu0 0
    %568 = vmatprep.subr.bf16.mxu0 0
    %569 = vmatpush1.bf16.msra.mxu0 0
    %570 = vmatprep.subr.bf16.mxu0 0
    %571 = vmatpush1.bf16.msra.mxu0 0
    %572 = vmatprep.subr.bf16.mxu0 0
    %573 = vmatpush1.bf16.msra.mxu0 0
    %574 = vmatprep.subr.bf16.mxu0 0
    %575 = vmatpush1.bf16.msra.mxu0 0
    %576 = vmatprep.subr.bf16.mxu0 0
    %577 = vmatpush1.bf16.msra.mxu0 0
    %578 = vmatprep.mubr.bf16.mxu0 0
    %579 = vmatmul.mubr.bf16.gmra.mrb[0].mxu0 %v115
    %v580 = vpop.f32.mrb[0].mxu0
    %v581 = vadd.f32 %v193, %v580
    %v582 = vpop.f32.mrb[0].mxu0
    %v583 = vadd.f32 %v197, %v582
    %v584 = vpop.f32.mrb[0].mxu0
    %v585 = vpop.f32.mrb[0].mxu0
    %586 = vdwg.mxu0
    %587 = vmatprep.subr.bf16.mxu0 %v398
    %588 = vmatpush1.bf16.msra.mxu0 %v397
    %589 = vmatprep.subr.bf16.mxu0 %v405
    %590 = vmatpush1.bf16.msra.mxu0 %v404
    %591 = vmatprep.subr.bf16.mxu0 %v412
    %592 = vmatpush1.bf16.msra.mxu0 %v411
    %593 = vmatprep.subr.bf16.mxu0 %v419
    %594 = vmatpush1.bf16.msra.mxu0 %v418
    %595 = vmatprep.subr.bf16.mxu0 %v426
    %596 = vmatpush1.bf16.msra.mxu0 %v425
    %597 = vmatprep.subr.bf16.mxu0 %v433
    %598 = vmatpush1.bf16.msra.mxu0 %v432
    %599 = vmatprep.subr.bf16.mxu0 %v440
    %600 = vmatpush1.bf16.msra.mxu0 %v439
    %601 = vmatprep.subr.bf16.mxu0 %v447
    %602 = vmatpush1.bf16.msra.mxu0 %v446
    %603 = vmatprep.subr.bf16.mxu0 0
    %604 = vmatpush1.bf16.msra.mxu0 0
    %605 = vmatprep.subr.bf16.mxu0 0
    %606 = vmatpush1.bf16.msra.mxu0 0
    %607 = vmatprep.subr.bf16.mxu0 0
    %608 = vmatpush1.bf16.msra.mxu0 0
    %609 = vmatprep.subr.bf16.mxu0 0
    %610 = vmatpush1.bf16.msra.mxu0 0
    %611 = vmatprep.subr.bf16.mxu0 0
    %612 = vmatpush1.bf16.msra.mxu0 0
    %613 = vmatprep.subr.bf16.mxu0 0
    %614 = vmatpush1.bf16.msra.mxu0 0
    %615 = vmatprep.subr.bf16.mxu0 0
    %616 = vmatpush1.bf16.msra.mxu0 0
    %617 = vmatprep.subr.bf16.mxu0 0
    %618 = vmatpush1.bf16.msra.mxu0 0
    %619 = vmatprep.mubr.bf16.mxu0 0
    %620 = vmatmul.mubr.bf16.gmra.mrb[0].mxu0 %v115
    %v621 = vpop.f32.mrb[0].mxu0
    %v622 = vadd.f32 %v201, %v621
    %v623 = vpop.f32.mrb[0].mxu0
    %v624 = vadd.f32 %v205, %v623
    %v625 = vpop.f32.mrb[0].mxu0
    %v626 = vpop.f32.mrb[0].mxu0
    %627 = vdwg.mxu0
    %628 = vmatprep.subr.bf16.mxu0 0
    %629 = vmatpush1.bf16.msra.mxu0 %v399
    %630 = vmatprep.subr.bf16.mxu0 0
    %631 = vmatpush1.bf16.msra.mxu0 %v406
    %632 = vmatprep.subr.bf16.mxu0 0
    %633 = vmatpush1.bf16.msra.mxu0 %v413
    %634 = vmatprep.subr.bf16.mxu0 0
    %635 = vmatpush1.bf16.msra.mxu0 %v420
    %636 = vmatprep.subr.bf16.mxu0 0
    %637 = vmatpush1.bf16.msra.mxu0 %v427
    %638 = vmatprep.subr.bf16.mxu0 0
    %639 = vmatpush1.bf16.msra.mxu0 %v434
    %640 = vmatprep.subr.bf16.mxu0 0
    %641 = vmatpush1.bf16.msra.mxu0 %v441
    %642 = vmatprep.subr.bf16.mxu0 0
    %643 = vmatpush1.bf16.msra.mxu0 %v448
    %644 = vmatprep.subr.bf16.mxu0 0
    %645 = vmatpush1.bf16.msra.mxu0 0
    %646 = vmatprep.subr.bf16.mxu0 0
    %647 = vmatpush1.bf16.msra.mxu0 0
    %648 = vmatprep.subr.bf16.mxu0 0
    %649 = vmatpush1.bf16.msra.mxu0 0
    %650 = vmatprep.subr.bf16.mxu0 0
    %651 = vmatpush1.bf16.msra.mxu0 0
    %652 = vmatprep.subr.bf16.mxu0 0
    %653 = vmatpush1.bf16.msra.mxu0 0
    %654 = vmatprep.subr.bf16.mxu0 0
    %655 = vmatpush1.bf16.msra.mxu0 0
    %656 = vmatprep.subr.bf16.mxu0 0
    %657 = vmatpush1.bf16.msra.mxu0 0
    %658 = vmatprep.subr.bf16.mxu0 0
    %659 = vmatpush1.bf16.msra.mxu0 0
    %660 = vmatprep.mubr.bf16.mxu0 0
    %661 = vmatmul.mubr.bf16.gmra.mrb[0].mxu0 %v115
    %v662 = vpop.f32.mrb[0].mxu0
    %v663 = vadd.f32 %v209, %v662
    %v664 = vpop.f32.mrb[0].mxu0
    %v665 = vpop.f32.mrb[0].mxu0
    %v666 = vpop.f32.mrb[0].mxu0
    %667 = vdwg.mxu0
    %v668 = vmax.f32 %v540, 0.0
    %v669 = vmax.f32 %v542, 0.0
    %v670 = vmax.f32 %v581, 0.0
    %v671 = vmax.f32 %v583, 0.0
    %v672 = vmax.f32 %v622, 0.0
    %v673 = vmax.f32 %v624, 0.0
    %v674 = vmax.f32 %v663, 0.0
    %v675 = vpack.c.bf16 %v668, %v668
    %v676 = vpack.c.bf16 %v669, %v669
    %v677 = vpack.c.bf16 %v670, %v670
    %v678 = vpack.c.bf16 %v671, %v671
    %v679 = vpack.c.bf16 %v672, %v672
    %v680 = vpack.c.bf16 %v673, %v673
    %v681 = vpack.c.bf16 %v674, %v674
    %v682 = vld [vmem:[#allocation8] sm:$0xff]
    %v683 = vld [vmem:[#allocation8 + $0x8] sm:$0xff]
    %v684 = vld [vmem:[#allocation8 + $0x10] sm:$0xff]
    %v685 = vld [vmem:[#allocation8 + $0x18] sm:$0xf]
    %v686 = vld [vmem:[#allocation8 + $0x1c] sm:$0xff]
    %v687 = vld [vmem:[#allocation8 + $0x24] sm:$0xff]
    %v688 = vld [vmem:[#allocation8 + $0x2c] sm:$0xff]
    %v689 = vld [vmem:[#allocation8 + $0x34] sm:$0xf]
    %v690 = vld [vmem:[#allocation8 + $0x38] sm:$0xff]
    %v691 = vld [vmem:[#allocation8 + $0x40] sm:$0xff]
    %v692 = vld [vmem:[#allocation8 + $0x48] sm:$0xff]
    %v693 = vld [vmem:[#allocation8 + $0x50] sm:$0xf]
    %v694 = vld [vmem:[#allocation8 + $0x54] sm:$0xff]
    %v695 = vld [vmem:[#allocation8 + $0x5c] sm:$0xff]
    %v696 = vld [vmem:[#allocation8 + $0x64] sm:$0xff]
    %v697 = vld [vmem:[#allocation8 + $0x6c] sm:$0xf]
    %v698 = vld [vmem:[#allocation8 + $0x70] sm:$0xff]
    %v699 = vld [vmem:[#allocation8 + $0x78] sm:$0xff]
    %v700 = vld [vmem:[#allocation8 + $0x80] sm:$0xff]
    %v701 = vld [vmem:[#allocation8 + $0x88] sm:$0xf]
    %v702 = vld [vmem:[#allocation8 + $0x8c] sm:$0xff]
    %v703 = vld [vmem:[#allocation8 + $0x94] sm:$0xff]
    %v704 = vld [vmem:[#allocation8 + $0x9c] sm:$0xff]
    %v705 = vld [vmem:[#allocation8 + $0xa4] sm:$0xf]
    %v706 = vld [vmem:[#allocation8 + $0xa8] sm:$0xff]
    %v707 = vld [vmem:[#allocation8 + $0xb0] sm:$0xff]
    %v708 = vld [vmem:[#allocation8 + $0xb8] sm:$0xff]
    %v709 = vld [vmem:[#allocation8 + $0xc0] sm:$0xf]
    %v710 = vld [vmem:[#allocation8 + $0xc4] sm:$0xff]
    %v711 = vld [vmem:[#allocation8 + $0xcc] sm:$0xff]
    %v712 = vld [vmem:[#allocation8 + $0xd4] sm:$0xff]
    %v713 = vld [vmem:[#allocation8 + $0xdc] sm:$0xf]
    %v714 = vld [vmem:[#allocation8 + $0xe0] sm:$0xff]
    %v715 = vld [vmem:[#allocation8 + $0xe8] sm:$0xff]
    %v716 = vld [vmem:[#allocation8 + $0xf0] sm:$0xff]
    %v717 = vld [vmem:[#allocation8 + $0xf8] sm:$0xf]
    %v718 = vld [vmem:[#allocation8 + $0xfc] sm:$0xff]
    %v719 = vld [vmem:[#allocation8 + $0x104] sm:$0xff]
    %v720 = vld [vmem:[#allocation8 + $0x10c] sm:$0xff]
    %v721 = vld [vmem:[#allocation8 + $0x114] sm:$0xf]
    %v722 = vld [vmem:[#allocation8 + $0x118] sm:$0xff]
    %v723 = vld [vmem:[#allocation8 + $0x120] sm:$0xff]
    %v724 = vld [vmem:[#allocation8 + $0x128] sm:$0xff]
    %v725 = vld [vmem:[#allocation8 + $0x130] sm:$0xf]
    %v726 = vld [vmem:[#allocation8 + $0x134] sm:$0xff]
    %v727 = vld [vmem:[#allocation8 + $0x13c] sm:$0xff]
    %v728 = vld [vmem:[#allocation8 + $0x144] sm:$0xff]
    %v729 = vld [vmem:[#allocation8 + $0x14c] sm:$0xf]
    %v730 = vld [vmem:[#allocation8 + $0x150] sm:$0xff]
    %v731 = vld [vmem:[#allocation8 + $0x158] sm:$0xff]
    %v732 = vld [vmem:[#allocation8 + $0x160] sm:$0xff]
    %v733 = vld [vmem:[#allocation8 + $0x168] sm:$0xf]
    %v734 = vld [vmem:[#allocation8 + $0x16c] sm:$0xff]
    %v735 = vld [vmem:[#allocation8 + $0x174] sm:$0xff]
    %v736 = vld [vmem:[#allocation8 + $0x17c] sm:$0xff]
    %v737 = vld [vmem:[#allocation8 + $0x184] sm:$0xf]
    %v738 = vld [vmem:[#allocation8 + $0x188] sm:$0xff]
    %v739 = vld [vmem:[#allocation8 + $0x190] sm:$0xff]
    %v740 = vld [vmem:[#allocation8 + $0x198] sm:$0xff]
    %v741 = vld [vmem:[#allocation8 + $0x1a0] sm:$0xf]
    %v742 = vld [vmem:[#allocation8 + $0x1a4] sm:$0xff]
    %v743 = vld [vmem:[#allocation8 + $0x1ac] sm:$0xff]
    %v744 = vld [vmem:[#allocation8 + $0x1b4] sm:$0xff]
    %v745 = vld [vmem:[#allocation8 + $0x1bc] sm:$0xf]
    %v746 = vld [vmem:[#allocation8 + $0x1c0] sm:$0xff]
    %v747 = vld [vmem:[#allocation8 + $0x1c8] sm:$0xff]
    %v748 = vld [vmem:[#allocation8 + $0x1d0] sm:$0xff]
    %v749 = vld [vmem:[#allocation8 + $0x1d8] sm:$0xf]
    %v750 = vld [vmem:[#allocation8 + $0x1dc] sm:$0xff]
    %v751 = vld [vmem:[#allocation8 + $0x1e4] sm:$0xff]
    %v752 = vld [vmem:[#allocation8 + $0x1ec] sm:$0xff]
    %v753 = vld [vmem:[#allocation8 + $0x1f4] sm:$0xf]
    %v754 = vld [vmem:[#allocation8 + $0x1f8] sm:$0xff]
    %v755 = vld [vmem:[#allocation8 + $0x200] sm:$0xff]
    %v756 = vld [vmem:[#allocation8 + $0x208] sm:$0xff]
    %v757 = vld [vmem:[#allocation8 + $0x210] sm:$0xf]
    %v758 = vld [vmem:[#allocation8 + $0x214] sm:$0xff]
    %v759 = vld [vmem:[#allocation8 + $0x21c] sm:$0xff]
    %v760 = vld [vmem:[#allocation8 + $0x224] sm:$0xff]
    %v761 = vld [vmem:[#allocation8 + $0x22c] sm:$0xf]
    %v762 = vld [vmem:[#allocation8 + $0x230] sm:$0xff]
    %v763 = vld [vmem:[#allocation8 + $0x238] sm:$0xff]
    %v764 = vld [vmem:[#allocation8 + $0x240] sm:$0xff]
    %v765 = vld [vmem:[#allocation8 + $0x248] sm:$0xf]
    %v766 = vld [vmem:[#allocation8 + $0x24c] sm:$0xff]
    %v767 = vld [vmem:[#allocation8 + $0x254] sm:$0xff]
    %v768 = vld [vmem:[#allocation8 + $0x25c] sm:$0xff]
    %v769 = vld [vmem:[#allocation8 + $0x264] sm:$0xf]
    %v770 = vld [vmem:[#allocation8 + $0x268] sm:$0xff]
    %v771 = vld [vmem:[#allocation8 + $0x270] sm:$0xff]
    %v772 = vld [vmem:[#allocation8 + $0x278] sm:$0xff]
    %v773 = vld [vmem:[#allocation8 + $0x280] sm:$0xf]
    %v774 = vld [vmem:[#allocation8 + $0x284] sm:$0xff]
    %v775 = vld [vmem:[#allocation8 + $0x28c] sm:$0xff]
    %v776 = vld [vmem:[#allocation8 + $0x294] sm:$0xff]
    %v777 = vld [vmem:[#allocation8 + $0x29c] sm:$0xf]
    %v778 = vld [vmem:[#allocation8 + $0x2a0] sm:$0xff]
    %v779 = vld [vmem:[#allocation8 + $0x2a8] sm:$0xff]
    %v780 = vld [vmem:[#allocation8 + $0x2b0] sm:$0xff]
    %v781 = vld [vmem:[#allocation8 + $0x2b8] sm:$0xf]
    %v782 = vld [vmem:[#allocation8 + $0x2bc] sm:$0xff]
    %v783 = vld [vmem:[#allocation8 + $0x2c4] sm:$0xff]
    %v784 = vld [vmem:[#allocation8 + $0x2cc] sm:$0xff]
    %v785 = vld [vmem:[#allocation8 + $0x2d4] sm:$0xf]
    %v786 = vld [vmem:[#allocation8 + $0x2d8] sm:$0xff]
    %v787 = vld [vmem:[#allocation8 + $0x2e0] sm:$0xff]
    %v788 = vld [vmem:[#allocation8 + $0x2e8] sm:$0xff]
    %v789 = vld [vmem:[#allocation8 + $0x2f0] sm:$0xf]
    %v790 = vld [vmem:[#allocation8 + $0x2f4] sm:$0xff]
    %v791 = vld [vmem:[#allocation8 + $0x2fc] sm:$0xff]
    %v792 = vld [vmem:[#allocation8 + $0x304] sm:$0xff]
    %v793 = vld [vmem:[#allocation8 + $0x30c] sm:$0xf]
    %v794 = vld [vmem:[#allocation8 + $0x310] sm:$0xff]
    %v795 = vld [vmem:[#allocation8 + $0x318] sm:$0xff]
    %v796 = vld [vmem:[#allocation8 + $0x320] sm:$0xff]
    %v797 = vld [vmem:[#allocation8 + $0x328] sm:$0xf]
    %v798 = vld [vmem:[#allocation8 + $0x32c] sm:$0xff]
    %v799 = vld [vmem:[#allocation8 + $0x334] sm:$0xff]
    %v800 = vld [vmem:[#allocation8 + $0x33c] sm:$0xff]
    %v801 = vld [vmem:[#allocation8 + $0x344] sm:$0xf]
    %v802 = vld [vmem:[#allocation8 + $0x348] sm:$0xff]
    %v803 = vld [vmem:[#allocation8 + $0x350] sm:$0xff]
    %v804 = vld [vmem:[#allocation8 + $0x358] sm:$0xff]
    %v805 = vld [vmem:[#allocation8 + $0x360] sm:$0xf]
    %v806 = vld [vmem:[#allocation8 + $0x364] sm:$0xff]
    %v807 = vld [vmem:[#allocation8 + $0x36c] sm:$0xff]
    %v808 = vld [vmem:[#allocation8 + $0x374] sm:$0xff]
    %v809 = vld [vmem:[#allocation8 + $0x37c] sm:$0xf]
    %v810 = vld [vmem:[#allocation8 + $0x380] sm:$0xff]
    %v811 = vld [vmem:[#allocation8 + $0x388] sm:$0xff]
    %v812 = vld [vmem:[#allocation8 + $0x390] sm:$0xff]
    %v813 = vld [vmem:[#allocation8 + $0x398] sm:$0xf]
    %v814 = vld [vmem:[#allocation8 + $0x39c] sm:$0xff]
    %v815 = vld [vmem:[#allocation8 + $0x3a4] sm:$0xff]
    %v816 = vld [vmem:[#allocation8 + $0x3ac] sm:$0xff]
    %v817 = vld [vmem:[#allocation8 + $0x3b4] sm:$0xf]
    %v818 = vld [vmem:[#allocation8 + $0x3b8] sm:$0xff]
    %v819 = vld [vmem:[#allocation8 + $0x3c0] sm:$0xff]
    %v820 = vld [vmem:[#allocation8 + $0x3c8] sm:$0xff]
    %v821 = vld [vmem:[#allocation8 + $0x3d0] sm:$0xf]
    %v822 = vld [vmem:[#allocation8 + $0x3d4] sm:$0xff]
    %v823 = vld [vmem:[#allocation8 + $0x3dc] sm:$0xff]
    %v824 = vld [vmem:[#allocation8 + $0x3e4] sm:$0xff]
    %v825 = vld [vmem:[#allocation8 + $0x3ec] sm:$0xf]
    %v826 = vld [vmem:[#allocation8 + $0x3f0] sm:$0xff]
    %v827 = vld [vmem:[#allocation8 + $0x3f8] sm:$0xff]
    %v828 = vld [vmem:[#allocation8 + $0x400] sm:$0xff]
    %v829 = vld [vmem:[#allocation8 + $0x408] sm:$0xf]
    %v830 = vld [vmem:[#allocation8 + $0x40c] sm:$0xff]
    %v831 = vld [vmem:[#allocation8 + $0x414] sm:$0xff]
    %v832 = vld [vmem:[#allocation8 + $0x41c] sm:$0xff]
    %v833 = vld [vmem:[#allocation8 + $0x424] sm:$0xf]
    %v834 = vld [vmem:[#allocation8 + $0x428] sm:$0xff]
    %v835 = vld [vmem:[#allocation8 + $0x430] sm:$0xff]
    %v836 = vld [vmem:[#allocation8 + $0x438] sm:$0xff]
    %v837 = vld [vmem:[#allocation8 + $0x440] sm:$0xf]
    %v838 = vld [vmem:[#allocation8 + $0x444] sm:$0xff]
    %v839 = vld [vmem:[#allocation8 + $0x44c] sm:$0xff]
    %v840 = vld [vmem:[#allocation8 + $0x454] sm:$0xff]
    %v841 = vld [vmem:[#allocation8 + $0x45c] sm:$0xf]
    %v842 = vld [vmem:[#allocation8 + $0x460] sm:$0xff]
    %v843 = vld [vmem:[#allocation8 + $0x468] sm:$0xff]
    %v844 = vld [vmem:[#allocation8 + $0x470] sm:$0xff]
    %v845 = vld [vmem:[#allocation8 + $0x478] sm:$0xf]
    %v846 = vld [vmem:[#allocation8 + $0x47c] sm:$0xff]
    %v847 = vld [vmem:[#allocation8 + $0x484] sm:$0xff]
    %v848 = vld [vmem:[#allocation8 + $0x48c] sm:$0xff]
    %v849 = vld [vmem:[#allocation8 + $0x494] sm:$0xf]
    %v850 = vld [vmem:[#allocation8 + $0x498] sm:$0xff]
    %v851 = vld [vmem:[#allocation8 + $0x4a0] sm:$0xff]
    %v852 = vld [vmem:[#allocation8 + $0x4a8] sm:$0xff]
    %v853 = vld [vmem:[#allocation8 + $0x4b0] sm:$0xf]
    %v854 = vld [vmem:[#allocation8 + $0x4b4] sm:$0xff]
    %v855 = vld [vmem:[#allocation8 + $0x4bc] sm:$0xff]
    %v856 = vld [vmem:[#allocation8 + $0x4c4] sm:$0xff]
    %v857 = vld [vmem:[#allocation8 + $0x4cc] sm:$0xf]
    %v858 = vld [vmem:[#allocation8 + $0x4d0] sm:$0xff]
    %v859 = vld [vmem:[#allocation8 + $0x4d8] sm:$0xff]
    %v860 = vld [vmem:[#allocation8 + $0x4e0] sm:$0xff]
    %v861 = vld [vmem:[#allocation8 + $0x4e8] sm:$0xf]
    %v862 = vld [vmem:[#allocation8 + $0x4ec] sm:$0xff]
    %v863 = vld [vmem:[#allocation8 + $0x4f4] sm:$0xff]
    %v864 = vld [vmem:[#allocation8 + $0x4fc] sm:$0xff]
    %v865 = vld [vmem:[#allocation8 + $0x504] sm:$0xf]
    %v866 = vld [vmem:[#allocation8 + $0x508] sm:$0xff]
    %v867 = vld [vmem:[#allocation8 + $0x510] sm:$0xff]
    %v868 = vld [vmem:[#allocation8 + $0x518] sm:$0xff]
    %v869 = vld [vmem:[#allocation8 + $0x520] sm:$0xf]
    %v870 = vld [vmem:[#allocation8 + $0x524] sm:$0xff]
    %v871 = vld [vmem:[#allocation8 + $0x52c] sm:$0xff]
    %v872 = vld [vmem:[#allocation8 + $0x534] sm:$0xff]
    %v873 = vld [vmem:[#allocation8 + $0x53c] sm:$0xf]
    %v874 = vld [vmem:[#allocation8 + $0x540] sm:$0xff]
    %v875 = vld [vmem:[#allocation8 + $0x548] sm:$0xff]
    %v876 = vld [vmem:[#allocation8 + $0x550] sm:$0xff]
    %v877 = vld [vmem:[#allocation8 + $0x558] sm:$0xf]
    %v878 = vld [vmem:[#allocation8 + $0x55c] sm:$0xff]
    %v879 = vld [vmem:[#allocation8 + $0x564] sm:$0xff]
    %v880 = vld [vmem:[#allocation8 + $0x56c] sm:$0xff]
    %v881 = vld [vmem:[#allocation8 + $0x574] sm:$0xf]
    %v882 = vld [vmem:[#allocation8 + $0x578] sm:$0xff]
    %v883 = vld [vmem:[#allocation8 + $0x580] sm:$0xff]
    %v884 = vld [vmem:[#allocation8 + $0x588] sm:$0xff]
    %v885 = vld [vmem:[#allocation8 + $0x590] sm:$0xf]
    %v886 = vld [vmem:[#allocation8 + $0x594] sm:$0xff]
    %v887 = vld [vmem:[#allocation8 + $0x59c] sm:$0xff]
    %v888 = vld [vmem:[#allocation8 + $0x5a4] sm:$0xff]
    %v889 = vld [vmem:[#allocation8 + $0x5ac] sm:$0xf]
    %v890 = vld [vmem:[#allocation8 + $0x5b0] sm:$0xff]
    %v891 = vld [vmem:[#allocation8 + $0x5b8] sm:$0xff]
    %v892 = vld [vmem:[#allocation8 + $0x5c0] sm:$0xff]
    %v893 = vld [vmem:[#allocation8 + $0x5c8] sm:$0xf]
    %v894 = vld [vmem:[#allocation8 + $0x5cc] sm:$0xff]
    %v895 = vld [vmem:[#allocation8 + $0x5d4] sm:$0xff]
    %v896 = vld [vmem:[#allocation8 + $0x5dc] sm:$0xff]
    %v897 = vld [vmem:[#allocation8 + $0x5e4] sm:$0xf]
    %v898 = vld [vmem:[#allocation8 + $0x5e8] sm:$0xff]
    %v899 = vld [vmem:[#allocation8 + $0x5f0] sm:$0xff]
    %v900 = vld [vmem:[#allocation8 + $0x5f8] sm:$0xff]
    %v901 = vld [vmem:[#allocation8 + $0x600] sm:$0xf]
    %v902 = vld [vmem:[#allocation8 + $0x604] sm:$0xff]
    %v903 = vld [vmem:[#allocation8 + $0x60c] sm:$0xff]
    %v904 = vld [vmem:[#allocation8 + $0x614] sm:$0xff]
    %v905 = vld [vmem:[#allocation8 + $0x61c] sm:$0xf]
    %v906 = vld [vmem:[#allocation8 + $0x620] sm:$0xff]
    %v907 = vld [vmem:[#allocation8 + $0x628] sm:$0xff]
    %v908 = vld [vmem:[#allocation8 + $0x630] sm:$0xff]
    %v909 = vld [vmem:[#allocation8 + $0x638] sm:$0xf]
    %v910 = vld [vmem:[#allocation8 + $0x63c] sm:$0xff]
    %v911 = vld [vmem:[#allocation8 + $0x644] sm:$0xff]
    %v912 = vld [vmem:[#allocation8 + $0x64c] sm:$0xff]
    %v913 = vld [vmem:[#allocation8 + $0x654] sm:$0xf]
    %v914 = vld [vmem:[#allocation8 + $0x658] sm:$0xff]
    %v915 = vld [vmem:[#allocation8 + $0x660] sm:$0xff]
    %v916 = vld [vmem:[#allocation8 + $0x668] sm:$0xff]
    %v917 = vld [vmem:[#allocation8 + $0x670] sm:$0xf]
    %v918 = vld [vmem:[#allocation8 + $0x674] sm:$0xff]
    %v919 = vld [vmem:[#allocation8 + $0x67c] sm:$0xff]
    %v920 = vld [vmem:[#allocation8 + $0x684] sm:$0xff]
    %v921 = vld [vmem:[#allocation8 + $0x68c] sm:$0xf]
    %v922 = vld [vmem:[#allocation8 + $0x690] sm:$0xff]
    %v923 = vld [vmem:[#allocation8 + $0x698] sm:$0xff]
    %v924 = vld [vmem:[#allocation8 + $0x6a0] sm:$0xff]
    %v925 = vld [vmem:[#allocation8 + $0x6a8] sm:$0xf]
    %v926 = vld [vmem:[#allocation8 + $0x6ac] sm:$0xff]
    %v927 = vld [vmem:[#allocation8 + $0x6b4] sm:$0xff]
    %v928 = vld [vmem:[#allocation8 + $0x6bc] sm:$0xff]
    %v929 = vld [vmem:[#allocation8 + $0x6c4] sm:$0xf]
    %v930 = vld [vmem:[#allocation8 + $0x6c8] sm:$0xff]
    %v931 = vld [vmem:[#allocation8 + $0x6d0] sm:$0xff]
    %v932 = vld [vmem:[#allocation8 + $0x6d8] sm:$0xff]
    %v933 = vld [vmem:[#allocation8 + $0x6e0] sm:$0xf]
    %v934 = vld [vmem:[#allocation8 + $0x6e4] sm:$0xff]
    %v935 = vld [vmem:[#allocation8 + $0x6ec] sm:$0xff]
    %v936 = vld [vmem:[#allocation8 + $0x6f4] sm:$0xff]
    %v937 = vld [vmem:[#allocation8 + $0x6fc] sm:$0xf]
    %v938 = vld [vmem:[#allocation8 + $0x700] sm:$0xff]
    %v939 = vld [vmem:[#allocation8 + $0x708] sm:$0xff]
    %v940 = vld [vmem:[#allocation8 + $0x710] sm:$0xff]
    %v941 = vld [vmem:[#allocation8 + $0x718] sm:$0xf]
    %v942 = vld [vmem:[#allocation8 + $0x71c] sm:$0xff]
    %v943 = vld [vmem:[#allocation8 + $0x724] sm:$0xff]
    %v944 = vld [vmem:[#allocation8 + $0x72c] sm:$0xff]
    %v945 = vld [vmem:[#allocation8 + $0x734] sm:$0xf]
    %v946 = vld [vmem:[#allocation8 + $0x738] sm:$0xff]
    %v947 = vld [vmem:[#allocation8 + $0x740] sm:$0xff]
    %v948 = vld [vmem:[#allocation8 + $0x748] sm:$0xff]
    %v949 = vld [vmem:[#allocation8 + $0x750] sm:$0xf]
    %v950 = vld [vmem:[#allocation8 + $0x754] sm:$0xff]
    %v951 = vld [vmem:[#allocation8 + $0x75c] sm:$0xff]
    %v952 = vld [vmem:[#allocation8 + $0x764] sm:$0xff]
    %v953 = vld [vmem:[#allocation8 + $0x76c] sm:$0xf]
    %v954 = vld [vmem:[#allocation8 + $0x770] sm:$0xff]
    %v955 = vld [vmem:[#allocation8 + $0x778] sm:$0xff]
    %v956 = vld [vmem:[#allocation8 + $0x780] sm:$0xff]
    %v957 = vld [vmem:[#allocation8 + $0x788] sm:$0xf]
    %v958 = vld [vmem:[#allocation8 + $0x78c] sm:$0xff]
    %v959 = vld [vmem:[#allocation8 + $0x794] sm:$0xff]
    %v960 = vld [vmem:[#allocation8 + $0x79c] sm:$0xff]
    %v961 = vld [vmem:[#allocation8 + $0x7a4] sm:$0xf]
    %v962 = vld [vmem:[#allocation8 + $0x7a8] sm:$0xff]
    %v963 = vld [vmem:[#allocation8 + $0x7b0] sm:$0xff]
    %v964 = vld [vmem:[#allocation8 + $0x7b8] sm:$0xff]
    %v965 = vld [vmem:[#allocation8 + $0x7c0] sm:$0xf]
    %v966 = vld [vmem:[#allocation8 + $0x7c4] sm:$0xff]
    %v967 = vld [vmem:[#allocation8 + $0x7cc] sm:$0xff]
    %v968 = vld [vmem:[#allocation8 + $0x7d4] sm:$0xff]
    %v969 = vld [vmem:[#allocation8 + $0x7dc] sm:$0xf]
    %v970 = vld [vmem:[#allocation8 + $0x7e0] sm:$0xff]
    %v971 = vld [vmem:[#allocation8 + $0x7e8] sm:$0xff]
    %v972 = vld [vmem:[#allocation8 + $0x7f0] sm:$0xff]
    %v973 = vld [vmem:[#allocation8 + $0x7f8] sm:$0xf]
    %v974 = vld [vmem:[#allocation8 + $0x7fc] sm:$0xff]
    %v975 = vld [vmem:[#allocation8 + $0x804] sm:$0xff]
    %v976 = vld [vmem:[#allocation8 + $0x80c] sm:$0xff]
    %v977 = vld [vmem:[#allocation8 + $0x814] sm:$0xf]
    %v978 = vld [vmem:[#allocation8 + $0x818] sm:$0xff]
    %v979 = vld [vmem:[#allocation8 + $0x820] sm:$0xff]
    %v980 = vld [vmem:[#allocation8 + $0x828] sm:$0xff]
    %v981 = vld [vmem:[#allocation8 + $0x830] sm:$0xf]
    %v982 = vld [vmem:[#allocation8 + $0x834] sm:$0xff]
    %v983 = vld [vmem:[#allocation8 + $0x83c] sm:$0xff]
    %v984 = vld [vmem:[#allocation8 + $0x844] sm:$0xff]
    %v985 = vld [vmem:[#allocation8 + $0x84c] sm:$0xf]
    %v986 = vld [vmem:[#allocation8 + $0x850] sm:$0xff]
    %v987 = vld [vmem:[#allocation8 + $0x858] sm:$0xff]
    %v988 = vld [vmem:[#allocation8 + $0x860] sm:$0xff]
    %v989 = vld [vmem:[#allocation8 + $0x868] sm:$0xf]
    %v990 = vld [vmem:[#allocation8 + $0x86c] sm:$0xff]
    %v991 = vld [vmem:[#allocation8 + $0x874] sm:$0xff]
    %v992 = vld [vmem:[#allocation8 + $0x87c] sm:$0xff]
    %v993 = vld [vmem:[#allocation8 + $0x884] sm:$0xf]
    %v994 = vld [vmem:[#allocation8 + $0x888] sm:$0xff]
    %v995 = vld [vmem:[#allocation8 + $0x890] sm:$0xff]
    %v996 = vld [vmem:[#allocation8 + $0x898] sm:$0xff]
    %v997 = vld [vmem:[#allocation8 + $0x8a0] sm:$0xf]
    %v998 = vld [vmem:[#allocation8 + $0x8a4] sm:$0xff]
    %v999 = vld [vmem:[#allocation8 + $0x8ac] sm:$0xff]
    %v1000 = vld [vmem:[#allocation8 + $0x8b4] sm:$0xff]
    %v1001 = vld [vmem:[#allocation8 + $0x8bc] sm:$0xf]
    %v1002 = vld [vmem:[#allocation8 + $0x8c0] sm:$0xff]
    %v1003 = vld [vmem:[#allocation8 + $0x8c8] sm:$0xff]
    %v1004 = vld [vmem:[#allocation8 + $0x8d0] sm:$0xff]
    %v1005 = vld [vmem:[#allocation8 + $0x8d8] sm:$0xf]
    %v1006 = vld [vmem:[#allocation8 + $0x8dc] sm:$0xff]
    %v1007 = vld [vmem:[#allocation8 + $0x8e4] sm:$0xff]
    %v1008 = vld [vmem:[#allocation8 + $0x8ec] sm:$0xff]
    %v1009 = vld [vmem:[#allocation8 + $0x8f4] sm:$0xf]
    %v1010 = vld [vmem:[#allocation8 + $0x8f8] sm:$0xff]
    %v1011 = vld [vmem:[#allocation8 + $0x900] sm:$0xff]
    %v1012 = vld [vmem:[#allocation8 + $0x908] sm:$0xff]
    %v1013 = vld [vmem:[#allocation8 + $0x910] sm:$0xf]
    %v1014 = vld [vmem:[#allocation8 + $0x914] sm:$0xff]
    %v1015 = vld [vmem:[#allocation8 + $0x91c] sm:$0xff]
    %v1016 = vld [vmem:[#allocation8 + $0x924] sm:$0xff]
    %v1017 = vld [vmem:[#allocation8 + $0x92c] sm:$0xf]
    %v1018 = vld [vmem:[#allocation8 + $0x930] sm:$0xff]
    %v1019 = vld [vmem:[#allocation8 + $0x938] sm:$0xff]
    %v1020 = vld [vmem:[#allocation8 + $0x940] sm:$0xff]
    %v1021 = vld [vmem:[#allocation8 + $0x948] sm:$0xf]
    %v1022 = vld [vmem:[#allocation8 + $0x94c] sm:$0xff]
    %v1023 = vld [vmem:[#allocation8 + $0x954] sm:$0xff]
    %v1024 = vld [vmem:[#allocation8 + $0x95c] sm:$0xff]
    %v1025 = vld [vmem:[#allocation8 + $0x964] sm:$0xf]
    %v1026 = vld [vmem:[#allocation8 + $0x968] sm:$0xff]
    %v1027 = vld [vmem:[#allocation8 + $0x970] sm:$0xff]
    %v1028 = vld [vmem:[#allocation8 + $0x978] sm:$0xff]
    %v1029 = vld [vmem:[#allocation8 + $0x980] sm:$0xf]
    %v1030 = vld [vmem:[#allocation8 + $0x984] sm:$0xff]
    %v1031 = vld [vmem:[#allocation8 + $0x98c] sm:$0xff]
    %v1032 = vld [vmem:[#allocation8 + $0x994] sm:$0xff]
    %v1033 = vld [vmem:[#allocation8 + $0x99c] sm:$0xf]
    %v1034 = vld [vmem:[#allocation8 + $0x9a0] sm:$0xff]
    %v1035 = vld [vmem:[#allocation8 + $0x9a8] sm:$0xff]
    %v1036 = vld [vmem:[#allocation8 + $0x9b0] sm:$0xff]
    %v1037 = vld [vmem:[#allocation8 + $0x9b8] sm:$0xf]
    %v1038 = vld [vmem:[#allocation8 + $0x9bc] sm:$0xff]
    %v1039 = vld [vmem:[#allocation8 + $0x9c4] sm:$0xff]
    %v1040 = vld [vmem:[#allocation8 + $0x9cc] sm:$0xff]
    %v1041 = vld [vmem:[#allocation8 + $0x9d4] sm:$0xf]
    %v1042 = vld [vmem:[#allocation8 + $0x9d8] sm:$0xff]
    %v1043 = vld [vmem:[#allocation8 + $0x9e0] sm:$0xff]
    %v1044 = vld [vmem:[#allocation8 + $0x9e8] sm:$0xff]
    %v1045 = vld [vmem:[#allocation8 + $0x9f0] sm:$0xf]
    %v1046 = vld [vmem:[#allocation8 + $0x9f4] sm:$0xff]
    %v1047 = vld [vmem:[#allocation8 + $0x9fc] sm:$0xff]
    %v1048 = vld [vmem:[#allocation8 + $0xa04] sm:$0xff]
    %v1049 = vld [vmem:[#allocation8 + $0xa0c] sm:$0xf]
    %v1050 = vld [vmem:[#allocation8 + $0xa10] sm:$0xff]
    %v1051 = vld [vmem:[#allocation8 + $0xa18] sm:$0xff]
    %v1052 = vld [vmem:[#allocation8 + $0xa20] sm:$0xff]
    %v1053 = vld [vmem:[#allocation8 + $0xa28] sm:$0xf]
    %v1054 = vld [vmem:[#allocation8 + $0xa2c] sm:$0xff]
    %v1055 = vld [vmem:[#allocation8 + $0xa34] sm:$0xff]
    %v1056 = vld [vmem:[#allocation8 + $0xa3c] sm:$0xff]
    %v1057 = vld [vmem:[#allocation8 + $0xa44] sm:$0xf]
    %v1058 = vld [vmem:[#allocation8 + $0xa48] sm:$0xff]
    %v1059 = vld [vmem:[#allocation8 + $0xa50] sm:$0xff]
    %v1060 = vld [vmem:[#allocation8 + $0xa58] sm:$0xff]
    %v1061 = vld [vmem:[#allocation8 + $0xa60] sm:$0xf]
    %v1062 = vld [vmem:[#allocation8 + $0xa64] sm:$0xff]
    %v1063 = vld [vmem:[#allocation8 + $0xa6c] sm:$0xff]
    %v1064 = vld [vmem:[#allocation8 + $0xa74] sm:$0xff]
    %v1065 = vld [vmem:[#allocation8 + $0xa7c] sm:$0xf]
    %v1066 = vld [vmem:[#allocation8 + $0xa80] sm:$0xff]
    %v1067 = vld [vmem:[#allocation8 + $0xa88] sm:$0xff]
    %v1068 = vld [vmem:[#allocation8 + $0xa90] sm:$0xff]
    %v1069 = vld [vmem:[#allocation8 + $0xa98] sm:$0xf]
    %v1070 = vld [vmem:[#allocation8 + $0xa9c] sm:$0xff]
    %v1071 = vld [vmem:[#allocation8 + $0xaa4] sm:$0xff]
    %v1072 = vld [vmem:[#allocation8 + $0xaac] sm:$0xff]
    %v1073 = vld [vmem:[#allocation8 + $0xab4] sm:$0xf]
    %v1074 = vld [vmem:[#allocation8 + $0xab8] sm:$0xff]
    %v1075 = vld [vmem:[#allocation8 + $0xac0] sm:$0xff]
    %v1076 = vld [vmem:[#allocation8 + $0xac8] sm:$0xff]
    %v1077 = vld [vmem:[#allocation8 + $0xad0] sm:$0xf]
    %v1078 = vld [vmem:[#allocation8 + $0xad4] sm:$0xff]
    %v1079 = vld [vmem:[#allocation8 + $0xadc] sm:$0xff]
    %v1080 = vld [vmem:[#allocation8 + $0xae4] sm:$0xff]
    %v1081 = vld [vmem:[#allocation8 + $0xaec] sm:$0xf]
    %v1082 = vld [vmem:[#allocation8 + $0xaf0] sm:$0xff]
    %v1083 = vld [vmem:[#allocation8 + $0xaf8] sm:$0xff]
    %v1084 = vld [vmem:[#allocation8 + $0xb00] sm:$0xff]
    %v1085 = vld [vmem:[#allocation8 + $0xb08] sm:$0xf]
    %v1086 = vld [vmem:[#allocation8 + $0xb0c] sm:$0xff]
    %v1087 = vld [vmem:[#allocation8 + $0xb14] sm:$0xff]
    %v1088 = vld [vmem:[#allocation8 + $0xb1c] sm:$0xff]
    %v1089 = vld [vmem:[#allocation8 + $0xb24] sm:$0xf]
    %v1090 = vld [vmem:[#allocation8 + $0xb28] sm:$0xff]
    %v1091 = vld [vmem:[#allocation8 + $0xb30] sm:$0xff]
    %v1092 = vld [vmem:[#allocation8 + $0xb38] sm:$0xff]
    %v1093 = vld [vmem:[#allocation8 + $0xb40] sm:$0xf]
    %v1094 = vld [vmem:[#allocation8 + $0xb44] sm:$0xff]
    %v1095 = vld [vmem:[#allocation8 + $0xb4c] sm:$0xff]
    %v1096 = vld [vmem:[#allocation8 + $0xb54] sm:$0xff]
    %v1097 = vld [vmem:[#allocation8 + $0xb5c] sm:$0xf]
    %v1098 = vld [vmem:[#allocation8 + $0xb60] sm:$0xff]
    %v1099 = vld [vmem:[#allocation8 + $0xb68] sm:$0xff]
    %v1100 = vld [vmem:[#allocation8 + $0xb70] sm:$0xff]
    %v1101 = vld [vmem:[#allocation8 + $0xb78] sm:$0xf]
    %v1102 = vld [vmem:[#allocation8 + $0xb7c] sm:$0xff]
    %v1103 = vld [vmem:[#allocation8 + $0xb84] sm:$0xff]
    %v1104 = vld [vmem:[#allocation8 + $0xb8c] sm:$0xff]
    %v1105 = vld [vmem:[#allocation8 + $0xb94] sm:$0xf]
    %v1106 = vld [vmem:[#allocation8 + $0xb98] sm:$0xff]
    %v1107 = vld [vmem:[#allocation8 + $0xba0] sm:$0xff]
    %v1108 = vld [vmem:[#allocation8 + $0xba8] sm:$0xff]
    %v1109 = vld [vmem:[#allocation8 + $0xbb0] sm:$0xf]
    %v1110 = vld [vmem:[#allocation8 + $0xbb4] sm:$0xff]
    %v1111 = vld [vmem:[#allocation8 + $0xbbc] sm:$0xff]
    %v1112 = vld [vmem:[#allocation8 + $0xbc4] sm:$0xff]
    %v1113 = vld [vmem:[#allocation8 + $0xbcc] sm:$0xf]
    %v1114 = vld [vmem:[#allocation8 + $0xbd0] sm:$0xff]
    %v1115 = vld [vmem:[#allocation8 + $0xbd8] sm:$0xff]
    %v1116 = vld [vmem:[#allocation8 + $0xbe0] sm:$0xff]
    %v1117 = vld [vmem:[#allocation8 + $0xbe8] sm:$0xf]
    %v1118 = vld [vmem:[#allocation8 + $0xbec] sm:$0xff]
    %v1119 = vld [vmem:[#allocation8 + $0xbf4] sm:$0xff]
    %v1120 = vld [vmem:[#allocation8 + $0xbfc] sm:$0xff]
    %v1121 = vld [vmem:[#allocation8 + $0xc04] sm:$0xf]
    %v1122 = vld [vmem:[#allocation8 + $0xc08] sm:$0xff]
    %v1123 = vld [vmem:[#allocation8 + $0xc10] sm:$0xff]
    %v1124 = vld [vmem:[#allocation8 + $0xc18] sm:$0xff]
    %v1125 = vld [vmem:[#allocation8 + $0xc20] sm:$0xf]
    %v1126 = vld [vmem:[#allocation8 + $0xc24] sm:$0xff]
    %v1127 = vld [vmem:[#allocation8 + $0xc2c] sm:$0xff]
    %v1128 = vld [vmem:[#allocation8 + $0xc34] sm:$0xff]
    %v1129 = vld [vmem:[#allocation8 + $0xc3c] sm:$0xf]
    %v1130 = vld [vmem:[#allocation10] sm:$0xff]
    %v1132 = vlaneseq
    %v1133 = vshrl.u32 %v1132, 7
    %v1134 = vsub.s32 0, %v1133
    %v1135 = vrot.slane %v1130, %v1134
    %v1136 = vlaneseq
    %v1137 = vshrl.u32 %v1136, 7
    %v1138 = vsub.s32 1, %v1137
    %v1139 = vrot.slane %v1130, %v1138
    %v1140 = vlaneseq
    %v1141 = vshrl.u32 %v1140, 7
    %v1142 = vsub.s32 2, %v1141
    %v1143 = vrot.slane %v1130, %v1142
    %v1144 = vlaneseq
    %v1145 = vshrl.u32 %v1144, 7
    %v1146 = vsub.s32 3, %v1145
    %v1147 = vrot.slane %v1130, %v1146
    %v1148 = vlaneseq
    %v1149 = vshrl.u32 %v1148, 7
    %v1150 = vsub.s32 4, %v1149
    %v1151 = vrot.slane %v1130, %v1150
    %v1152 = vlaneseq
    %v1153 = vshrl.u32 %v1152, 7
    %v1154 = vsub.s32 5, %v1153
    %v1155 = vrot.slane %v1130, %v1154
    %v1156 = vlaneseq
    %v1157 = vshrl.u32 %v1156, 7
    %v1158 = vsub.s32 6, %v1157
    %v1159 = vrot.slane %v1130, %v1158
    %v1615 = vunpack.c.l.b16 %v682
    %v1616 = vunpack.c.h.b16 %v682
    %v1617 = vunpack.c.l.b16 %v683
    %v1618 = vunpack.c.h.b16 %v683
    %v1619 = vunpack.c.l.b16 %v684
    %v1620 = vunpack.c.h.b16 %v684
    %v1621 = vunpack.c.l.b16 %v685
    %v1622 = vunpack.c.l.b16 %v686
    %v1623 = vunpack.c.h.b16 %v686
    %v1624 = vunpack.c.l.b16 %v687
    %v1625 = vunpack.c.h.b16 %v687
    %v1626 = vunpack.c.l.b16 %v688
    %v1627 = vunpack.c.h.b16 %v688
    %v1628 = vunpack.c.l.b16 %v689
    %v1629 = vunpack.c.l.b16 %v690
    %v1630 = vunpack.c.h.b16 %v690
    %v1631 = vunpack.c.l.b16 %v691
    %v1632 = vunpack.c.h.b16 %v691
    %v1633 = vunpack.c.l.b16 %v692
    %v1634 = vunpack.c.h.b16 %v692
    %v1635 = vunpack.c.l.b16 %v693
    %v1636 = vunpack.c.l.b16 %v694
    %v1637 = vunpack.c.h.b16 %v694
    %v1638 = vunpack.c.l.b16 %v695
    %v1639 = vunpack.c.h.b16 %v695
    %v1640 = vunpack.c.l.b16 %v696
    %v1641 = vunpack.c.h.b16 %v696
    %v1642 = vunpack.c.l.b16 %v697
    %v1643 = vunpack.c.l.b16 %v698
    %v1644 = vunpack.c.h.b16 %v698
    %v1645 = vunpack.c.l.b16 %v699
    %v1646 = vunpack.c.h.b16 %v699
    %v1647 = vunpack.c.l.b16 %v700
    %v1648 = vunpack.c.h.b16 %v700
    %v1649 = vunpack.c.l.b16 %v701
    %v1650 = vunpack.c.l.b16 %v702
    %v1651 = vunpack.c.h.b16 %v702
    %v1652 = vunpack.c.l.b16 %v703
    %v1653 = vunpack.c.h.b16 %v703
    %v1654 = vunpack.c.l.b16 %v704
    %v1655 = vunpack.c.h.b16 %v704
    %v1656 = vunpack.c.l.b16 %v705
    %v1657 = vunpack.c.l.b16 %v706
    %v1658 = vunpack.c.h.b16 %v706
    %v1659 = vunpack.c.l.b16 %v707
    %v1660 = vunpack.c.h.b16 %v707
    %v1661 = vunpack.c.l.b16 %v708
    %v1662 = vunpack.c.h.b16 %v708
    %v1663 = vunpack.c.l.b16 %v709
    %v1664 = vunpack.c.l.b16 %v710
    %v1665 = vunpack.c.h.b16 %v710
    %v1666 = vunpack.c.l.b16 %v711
    %v1667 = vunpack.c.h.b16 %v711
    %v1668 = vunpack.c.l.b16 %v712
    %v1669 = vunpack.c.h.b16 %v712
    %v1670 = vunpack.c.l.b16 %v713
    %v1671 = vunpack.c.l.b16 %v714
    %v1672 = vunpack.c.h.b16 %v714
    %v1673 = vunpack.c.l.b16 %v715
    %v1674 = vunpack.c.h.b16 %v715
    %v1675 = vunpack.c.l.b16 %v716
    %v1676 = vunpack.c.h.b16 %v716
    %v1677 = vunpack.c.l.b16 %v717
    %v1678 = vunpack.c.l.b16 %v718
    %v1679 = vunpack.c.h.b16 %v718
    %v1680 = vunpack.c.l.b16 %v719
    %v1681 = vunpack.c.h.b16 %v719
    %v1682 = vunpack.c.l.b16 %v720
    %v1683 = vunpack.c.h.b16 %v720
    %v1684 = vunpack.c.l.b16 %v721
    %v1685 = vunpack.c.l.b16 %v722
    %v1686 = vunpack.c.h.b16 %v722
    %v1687 = vunpack.c.l.b16 %v723
    %v1688 = vunpack.c.h.b16 %v723
    %v1689 = vunpack.c.l.b16 %v724
    %v1690 = vunpack.c.h.b16 %v724
    %v1691 = vunpack.c.l.b16 %v725
    %v1692 = vunpack.c.l.b16 %v726
    %v1693 = vunpack.c.h.b16 %v726
    %v1694 = vunpack.c.l.b16 %v727
    %v1695 = vunpack.c.h.b16 %v727
    %v1696 = vunpack.c.l.b16 %v728
    %v1697 = vunpack.c.h.b16 %v728
    %v1698 = vunpack.c.l.b16 %v729
    %v1699 = vunpack.c.l.b16 %v730
    %v1700 = vunpack.c.h.b16 %v730
    %v1701 = vunpack.c.l.b16 %v731
    %v1702 = vunpack.c.h.b16 %v731
    %v1703 = vunpack.c.l.b16 %v732
    %v1704 = vunpack.c.h.b16 %v732
    %v1705 = vunpack.c.l.b16 %v733
    %v1706 = vunpack.c.l.b16 %v734
    %v1707 = vunpack.c.h.b16 %v734
    %v1708 = vunpack.c.l.b16 %v735
    %v1709 = vunpack.c.h.b16 %v735
    %v1710 = vunpack.c.l.b16 %v736
    %v1711 = vunpack.c.h.b16 %v736
    %v1712 = vunpack.c.l.b16 %v737
    %v1713 = vunpack.c.l.b16 %v738
    %v1714 = vunpack.c.h.b16 %v738
    %v1715 = vunpack.c.l.b16 %v739
    %v1716 = vunpack.c.h.b16 %v739
    %v1717 = vunpack.c.l.b16 %v740
    %v1718 = vunpack.c.h.b16 %v740
    %v1719 = vunpack.c.l.b16 %v741
    %v1720 = vunpack.c.l.b16 %v742
    %v1721 = vunpack.c.h.b16 %v742
    %v1722 = vunpack.c.l.b16 %v743
    %v1723 = vunpack.c.h.b16 %v743
    %v1724 = vunpack.c.l.b16 %v744
    %v1725 = vunpack.c.h.b16 %v744
    %v1726 = vunpack.c.l.b16 %v745
    %v1727 = vunpack.c.l.b16 %v746
    %v1728 = vunpack.c.h.b16 %v746
    %v1729 = vunpack.c.l.b16 %v747
    %v1730 = vunpack.c.h.b16 %v747
    %v1731 = vunpack.c.l.b16 %v748
    %v1732 = vunpack.c.h.b16 %v748
    %v1733 = vunpack.c.l.b16 %v749
    %v1734 = vunpack.c.l.b16 %v750
    %v1735 = vunpack.c.h.b16 %v750
    %v1736 = vunpack.c.l.b16 %v751
    %v1737 = vunpack.c.h.b16 %v751
    %v1738 = vunpack.c.l.b16 %v752
    %v1739 = vunpack.c.h.b16 %v752
    %v1740 = vunpack.c.l.b16 %v753
    %v1741 = vunpack.c.l.b16 %v754
    %v1742 = vunpack.c.h.b16 %v754
    %v1743 = vunpack.c.l.b16 %v755
    %v1744 = vunpack.c.h.b16 %v755
    %v1745 = vunpack.c.l.b16 %v756
    %v1746 = vunpack.c.h.b16 %v756
    %v1747 = vunpack.c.l.b16 %v757
    %v1748 = vunpack.c.l.b16 %v758
    %v1749 = vunpack.c.h.b16 %v758
    %v1750 = vunpack.c.l.b16 %v759
    %v1751 = vunpack.c.h.b16 %v759
    %v1752 = vunpack.c.l.b16 %v760
    %v1753 = vunpack.c.h.b16 %v760
    %v1754 = vunpack.c.l.b16 %v761
    %v1755 = vunpack.c.l.b16 %v762
    %v1756 = vunpack.c.h.b16 %v762
    %v1757 = vunpack.c.l.b16 %v763
    %v1758 = vunpack.c.h.b16 %v763
    %v1759 = vunpack.c.l.b16 %v764
    %v1760 = vunpack.c.h.b16 %v764
    %v1761 = vunpack.c.l.b16 %v765
    %v1762 = vunpack.c.l.b16 %v766
    %v1763 = vunpack.c.h.b16 %v766
    %v1764 = vunpack.c.l.b16 %v767
    %v1765 = vunpack.c.h.b16 %v767
    %v1766 = vunpack.c.l.b16 %v768
    %v1767 = vunpack.c.h.b16 %v768
    %v1768 = vunpack.c.l.b16 %v769
    %v1769 = vunpack.c.l.b16 %v770
    %v1770 = vunpack.c.h.b16 %v770
    %v1771 = vunpack.c.l.b16 %v771
    %v1772 = vunpack.c.h.b16 %v771
    %v1773 = vunpack.c.l.b16 %v772
    %v1774 = vunpack.c.h.b16 %v772
    %v1775 = vunpack.c.l.b16 %v773
    %v1776 = vunpack.c.l.b16 %v774
    %v1777 = vunpack.c.h.b16 %v774
    %v1778 = vunpack.c.l.b16 %v775
    %v1779 = vunpack.c.h.b16 %v775
    %v1780 = vunpack.c.l.b16 %v776
    %v1781 = vunpack.c.h.b16 %v776
    %v1782 = vunpack.c.l.b16 %v777
    %v1783 = vunpack.c.l.b16 %v778
    %v1784 = vunpack.c.h.b16 %v778
    %v1785 = vunpack.c.l.b16 %v779
    %v1786 = vunpack.c.h.b16 %v779
    %v1787 = vunpack.c.l.b16 %v780
    %v1788 = vunpack.c.h.b16 %v780
    %v1789 = vunpack.c.l.b16 %v781
    %v1790 = vunpack.c.l.b16 %v782
    %v1791 = vunpack.c.h.b16 %v782
    %v1792 = vunpack.c.l.b16 %v783
    %v1793 = vunpack.c.h.b16 %v783
    %v1794 = vunpack.c.l.b16 %v784
    %v1795 = vunpack.c.h.b16 %v784
    %v1796 = vunpack.c.l.b16 %v785
    %v1797 = vunpack.c.l.b16 %v786
    %v1798 = vunpack.c.h.b16 %v786
    %v1799 = vunpack.c.l.b16 %v787
    %v1800 = vunpack.c.h.b16 %v787
    %v1801 = vunpack.c.l.b16 %v788
    %v1802 = vunpack.c.h.b16 %v788
    %v1803 = vunpack.c.l.b16 %v789
    %v1804 = vunpack.c.l.b16 %v790
    %v1805 = vunpack.c.h.b16 %v790
    %v1806 = vunpack.c.l.b16 %v791
    %v1807 = vunpack.c.h.b16 %v791
    %v1808 = vunpack.c.l.b16 %v792
    %v1809 = vunpack.c.h.b16 %v792
    %v1810 = vunpack.c.l.b16 %v793
    %v1811 = vunpack.c.l.b16 %v794
    %v1812 = vunpack.c.h.b16 %v794
    %v1813 = vunpack.c.l.b16 %v795
    %v1814 = vunpack.c.h.b16 %v795
    %v1815 = vunpack.c.l.b16 %v796
    %v1816 = vunpack.c.h.b16 %v796
    %v1817 = vunpack.c.l.b16 %v797
    %v1818 = vunpack.c.l.b16 %v798
    %v1819 = vunpack.c.h.b16 %v798
    %v1820 = vunpack.c.l.b16 %v799
    %v1821 = vunpack.c.h.b16 %v799
    %v1822 = vunpack.c.l.b16 %v800
    %v1823 = vunpack.c.h.b16 %v800
    %v1824 = vunpack.c.l.b16 %v801
    %v1825 = vunpack.c.l.b16 %v802
    %v1826 = vunpack.c.h.b16 %v802
    %v1827 = vunpack.c.l.b16 %v803
    %v1828 = vunpack.c.h.b16 %v803
    %v1829 = vunpack.c.l.b16 %v804
    %v1830 = vunpack.c.h.b16 %v804
    %v1831 = vunpack.c.l.b16 %v805
    %v1832 = vunpack.c.l.b16 %v806
    %v1833 = vunpack.c.h.b16 %v806
    %v1834 = vunpack.c.l.b16 %v807
    %v1835 = vunpack.c.h.b16 %v807
    %v1836 = vunpack.c.l.b16 %v808
    %v1837 = vunpack.c.h.b16 %v808
    %v1838 = vunpack.c.l.b16 %v809
    %v1839 = vunpack.c.l.b16 %v810
    %v1840 = vunpack.c.h.b16 %v810
    %v1841 = vunpack.c.l.b16 %v811
    %v1842 = vunpack.c.h.b16 %v811
    %v1843 = vunpack.c.l.b16 %v812
    %v1844 = vunpack.c.h.b16 %v812
    %v1845 = vunpack.c.l.b16 %v813
    %v1846 = vunpack.c.l.b16 %v814
    %v1847 = vunpack.c.h.b16 %v814
    %v1848 = vunpack.c.l.b16 %v815
    %v1849 = vunpack.c.h.b16 %v815
    %v1850 = vunpack.c.l.b16 %v816
    %v1851 = vunpack.c.h.b16 %v816
    %v1852 = vunpack.c.l.b16 %v817
    %v1853 = vunpack.c.l.b16 %v818
    %v1854 = vunpack.c.h.b16 %v818
    %v1855 = vunpack.c.l.b16 %v819
    %v1856 = vunpack.c.h.b16 %v819
    %v1857 = vunpack.c.l.b16 %v820
    %v1858 = vunpack.c.h.b16 %v820
    %v1859 = vunpack.c.l.b16 %v821
    %v1860 = vunpack.c.l.b16 %v822
    %v1861 = vunpack.c.h.b16 %v822
    %v1862 = vunpack.c.l.b16 %v823
    %v1863 = vunpack.c.h.b16 %v823
    %v1864 = vunpack.c.l.b16 %v824
    %v1865 = vunpack.c.h.b16 %v824
    %v1866 = vunpack.c.l.b16 %v825
    %v1867 = vunpack.c.l.b16 %v826
    %v1868 = vunpack.c.h.b16 %v826
    %v1869 = vunpack.c.l.b16 %v827
    %v1870 = vunpack.c.h.b16 %v827
    %v1871 = vunpack.c.l.b16 %v828
    %v1872 = vunpack.c.h.b16 %v828
    %v1873 = vunpack.c.l.b16 %v829
    %v1874 = vunpack.c.l.b16 %v830
    %v1875 = vunpack.c.h.b16 %v830
    %v1876 = vunpack.c.l.b16 %v831
    %v1877 = vunpack.c.h.b16 %v831
    %v1878 = vunpack.c.l.b16 %v832
    %v1879 = vunpack.c.h.b16 %v832
    %v1880 = vunpack.c.l.b16 %v833
    %v1881 = vunpack.c.l.b16 %v834
    %v1882 = vunpack.c.h.b16 %v834
    %v1883 = vunpack.c.l.b16 %v835
    %v1884 = vunpack.c.h.b16 %v835
    %v1885 = vunpack.c.l.b16 %v836
    %v1886 = vunpack.c.h.b16 %v836
    %v1887 = vunpack.c.l.b16 %v837
    %v1888 = vunpack.c.l.b16 %v838
    %v1889 = vunpack.c.h.b16 %v838
    %v1890 = vunpack.c.l.b16 %v839
    %v1891 = vunpack.c.h.b16 %v839
    %v1892 = vunpack.c.l.b16 %v840
    %v1893 = vunpack.c.h.b16 %v840
    %v1894 = vunpack.c.l.b16 %v841
    %v1895 = vunpack.c.l.b16 %v842
    %v1896 = vunpack.c.h.b16 %v842
    %v1897 = vunpack.c.l.b16 %v843
    %v1898 = vunpack.c.h.b16 %v843
    %v1899 = vunpack.c.l.b16 %v844
    %v1900 = vunpack.c.h.b16 %v844
    %v1901 = vunpack.c.l.b16 %v845
    %v1902 = vunpack.c.l.b16 %v846
    %v1903 = vunpack.c.h.b16 %v846
    %v1904 = vunpack.c.l.b16 %v847
    %v1905 = vunpack.c.h.b16 %v847
    %v1906 = vunpack.c.l.b16 %v848
    %v1907 = vunpack.c.h.b16 %v848
    %v1908 = vunpack.c.l.b16 %v849
    %v1909 = vunpack.c.l.b16 %v850
    %v1910 = vunpack.c.h.b16 %v850
    %v1911 = vunpack.c.l.b16 %v851
    %v1912 = vunpack.c.h.b16 %v851
    %v1913 = vunpack.c.l.b16 %v852
    %v1914 = vunpack.c.h.b16 %v852
    %v1915 = vunpack.c.l.b16 %v853
    %v1916 = vunpack.c.l.b16 %v854
    %v1917 = vunpack.c.h.b16 %v854
    %v1918 = vunpack.c.l.b16 %v855
    %v1919 = vunpack.c.h.b16 %v855
    %v1920 = vunpack.c.l.b16 %v856
    %v1921 = vunpack.c.h.b16 %v856
    %v1922 = vunpack.c.l.b16 %v857
    %v1923 = vunpack.c.l.b16 %v858
    %v1924 = vunpack.c.h.b16 %v858
    %v1925 = vunpack.c.l.b16 %v859
    %v1926 = vunpack.c.h.b16 %v859
    %v1927 = vunpack.c.l.b16 %v860
    %v1928 = vunpack.c.h.b16 %v860
    %v1929 = vunpack.c.l.b16 %v861
    %v1930 = vunpack.c.l.b16 %v862
    %v1931 = vunpack.c.h.b16 %v862
    %v1932 = vunpack.c.l.b16 %v863
    %v1933 = vunpack.c.h.b16 %v863
    %v1934 = vunpack.c.l.b16 %v864
    %v1935 = vunpack.c.h.b16 %v864
    %v1936 = vunpack.c.l.b16 %v865
    %v1937 = vunpack.c.l.b16 %v866
    %v1938 = vunpack.c.h.b16 %v866
    %v1939 = vunpack.c.l.b16 %v867
    %v1940 = vunpack.c.h.b16 %v867
    %v1941 = vunpack.c.l.b16 %v868
    %v1942 = vunpack.c.h.b16 %v868
    %v1943 = vunpack.c.l.b16 %v869
    %v1944 = vunpack.c.l.b16 %v870
    %v1945 = vunpack.c.h.b16 %v870
    %v1946 = vunpack.c.l.b16 %v871
    %v1947 = vunpack.c.h.b16 %v871
    %v1948 = vunpack.c.l.b16 %v872
    %v1949 = vunpack.c.h.b16 %v872
    %v1950 = vunpack.c.l.b16 %v873
    %v1951 = vunpack.c.l.b16 %v874
    %v1952 = vunpack.c.h.b16 %v874
    %v1953 = vunpack.c.l.b16 %v875
    %v1954 = vunpack.c.h.b16 %v875
    %v1955 = vunpack.c.l.b16 %v876
    %v1956 = vunpack.c.h.b16 %v876
    %v1957 = vunpack.c.l.b16 %v877
    %v1958 = vunpack.c.l.b16 %v878
    %v1959 = vunpack.c.h.b16 %v878
    %v1960 = vunpack.c.l.b16 %v879
    %v1961 = vunpack.c.h.b16 %v879
    %v1962 = vunpack.c.l.b16 %v880
    %v1963 = vunpack.c.h.b16 %v880
    %v1964 = vunpack.c.l.b16 %v881
    %v1965 = vunpack.c.l.b16 %v882
    %v1966 = vunpack.c.h.b16 %v882
    %v1967 = vunpack.c.l.b16 %v883
    %v1968 = vunpack.c.h.b16 %v883
    %v1969 = vunpack.c.l.b16 %v884
    %v1970 = vunpack.c.h.b16 %v884
    %v1971 = vunpack.c.l.b16 %v885
    %v1972 = vunpack.c.l.b16 %v886
    %v1973 = vunpack.c.h.b16 %v886
    %v1974 = vunpack.c.l.b16 %v887
    %v1975 = vunpack.c.h.b16 %v887
    %v1976 = vunpack.c.l.b16 %v888
    %v1977 = vunpack.c.h.b16 %v888
    %v1978 = vunpack.c.l.b16 %v889
    %v1979 = vunpack.c.l.b16 %v890
    %v1980 = vunpack.c.h.b16 %v890
    %v1981 = vunpack.c.l.b16 %v891
    %v1982 = vunpack.c.h.b16 %v891
    %v1983 = vunpack.c.l.b16 %v892
    %v1984 = vunpack.c.h.b16 %v892
    %v1985 = vunpack.c.l.b16 %v893
    %v1986 = vunpack.c.l.b16 %v894
    %v1987 = vunpack.c.h.b16 %v894
    %v1988 = vunpack.c.l.b16 %v895
    %v1989 = vunpack.c.h.b16 %v895
    %v1990 = vunpack.c.l.b16 %v896
    %v1991 = vunpack.c.h.b16 %v896
    %v1992 = vunpack.c.l.b16 %v897
    %v1993 = vunpack.c.l.b16 %v898
    %v1994 = vunpack.c.h.b16 %v898
    %v1995 = vunpack.c.l.b16 %v899
    %v1996 = vunpack.c.h.b16 %v899
    %v1997 = vunpack.c.l.b16 %v900
    %v1998 = vunpack.c.h.b16 %v900
    %v1999 = vunpack.c.l.b16 %v901
    %v2000 = vunpack.c.l.b16 %v902
    %v2001 = vunpack.c.h.b16 %v902
    %v2002 = vunpack.c.l.b16 %v903
    %v2003 = vunpack.c.h.b16 %v903
    %v2004 = vunpack.c.l.b16 %v904
    %v2005 = vunpack.c.h.b16 %v904
    %v2006 = vunpack.c.l.b16 %v905
    %v2007 = vunpack.c.l.b16 %v906
    %v2008 = vunpack.c.h.b16 %v906
    %v2009 = vunpack.c.l.b16 %v907
    %v2010 = vunpack.c.h.b16 %v907
    %v2011 = vunpack.c.l.b16 %v908
    %v2012 = vunpack.c.h.b16 %v908
    %v2013 = vunpack.c.l.b16 %v909
    %v2014 = vunpack.c.l.b16 %v910
    %v2015 = vunpack.c.h.b16 %v910
    %v2016 = vunpack.c.l.b16 %v911
    %v2017 = vunpack.c.h.b16 %v911
    %v2018 = vunpack.c.l.b16 %v912
    %v2019 = vunpack.c.h.b16 %v912
    %v2020 = vunpack.c.l.b16 %v913
    %v2021 = vunpack.c.l.b16 %v914
    %v2022 = vunpack.c.h.b16 %v914
    %v2023 = vunpack.c.l.b16 %v915
    %v2024 = vunpack.c.h.b16 %v915
    %v2025 = vunpack.c.l.b16 %v916
    %v2026 = vunpack.c.h.b16 %v916
    %v2027 = vunpack.c.l.b16 %v917
    %v2028 = vunpack.c.l.b16 %v918
    %v2029 = vunpack.c.h.b16 %v918
    %v2030 = vunpack.c.l.b16 %v919
    %v2031 = vunpack.c.h.b16 %v919
    %v2032 = vunpack.c.l.b16 %v920
    %v2033 = vunpack.c.h.b16 %v920
    %v2034 = vunpack.c.l.b16 %v921
    %v2035 = vunpack.c.l.b16 %v922
    %v2036 = vunpack.c.h.b16 %v922
    %v2037 = vunpack.c.l.b16 %v923
    %v2038 = vunpack.c.h.b16 %v923
    %v2039 = vunpack.c.l.b16 %v924
    %v2040 = vunpack.c.h.b16 %v924
    %v2041 = vunpack.c.l.b16 %v925
    %v2042 = vunpack.c.l.b16 %v926
    %v2043 = vunpack.c.h.b16 %v926
    %v2044 = vunpack.c.l.b16 %v927
    %v2045 = vunpack.c.h.b16 %v927
    %v2046 = vunpack.c.l.b16 %v928
    %v2047 = vunpack.c.h.b16 %v928
    %v2048 = vunpack.c.l.b16 %v929
    %v2049 = vunpack.c.l.b16 %v930
    %v2050 = vunpack.c.h.b16 %v930
    %v2051 = vunpack.c.l.b16 %v931
    %v2052 = vunpack.c.h.b16 %v931
    %v2053 = vunpack.c.l.b16 %v932
    %v2054 = vunpack.c.h.b16 %v932
    %v2055 = vunpack.c.l.b16 %v933
    %v2056 = vunpack.c.l.b16 %v934
    %v2057 = vunpack.c.h.b16 %v934
    %v2058 = vunpack.c.l.b16 %v935
    %v2059 = vunpack.c.h.b16 %v935
    %v2060 = vunpack.c.l.b16 %v936
    %v2061 = vunpack.c.h.b16 %v936
    %v2062 = vunpack.c.l.b16 %v937
    %v2063 = vunpack.c.l.b16 %v938
    %v2064 = vunpack.c.h.b16 %v938
    %v2065 = vunpack.c.l.b16 %v939
    %v2066 = vunpack.c.h.b16 %v939
    %v2067 = vunpack.c.l.b16 %v940
    %v2068 = vunpack.c.h.b16 %v940
    %v2069 = vunpack.c.l.b16 %v941
    %v2070 = vunpack.c.l.b16 %v942
    %v2071 = vunpack.c.h.b16 %v942
    %v2072 = vunpack.c.l.b16 %v943
    %v2073 = vunpack.c.h.b16 %v943
    %v2074 = vunpack.c.l.b16 %v944
    %v2075 = vunpack.c.h.b16 %v944
    %v2076 = vunpack.c.l.b16 %v945
    %v2077 = vunpack.c.l.b16 %v946
    %v2078 = vunpack.c.h.b16 %v946
    %v2079 = vunpack.c.l.b16 %v947
    %v2080 = vunpack.c.h.b16 %v947
    %v2081 = vunpack.c.l.b16 %v948
    %v2082 = vunpack.c.h.b16 %v948
    %v2083 = vunpack.c.l.b16 %v949
    %v2084 = vunpack.c.l.b16 %v950
    %v2085 = vunpack.c.h.b16 %v950
    %v2086 = vunpack.c.l.b16 %v951
    %v2087 = vunpack.c.h.b16 %v951
    %v2088 = vunpack.c.l.b16 %v952
    %v2089 = vunpack.c.h.b16 %v952
    %v2090 = vunpack.c.l.b16 %v953
    %v2091 = vunpack.c.l.b16 %v954
    %v2092 = vunpack.c.h.b16 %v954
    %v2093 = vunpack.c.l.b16 %v955
    %v2094 = vunpack.c.h.b16 %v955
    %v2095 = vunpack.c.l.b16 %v956
    %v2096 = vunpack.c.h.b16 %v956
    %v2097 = vunpack.c.l.b16 %v957
    %v2098 = vunpack.c.l.b16 %v958
    %v2099 = vunpack.c.h.b16 %v958
    %v2100 = vunpack.c.l.b16 %v959
    %v2101 = vunpack.c.h.b16 %v959
    %v2102 = vunpack.c.l.b16 %v960
    %v2103 = vunpack.c.h.b16 %v960
    %v2104 = vunpack.c.l.b16 %v961
    %v2105 = vunpack.c.l.b16 %v962
    %v2106 = vunpack.c.h.b16 %v962
    %v2107 = vunpack.c.l.b16 %v963
    %v2108 = vunpack.c.h.b16 %v963
    %v2109 = vunpack.c.l.b16 %v964
    %v2110 = vunpack.c.h.b16 %v964
    %v2111 = vunpack.c.l.b16 %v965
    %v2112 = vunpack.c.l.b16 %v966
    %v2113 = vunpack.c.h.b16 %v966
    %v2114 = vunpack.c.l.b16 %v967
    %v2115 = vunpack.c.h.b16 %v967
    %v2116 = vunpack.c.l.b16 %v968
    %v2117 = vunpack.c.h.b16 %v968
    %v2118 = vunpack.c.l.b16 %v969
    %v2119 = vunpack.c.l.b16 %v970
    %v2120 = vunpack.c.h.b16 %v970
    %v2121 = vunpack.c.l.b16 %v971
    %v2122 = vunpack.c.h.b16 %v971
    %v2123 = vunpack.c.l.b16 %v972
    %v2124 = vunpack.c.h.b16 %v972
    %v2125 = vunpack.c.l.b16 %v973
    %v2126 = vunpack.c.l.b16 %v974
    %v2127 = vunpack.c.h.b16 %v974
    %v2128 = vunpack.c.l.b16 %v975
    %v2129 = vunpack.c.h.b16 %v975
    %v2130 = vunpack.c.l.b16 %v976
    %v2131 = vunpack.c.h.b16 %v976
    %v2132 = vunpack.c.l.b16 %v977
    %v2133 = vunpack.c.l.b16 %v978
    %v2134 = vunpack.c.h.b16 %v978
    %v2135 = vunpack.c.l.b16 %v979
    %v2136 = vunpack.c.h.b16 %v979
    %v2137 = vunpack.c.l.b16 %v980
    %v2138 = vunpack.c.h.b16 %v980
    %v2139 = vunpack.c.l.b16 %v981
    %v2140 = vunpack.c.l.b16 %v982
    %v2141 = vunpack.c.h.b16 %v982
    %v2142 = vunpack.c.l.b16 %v983
    %v2143 = vunpack.c.h.b16 %v983
    %v2144 = vunpack.c.l.b16 %v984
    %v2145 = vunpack.c.h.b16 %v984
    %v2146 = vunpack.c.l.b16 %v985
    %v2147 = vunpack.c.l.b16 %v986
    %v2148 = vunpack.c.h.b16 %v986
    %v2149 = vunpack.c.l.b16 %v987
    %v2150 = vunpack.c.h.b16 %v987
    %v2151 = vunpack.c.l.b16 %v988
    %v2152 = vunpack.c.h.b16 %v988
    %v2153 = vunpack.c.l.b16 %v989
    %v2154 = vunpack.c.l.b16 %v990
    %v2155 = vunpack.c.h.b16 %v990
    %v2156 = vunpack.c.l.b16 %v991
    %v2157 = vunpack.c.h.b16 %v991
    %v2158 = vunpack.c.l.b16 %v992
    %v2159 = vunpack.c.h.b16 %v992
    %v2160 = vunpack.c.l.b16 %v993
    %v2161 = vunpack.c.l.b16 %v994
    %v2162 = vunpack.c.h.b16 %v994
    %v2163 = vunpack.c.l.b16 %v995
    %v2164 = vunpack.c.h.b16 %v995
    %v2165 = vunpack.c.l.b16 %v996
    %v2166 = vunpack.c.h.b16 %v996
    %v2167 = vunpack.c.l.b16 %v997
    %v2168 = vunpack.c.l.b16 %v998
    %v2169 = vunpack.c.h.b16 %v998
    %v2170 = vunpack.c.l.b16 %v999
    %v2171 = vunpack.c.h.b16 %v999
    %v2172 = vunpack.c.l.b16 %v1000
    %v2173 = vunpack.c.h.b16 %v1000
    %v2174 = vunpack.c.l.b16 %v1001
    %v2175 = vunpack.c.l.b16 %v1002
    %v2176 = vunpack.c.h.b16 %v1002
    %v2177 = vunpack.c.l.b16 %v1003
    %v2178 = vunpack.c.h.b16 %v1003
    %v2179 = vunpack.c.l.b16 %v1004
    %v2180 = vunpack.c.h.b16 %v1004
    %v2181 = vunpack.c.l.b16 %v1005
    %v2182 = vunpack.c.l.b16 %v1006
    %v2183 = vunpack.c.h.b16 %v1006
    %v2184 = vunpack.c.l.b16 %v1007
    %v2185 = vunpack.c.h.b16 %v1007
    %v2186 = vunpack.c.l.b16 %v1008
    %v2187 = vunpack.c.h.b16 %v1008
    %v2188 = vunpack.c.l.b16 %v1009
    %v2189 = vunpack.c.l.b16 %v1010
    %v2190 = vunpack.c.h.b16 %v1010
    %v2191 = vunpack.c.l.b16 %v1011
    %v2192 = vunpack.c.h.b16 %v1011
    %v2193 = vunpack.c.l.b16 %v1012
    %v2194 = vunpack.c.h.b16 %v1012
    %v2195 = vunpack.c.l.b16 %v1013
    %v2196 = vunpack.c.l.b16 %v1014
    %v2197 = vunpack.c.h.b16 %v1014
    %v2198 = vunpack.c.l.b16 %v1015
    %v2199 = vunpack.c.h.b16 %v1015
    %v2200 = vunpack.c.l.b16 %v1016
    %v2201 = vunpack.c.h.b16 %v1016
    %v2202 = vunpack.c.l.b16 %v1017
    %v2203 = vunpack.c.l.b16 %v1018
    %v2204 = vunpack.c.h.b16 %v1018
    %v2205 = vunpack.c.l.b16 %v1019
    %v2206 = vunpack.c.h.b16 %v1019
    %v2207 = vunpack.c.l.b16 %v1020
    %v2208 = vunpack.c.h.b16 %v1020
    %v2209 = vunpack.c.l.b16 %v1021
    %v2210 = vunpack.c.l.b16 %v1022
    %v2211 = vunpack.c.h.b16 %v1022
    %v2212 = vunpack.c.l.b16 %v1023
    %v2213 = vunpack.c.h.b16 %v1023
    %v2214 = vunpack.c.l.b16 %v1024
    %v2215 = vunpack.c.h.b16 %v1024
    %v2216 = vunpack.c.l.b16 %v1025
    %v2217 = vunpack.c.l.b16 %v1026
    %v2218 = vunpack.c.h.b16 %v1026
    %v2219 = vunpack.c.l.b16 %v1027
    %v2220 = vunpack.c.h.b16 %v1027
    %v2221 = vunpack.c.l.b16 %v1028
    %v2222 = vunpack.c.h.b16 %v1028
    %v2223 = vunpack.c.l.b16 %v1029
    %v2224 = vunpack.c.l.b16 %v1030
    %v2225 = vunpack.c.h.b16 %v1030
    %v2226 = vunpack.c.l.b16 %v1031
    %v2227 = vunpack.c.h.b16 %v1031
    %v2228 = vunpack.c.l.b16 %v1032
    %v2229 = vunpack.c.h.b16 %v1032
    %v2230 = vunpack.c.l.b16 %v1033
    %v2231 = vunpack.c.l.b16 %v1034
    %v2232 = vunpack.c.h.b16 %v1034
    %v2233 = vunpack.c.l.b16 %v1035
    %v2234 = vunpack.c.h.b16 %v1035
    %v2235 = vunpack.c.l.b16 %v1036
    %v2236 = vunpack.c.h.b16 %v1036
    %v2237 = vunpack.c.l.b16 %v1037
    %v2238 = vunpack.c.l.b16 %v1038
    %v2239 = vunpack.c.h.b16 %v1038
    %v2240 = vunpack.c.l.b16 %v1039
    %v2241 = vunpack.c.h.b16 %v1039
    %v2242 = vunpack.c.l.b16 %v1040
    %v2243 = vunpack.c.h.b16 %v1040
    %v2244 = vunpack.c.l.b16 %v1041
    %v2245 = vunpack.c.l.b16 %v1042
    %v2246 = vunpack.c.h.b16 %v1042
    %v2247 = vunpack.c.l.b16 %v1043
    %v2248 = vunpack.c.h.b16 %v1043
    %v2249 = vunpack.c.l.b16 %v1044
    %v2250 = vunpack.c.h.b16 %v1044
    %v2251 = vunpack.c.l.b16 %v1045
    %v2252 = vunpack.c.l.b16 %v1046
    %v2253 = vunpack.c.h.b16 %v1046
    %v2254 = vunpack.c.l.b16 %v1047
    %v2255 = vunpack.c.h.b16 %v1047
    %v2256 = vunpack.c.l.b16 %v1048
    %v2257 = vunpack.c.h.b16 %v1048
    %v2258 = vunpack.c.l.b16 %v1049
    %v2259 = vunpack.c.l.b16 %v1050
    %v2260 = vunpack.c.h.b16 %v1050
    %v2261 = vunpack.c.l.b16 %v1051
    %v2262 = vunpack.c.h.b16 %v1051
    %v2263 = vunpack.c.l.b16 %v1052
    %v2264 = vunpack.c.h.b16 %v1052
    %v2265 = vunpack.c.l.b16 %v1053
    %v2266 = vunpack.c.l.b16 %v1054
    %v2267 = vunpack.c.h.b16 %v1054
    %v2268 = vunpack.c.l.b16 %v1055
    %v2269 = vunpack.c.h.b16 %v1055
    %v2270 = vunpack.c.l.b16 %v1056
    %v2271 = vunpack.c.h.b16 %v1056
    %v2272 = vunpack.c.l.b16 %v1057
    %v2273 = vunpack.c.l.b16 %v1058
    %v2274 = vunpack.c.h.b16 %v1058
    %v2275 = vunpack.c.l.b16 %v1059
    %v2276 = vunpack.c.h.b16 %v1059
    %v2277 = vunpack.c.l.b16 %v1060
    %v2278 = vunpack.c.h.b16 %v1060
    %v2279 = vunpack.c.l.b16 %v1061
    %v2280 = vunpack.c.l.b16 %v1062
    %v2281 = vunpack.c.h.b16 %v1062
    %v2282 = vunpack.c.l.b16 %v1063
    %v2283 = vunpack.c.h.b16 %v1063
    %v2284 = vunpack.c.l.b16 %v1064
    %v2285 = vunpack.c.h.b16 %v1064
    %v2286 = vunpack.c.l.b16 %v1065
    %v2287 = vunpack.c.l.b16 %v1066
    %v2288 = vunpack.c.h.b16 %v1066
    %v2289 = vunpack.c.l.b16 %v1067
    %v2290 = vunpack.c.h.b16 %v1067
    %v2291 = vunpack.c.l.b16 %v1068
    %v2292 = vunpack.c.h.b16 %v1068
    %v2293 = vunpack.c.l.b16 %v1069
    %v2294 = vunpack.c.l.b16 %v1070
    %v2295 = vunpack.c.h.b16 %v1070
    %v2296 = vunpack.c.l.b16 %v1071
    %v2297 = vunpack.c.h.b16 %v1071
    %v2298 = vunpack.c.l.b16 %v1072
    %v2299 = vunpack.c.h.b16 %v1072
    %v2300 = vunpack.c.l.b16 %v1073
    %v2301 = vunpack.c.l.b16 %v1074
    %v2302 = vunpack.c.h.b16 %v1074
    %v2303 = vunpack.c.l.b16 %v1075
    %v2304 = vunpack.c.h.b16 %v1075
    %v2305 = vunpack.c.l.b16 %v1076
    %v2306 = vunpack.c.h.b16 %v1076
    %v2307 = vunpack.c.l.b16 %v1077
    %v2308 = vunpack.c.l.b16 %v1078
    %v2309 = vunpack.c.h.b16 %v1078
    %v2310 = vunpack.c.l.b16 %v1079
    %v2311 = vunpack.c.h.b16 %v1079
    %v2312 = vunpack.c.l.b16 %v1080
    %v2313 = vunpack.c.h.b16 %v1080
    %v2314 = vunpack.c.l.b16 %v1081
    %v2315 = vunpack.c.l.b16 %v1082
    %v2316 = vunpack.c.h.b16 %v1082
    %v2317 = vunpack.c.l.b16 %v1083
    %v2318 = vunpack.c.h.b16 %v1083
    %v2319 = vunpack.c.l.b16 %v1084
    %v2320 = vunpack.c.h.b16 %v1084
    %v2321 = vunpack.c.l.b16 %v1085
    %v2322 = vunpack.c.l.b16 %v1086
    %v2323 = vunpack.c.h.b16 %v1086
    %v2324 = vunpack.c.l.b16 %v1087
    %v2325 = vunpack.c.h.b16 %v1087
    %v2326 = vunpack.c.l.b16 %v1088
    %v2327 = vunpack.c.h.b16 %v1088
    %v2328 = vunpack.c.l.b16 %v1089
    %v2329 = vunpack.c.l.b16 %v1090
    %v2330 = vunpack.c.h.b16 %v1090
    %v2331 = vunpack.c.l.b16 %v1091
    %v2332 = vunpack.c.h.b16 %v1091
    %v2333 = vunpack.c.l.b16 %v1092
    %v2334 = vunpack.c.h.b16 %v1092
    %v2335 = vunpack.c.l.b16 %v1093
    %v2336 = vunpack.c.l.b16 %v1094
    %v2337 = vunpack.c.h.b16 %v1094
    %v2338 = vunpack.c.l.b16 %v1095
    %v2339 = vunpack.c.h.b16 %v1095
    %v2340 = vunpack.c.l.b16 %v1096
    %v2341 = vunpack.c.h.b16 %v1096
    %v2342 = vunpack.c.l.b16 %v1097
    %v2343 = vunpack.c.l.b16 %v1098
    %v2344 = vunpack.c.h.b16 %v1098
    %v2345 = vunpack.c.l.b16 %v1099
    %v2346 = vunpack.c.h.b16 %v1099
    %v2347 = vunpack.c.l.b16 %v1100
    %v2348 = vunpack.c.h.b16 %v1100
    %v2349 = vunpack.c.l.b16 %v1101
    %v2350 = vunpack.c.l.b16 %v1102
    %v2351 = vunpack.c.h.b16 %v1102
    %v2352 = vunpack.c.l.b16 %v1103
    %v2353 = vunpack.c.h.b16 %v1103
    %v2354 = vunpack.c.l.b16 %v1104
    %v2355 = vunpack.c.h.b16 %v1104
    %v2356 = vunpack.c.l.b16 %v1105
    %v2357 = vunpack.c.l.b16 %v1106
    %v2358 = vunpack.c.h.b16 %v1106
    %v2359 = vunpack.c.l.b16 %v1107
    %v2360 = vunpack.c.h.b16 %v1107
    %v2361 = vunpack.c.l.b16 %v1108
    %v2362 = vunpack.c.h.b16 %v1108
    %v2363 = vunpack.c.l.b16 %v1109
    %v2364 = vunpack.c.l.b16 %v1110
    %v2365 = vunpack.c.h.b16 %v1110
    %v2366 = vunpack.c.l.b16 %v1111
    %v2367 = vunpack.c.h.b16 %v1111
    %v2368 = vunpack.c.l.b16 %v1112
    %v2369 = vunpack.c.h.b16 %v1112
    %v2370 = vunpack.c.l.b16 %v1113
    %v2371 = vunpack.c.l.b16 %v1114
    %v2372 = vunpack.c.h.b16 %v1114
    %v2373 = vunpack.c.l.b16 %v1115
    %v2374 = vunpack.c.h.b16 %v1115
    %v2375 = vunpack.c.l.b16 %v1116
    %v2376 = vunpack.c.h.b16 %v1116
    %v2377 = vunpack.c.l.b16 %v1117
    %v2378 = vunpack.c.l.b16 %v1118
    %v2379 = vunpack.c.h.b16 %v1118
    %v2380 = vunpack.c.l.b16 %v1119
    %v2381 = vunpack.c.h.b16 %v1119
    %v2382 = vunpack.c.l.b16 %v1120
    %v2383 = vunpack.c.h.b16 %v1120
    %v2384 = vunpack.c.l.b16 %v1121
    %v2385 = vunpack.c.l.b16 %v1122
    %v2386 = vunpack.c.h.b16 %v1122
    %v2387 = vunpack.c.l.b16 %v1123
    %v2388 = vunpack.c.h.b16 %v1123
    %v2389 = vunpack.c.l.b16 %v1124
    %v2390 = vunpack.c.h.b16 %v1124
    %v2391 = vunpack.c.l.b16 %v1125
    %v2392 = vunpack.c.l.b16 %v1126
    %v2393 = vunpack.c.h.b16 %v1126
    %v2394 = vunpack.c.l.b16 %v1127
    %v2395 = vunpack.c.h.b16 %v1127
    %v2396 = vunpack.c.l.b16 %v1128
    %v2397 = vunpack.c.h.b16 %v1128
    %v2398 = vunpack.c.l.b16 %v1129
    %v2399 = vpack.c.b16 %v1622, %v1615
    %v2400 = vpack.c.b16 %v1623, %v1616
    %v2401 = vpack.c.b16 %v1624, %v1617
    %v2402 = vpack.c.b16 %v1625, %v1618
    %v2403 = vpack.c.b16 %v1626, %v1619
    %v2404 = vpack.c.b16 %v1627, %v1620
    %v2405 = vpack.c.b16 %v1628, %v1621
    %v2406 = vpack.c.b16 %v1636, %v1629
    %v2407 = vpack.c.b16 %v1637, %v1630
    %v2408 = vpack.c.b16 %v1638, %v1631
    %v2409 = vpack.c.b16 %v1639, %v1632
    %v2410 = vpack.c.b16 %v1640, %v1633
    %v2411 = vpack.c.b16 %v1641, %v1634
    %v2412 = vpack.c.b16 %v1642, %v1635
    %v2413 = vpack.c.b16 %v1650, %v1643
    %v2414 = vpack.c.b16 %v1651, %v1644
    %v2415 = vpack.c.b16 %v1652, %v1645
    %v2416 = vpack.c.b16 %v1653, %v1646
    %v2417 = vpack.c.b16 %v1654, %v1647
    %v2418 = vpack.c.b16 %v1655, %v1648
    %v2419 = vpack.c.b16 %v1656, %v1649
    %v2420 = vpack.c.b16 %v1664, %v1657
    %v2421 = vpack.c.b16 %v1665, %v1658
    %v2422 = vpack.c.b16 %v1666, %v1659
    %v2423 = vpack.c.b16 %v1667, %v1660
    %v2424 = vpack.c.b16 %v1668, %v1661
    %v2425 = vpack.c.b16 %v1669, %v1662
    %v2426 = vpack.c.b16 %v1670, %v1663
    %v2427 = vpack.c.b16 %v1678, %v1671
    %v2428 = vpack.c.b16 %v1679, %v1672
    %v2429 = vpack.c.b16 %v1680, %v1673
    %v2430 = vpack.c.b16 %v1681, %v1674
    %v2431 = vpack.c.b16 %v1682, %v1675
    %v2432 = vpack.c.b16 %v1683, %v1676
    %v2433 = vpack.c.b16 %v1684, %v1677
    %v2434 = vpack.c.b16 %v1692, %v1685
    %v2435 = vpack.c.b16 %v1693, %v1686
    %v2436 = vpack.c.b16 %v1694, %v1687
    %v2437 = vpack.c.b16 %v1695, %v1688
    %v2438 = vpack.c.b16 %v1696, %v1689
    %v2439 = vpack.c.b16 %v1697, %v1690
    %v2440 = vpack.c.b16 %v1698, %v1691
    %v2441 = vpack.c.b16 %v1706, %v1699
    %v2442 = vpack.c.b16 %v1707, %v1700
    %v2443 = vpack.c.b16 %v1708, %v1701
    %v2444 = vpack.c.b16 %v1709, %v1702
    %v2445 = vpack.c.b16 %v1710, %v1703
    %v2446 = vpack.c.b16 %v1711, %v1704
    %v2447 = vpack.c.b16 %v1712, %v1705
    %v2448 = vpack.c.b16 %v1720, %v1713
    %v2449 = vpack.c.b16 %v1721, %v1714
    %v2450 = vpack.c.b16 %v1722, %v1715
    %v2451 = vpack.c.b16 %v1723, %v1716
    %v2452 = vpack.c.b16 %v1724, %v1717
    %v2453 = vpack.c.b16 %v1725, %v1718
    %v2454 = vpack.c.b16 %v1726, %v1719
    %v2455 = vpack.c.b16 %v1734, %v1727
    %v2456 = vpack.c.b16 %v1735, %v1728
    %v2457 = vpack.c.b16 %v1736, %v1729
    %v2458 = vpack.c.b16 %v1737, %v1730
    %v2459 = vpack.c.b16 %v1738, %v1731
    %v2460 = vpack.c.b16 %v1739, %v1732
    %v2461 = vpack.c.b16 %v1740, %v1733
    %v2462 = vpack.c.b16 %v1748, %v1741
    %v2463 = vpack.c.b16 %v1749, %v1742
    %v2464 = vpack.c.b16 %v1750, %v1743
    %v2465 = vpack.c.b16 %v1751, %v1744
    %v2466 = vpack.c.b16 %v1752, %v1745
    %v2467 = vpack.c.b16 %v1753, %v1746
    %v2468 = vpack.c.b16 %v1754, %v1747
    %v2469 = vpack.c.b16 %v1762, %v1755
    %v2470 = vpack.c.b16 %v1763, %v1756
    %v2471 = vpack.c.b16 %v1764, %v1757
    %v2472 = vpack.c.b16 %v1765, %v1758
    %v2473 = vpack.c.b16 %v1766, %v1759
    %v2474 = vpack.c.b16 %v1767, %v1760
    %v2475 = vpack.c.b16 %v1768, %v1761
    %v2476 = vpack.c.b16 %v1776, %v1769
    %v2477 = vpack.c.b16 %v1777, %v1770
    %v2478 = vpack.c.b16 %v1778, %v1771
    %v2479 = vpack.c.b16 %v1779, %v1772
    %v2480 = vpack.c.b16 %v1780, %v1773
    %v2481 = vpack.c.b16 %v1781, %v1774
    %v2482 = vpack.c.b16 %v1782, %v1775
    %v2483 = vpack.c.b16 %v1790, %v1783
    %v2484 = vpack.c.b16 %v1791, %v1784
    %v2485 = vpack.c.b16 %v1792, %v1785
    %v2486 = vpack.c.b16 %v1793, %v1786
    %v2487 = vpack.c.b16 %v1794, %v1787
    %v2488 = vpack.c.b16 %v1795, %v1788
    %v2489 = vpack.c.b16 %v1796, %v1789
    %v2490 = vpack.c.b16 %v1804, %v1797
    %v2491 = vpack.c.b16 %v1805, %v1798
    %v2492 = vpack.c.b16 %v1806, %v1799
    %v2493 = vpack.c.b16 %v1807, %v1800
    %v2494 = vpack.c.b16 %v1808, %v1801
    %v2495 = vpack.c.b16 %v1809, %v1802
    %v2496 = vpack.c.b16 %v1810, %v1803
    %v2497 = vpack.c.b16 %v1818, %v1811
    %v2498 = vpack.c.b16 %v1819, %v1812
    %v2499 = vpack.c.b16 %v1820, %v1813
    %v2500 = vpack.c.b16 %v1821, %v1814
    %v2501 = vpack.c.b16 %v1822, %v1815
    %v2502 = vpack.c.b16 %v1823, %v1816
    %v2503 = vpack.c.b16 %v1824, %v1817
    %v2504 = vpack.c.b16 %v1832, %v1825
    %v2505 = vpack.c.b16 %v1833, %v1826
    %v2506 = vpack.c.b16 %v1834, %v1827
    %v2507 = vpack.c.b16 %v1835, %v1828
    %v2508 = vpack.c.b16 %v1836, %v1829
    %v2509 = vpack.c.b16 %v1837, %v1830
    %v2510 = vpack.c.b16 %v1838, %v1831
    %v2511 = vpack.c.b16 %v1846, %v1839
    %v2512 = vpack.c.b16 %v1847, %v1840
    %v2513 = vpack.c.b16 %v1848, %v1841
    %v2514 = vpack.c.b16 %v1849, %v1842
    %v2515 = vpack.c.b16 %v1850, %v1843
    %v2516 = vpack.c.b16 %v1851, %v1844
    %v2517 = vpack.c.b16 %v1852, %v1845
    %v2518 = vpack.c.b16 %v1860, %v1853
    %v2519 = vpack.c.b16 %v1861, %v1854
    %v2520 = vpack.c.b16 %v1862, %v1855
    %v2521 = vpack.c.b16 %v1863, %v1856
    %v2522 = vpack.c.b16 %v1864, %v1857
    %v2523 = vpack.c.b16 %v1865, %v1858
    %v2524 = vpack.c.b16 %v1866, %v1859
    %v2525 = vpack.c.b16 %v1874, %v1867
    %v2526 = vpack.c.b16 %v1875, %v1868
    %v2527 = vpack.c.b16 %v1876, %v1869
    %v2528 = vpack.c.b16 %v1877, %v1870
    %v2529 = vpack.c.b16 %v1878, %v1871
    %v2530 = vpack.c.b16 %v1879, %v1872
    %v2531 = vpack.c.b16 %v1880, %v1873
    %v2532 = vpack.c.b16 %v1888, %v1881
    %v2533 = vpack.c.b16 %v1889, %v1882
    %v2534 = vpack.c.b16 %v1890, %v1883
    %v2535 = vpack.c.b16 %v1891, %v1884
    %v2536 = vpack.c.b16 %v1892, %v1885
    %v2537 = vpack.c.b16 %v1893, %v1886
    %v2538 = vpack.c.b16 %v1894, %v1887
    %v2539 = vpack.c.b16 %v1902, %v1895
    %v2540 = vpack.c.b16 %v1903, %v1896
    %v2541 = vpack.c.b16 %v1904, %v1897
    %v2542 = vpack.c.b16 %v1905, %v1898
    %v2543 = vpack.c.b16 %v1906, %v1899
    %v2544 = vpack.c.b16 %v1907, %v1900
    %v2545 = vpack.c.b16 %v1908, %v1901
    %v2546 = vpack.c.b16 %v1916, %v1909
    %v2547 = vpack.c.b16 %v1917, %v1910
    %v2548 = vpack.c.b16 %v1918, %v1911
    %v2549 = vpack.c.b16 %v1919, %v1912
    %v2550 = vpack.c.b16 %v1920, %v1913
    %v2551 = vpack.c.b16 %v1921, %v1914
    %v2552 = vpack.c.b16 %v1922, %v1915
    %v2553 = vpack.c.b16 %v1930, %v1923
    %v2554 = vpack.c.b16 %v1931, %v1924
    %v2555 = vpack.c.b16 %v1932, %v1925
    %v2556 = vpack.c.b16 %v1933, %v1926
    %v2557 = vpack.c.b16 %v1934, %v1927
    %v2558 = vpack.c.b16 %v1935, %v1928
    %v2559 = vpack.c.b16 %v1936, %v1929
    %v2560 = vpack.c.b16 %v1944, %v1937
    %v2561 = vpack.c.b16 %v1945, %v1938
    %v2562 = vpack.c.b16 %v1946, %v1939
    %v2563 = vpack.c.b16 %v1947, %v1940
    %v2564 = vpack.c.b16 %v1948, %v1941
    %v2565 = vpack.c.b16 %v1949, %v1942
    %v2566 = vpack.c.b16 %v1950, %v1943
    %v2567 = vpack.c.b16 %v1958, %v1951
    %v2568 = vpack.c.b16 %v1959, %v1952
    %v2569 = vpack.c.b16 %v1960, %v1953
    %v2570 = vpack.c.b16 %v1961, %v1954
    %v2571 = vpack.c.b16 %v1962, %v1955
    %v2572 = vpack.c.b16 %v1963, %v1956
    %v2573 = vpack.c.b16 %v1964, %v1957
    %v2574 = vpack.c.b16 %v1972, %v1965
    %v2575 = vpack.c.b16 %v1973, %v1966
    %v2576 = vpack.c.b16 %v1974, %v1967
    %v2577 = vpack.c.b16 %v1975, %v1968
    %v2578 = vpack.c.b16 %v1976, %v1969
    %v2579 = vpack.c.b16 %v1977, %v1970
    %v2580 = vpack.c.b16 %v1978, %v1971
    %v2581 = vpack.c.b16 %v1986, %v1979
    %v2582 = vpack.c.b16 %v1987, %v1980
    %v2583 = vpack.c.b16 %v1988, %v1981
    %v2584 = vpack.c.b16 %v1989, %v1982
    %v2585 = vpack.c.b16 %v1990, %v1983
    %v2586 = vpack.c.b16 %v1991, %v1984
    %v2587 = vpack.c.b16 %v1992, %v1985
    %v2588 = vpack.c.b16 %v2000, %v1993
    %v2589 = vpack.c.b16 %v2001, %v1994
    %v2590 = vpack.c.b16 %v2002, %v1995
    %v2591 = vpack.c.b16 %v2003, %v1996
    %v2592 = vpack.c.b16 %v2004, %v1997
    %v2593 = vpack.c.b16 %v2005, %v1998
    %v2594 = vpack.c.b16 %v2006, %v1999
    %v2595 = vpack.c.b16 %v2014, %v2007
    %v2596 = vpack.c.b16 %v2015, %v2008
    %v2597 = vpack.c.b16 %v2016, %v2009
    %v2598 = vpack.c.b16 %v2017, %v2010
    %v2599 = vpack.c.b16 %v2018, %v2011
    %v2600 = vpack.c.b16 %v2019, %v2012
    %v2601 = vpack.c.b16 %v2020, %v2013
    %v2602 = vpack.c.b16 %v2028, %v2021
    %v2603 = vpack.c.b16 %v2029, %v2022
    %v2604 = vpack.c.b16 %v2030, %v2023
    %v2605 = vpack.c.b16 %v2031, %v2024
    %v2606 = vpack.c.b16 %v2032, %v2025
    %v2607 = vpack.c.b16 %v2033, %v2026
    %v2608 = vpack.c.b16 %v2034, %v2027
    %v2609 = vpack.c.b16 %v2042, %v2035
    %v2610 = vpack.c.b16 %v2043, %v2036
    %v2611 = vpack.c.b16 %v2044, %v2037
    %v2612 = vpack.c.b16 %v2045, %v2038
    %v2613 = vpack.c.b16 %v2046, %v2039
    %v2614 = vpack.c.b16 %v2047, %v2040
    %v2615 = vpack.c.b16 %v2048, %v2041
    %v2616 = vpack.c.b16 %v2056, %v2049
    %v2617 = vpack.c.b16 %v2057, %v2050
    %v2618 = vpack.c.b16 %v2058, %v2051
    %v2619 = vpack.c.b16 %v2059, %v2052
    %v2620 = vpack.c.b16 %v2060, %v2053
    %v2621 = vpack.c.b16 %v2061, %v2054
    %v2622 = vpack.c.b16 %v2062, %v2055
    %v2623 = vpack.c.b16 %v2070, %v2063
    %v2624 = vpack.c.b16 %v2071, %v2064
    %v2625 = vpack.c.b16 %v2072, %v2065
    %v2626 = vpack.c.b16 %v2073, %v2066
    %v2627 = vpack.c.b16 %v2074, %v2067
    %v2628 = vpack.c.b16 %v2075, %v2068
    %v2629 = vpack.c.b16 %v2076, %v2069
    %v2630 = vpack.c.b16 %v2084, %v2077
    %v2631 = vpack.c.b16 %v2085, %v2078
    %v2632 = vpack.c.b16 %v2086, %v2079
    %v2633 = vpack.c.b16 %v2087, %v2080
    %v2634 = vpack.c.b16 %v2088, %v2081
    %v2635 = vpack.c.b16 %v2089, %v2082
    %v2636 = vpack.c.b16 %v2090, %v2083
    %v2637 = vpack.c.b16 %v2098, %v2091
    %v2638 = vpack.c.b16 %v2099, %v2092
    %v2639 = vpack.c.b16 %v2100, %v2093
    %v2640 = vpack.c.b16 %v2101, %v2094
    %v2641 = vpack.c.b16 %v2102, %v2095
    %v2642 = vpack.c.b16 %v2103, %v2096
    %v2643 = vpack.c.b16 %v2104, %v2097
    %v2644 = vpack.c.b16 %v2112, %v2105
    %v2645 = vpack.c.b16 %v2113, %v2106
    %v2646 = vpack.c.b16 %v2114, %v2107
    %v2647 = vpack.c.b16 %v2115, %v2108
    %v2648 = vpack.c.b16 %v2116, %v2109
    %v2649 = vpack.c.b16 %v2117, %v2110
    %v2650 = vpack.c.b16 %v2118, %v2111
    %v2651 = vpack.c.b16 %v2126, %v2119
    %v2652 = vpack.c.b16 %v2127, %v2120
    %v2653 = vpack.c.b16 %v2128, %v2121
    %v2654 = vpack.c.b16 %v2129, %v2122
    %v2655 = vpack.c.b16 %v2130, %v2123
    %v2656 = vpack.c.b16 %v2131, %v2124
    %v2657 = vpack.c.b16 %v2132, %v2125
    %v2658 = vpack.c.b16 %v2140, %v2133
    %v2659 = vpack.c.b16 %v2141, %v2134
    %v2660 = vpack.c.b16 %v2142, %v2135
    %v2661 = vpack.c.b16 %v2143, %v2136
    %v2662 = vpack.c.b16 %v2144, %v2137
    %v2663 = vpack.c.b16 %v2145, %v2138
    %v2664 = vpack.c.b16 %v2146, %v2139
    %v2665 = vpack.c.b16 %v2154, %v2147
    %v2666 = vpack.c.b16 %v2155, %v2148
    %v2667 = vpack.c.b16 %v2156, %v2149
    %v2668 = vpack.c.b16 %v2157, %v2150
    %v2669 = vpack.c.b16 %v2158, %v2151
    %v2670 = vpack.c.b16 %v2159, %v2152
    %v2671 = vpack.c.b16 %v2160, %v2153
    %v2672 = vpack.c.b16 %v2168, %v2161
    %v2673 = vpack.c.b16 %v2169, %v2162
    %v2674 = vpack.c.b16 %v2170, %v2163
    %v2675 = vpack.c.b16 %v2171, %v2164
    %v2676 = vpack.c.b16 %v2172, %v2165
    %v2677 = vpack.c.b16 %v2173, %v2166
    %v2678 = vpack.c.b16 %v2174, %v2167
    %v2679 = vpack.c.b16 %v2182, %v2175
    %v2680 = vpack.c.b16 %v2183, %v2176
    %v2681 = vpack.c.b16 %v2184, %v2177
    %v2682 = vpack.c.b16 %v2185, %v2178
    %v2683 = vpack.c.b16 %v2186, %v2179
    %v2684 = vpack.c.b16 %v2187, %v2180
    %v2685 = vpack.c.b16 %v2188, %v2181
    %v2686 = vpack.c.b16 %v2196, %v2189
    %v2687 = vpack.c.b16 %v2197, %v2190
    %v2688 = vpack.c.b16 %v2198, %v2191
    %v2689 = vpack.c.b16 %v2199, %v2192
    %v2690 = vpack.c.b16 %v2200, %v2193
    %v2691 = vpack.c.b16 %v2201, %v2194
    %v2692 = vpack.c.b16 %v2202, %v2195
    %v2693 = vpack.c.b16 %v2210, %v2203
    %v2694 = vpack.c.b16 %v2211, %v2204
    %v2695 = vpack.c.b16 %v2212, %v2205
    %v2696 = vpack.c.b16 %v2213, %v2206
    %v2697 = vpack.c.b16 %v2214, %v2207
    %v2698 = vpack.c.b16 %v2215, %v2208
    %v2699 = vpack.c.b16 %v2216, %v2209
    %v2700 = vpack.c.b16 %v2224, %v2217
    %v2701 = vpack.c.b16 %v2225, %v2218
    %v2702 = vpack.c.b16 %v2226, %v2219
    %v2703 = vpack.c.b16 %v2227, %v2220
    %v2704 = vpack.c.b16 %v2228, %v2221
    %v2705 = vpack.c.b16 %v2229, %v2222
    %v2706 = vpack.c.b16 %v2230, %v2223
    %v2707 = vpack.c.b16 %v2238, %v2231
    %v2708 = vpack.c.b16 %v2239, %v2232
    %v2709 = vpack.c.b16 %v2240, %v2233
    %v2710 = vpack.c.b16 %v2241, %v2234
    %v2711 = vpack.c.b16 %v2242, %v2235
    %v2712 = vpack.c.b16 %v2243, %v2236
    %v2713 = vpack.c.b16 %v2244, %v2237
    %v2714 = vpack.c.b16 %v2252, %v2245
    %v2715 = vpack.c.b16 %v2253, %v2246
    %v2716 = vpack.c.b16 %v2254, %v2247
    %v2717 = vpack.c.b16 %v2255, %v2248
    %v2718 = vpack.c.b16 %v2256, %v2249
    %v2719 = vpack.c.b16 %v2257, %v2250
    %v2720 = vpack.c.b16 %v2258, %v2251
    %v2721 = vpack.c.b16 %v2266, %v2259
    %v2722 = vpack.c.b16 %v2267, %v2260
    %v2723 = vpack.c.b16 %v2268, %v2261
    %v2724 = vpack.c.b16 %v2269, %v2262
    %v2725 = vpack.c.b16 %v2270, %v2263
    %v2726 = vpack.c.b16 %v2271, %v2264
    %v2727 = vpack.c.b16 %v2272, %v2265
    %v2728 = vpack.c.b16 %v2280, %v2273
    %v2729 = vpack.c.b16 %v2281, %v2274
    %v2730 = vpack.c.b16 %v2282, %v2275
    %v2731 = vpack.c.b16 %v2283, %v2276
    %v2732 = vpack.c.b16 %v2284, %v2277
    %v2733 = vpack.c.b16 %v2285, %v2278
    %v2734 = vpack.c.b16 %v2286, %v2279
    %v2735 = vpack.c.b16 %v2294, %v2287
    %v2736 = vpack.c.b16 %v2295, %v2288
    %v2737 = vpack.c.b16 %v2296, %v2289
    %v2738 = vpack.c.b16 %v2297, %v2290
    %v2739 = vpack.c.b16 %v2298, %v2291
    %v2740 = vpack.c.b16 %v2299, %v2292
    %v2741 = vpack.c.b16 %v2300, %v2293
    %v2742 = vpack.c.b16 %v2308, %v2301
    %v2743 = vpack.c.b16 %v2309, %v2302
    %v2744 = vpack.c.b16 %v2310, %v2303
    %v2745 = vpack.c.b16 %v2311, %v2304
    %v2746 = vpack.c.b16 %v2312, %v2305
    %v2747 = vpack.c.b16 %v2313, %v2306
    %v2748 = vpack.c.b16 %v2314, %v2307
    %v2749 = vpack.c.b16 %v2322, %v2315
    %v2750 = vpack.c.b16 %v2323, %v2316
    %v2751 = vpack.c.b16 %v2324, %v2317
    %v2752 = vpack.c.b16 %v2325, %v2318
    %v2753 = vpack.c.b16 %v2326, %v2319
    %v2754 = vpack.c.b16 %v2327, %v2320
    %v2755 = vpack.c.b16 %v2328, %v2321
    %v2756 = vpack.c.b16 %v2336, %v2329
    %v2757 = vpack.c.b16 %v2337, %v2330
    %v2758 = vpack.c.b16 %v2338, %v2331
    %v2759 = vpack.c.b16 %v2339, %v2332
    %v2760 = vpack.c.b16 %v2340, %v2333
    %v2761 = vpack.c.b16 %v2341, %v2334
    %v2762 = vpack.c.b16 %v2342, %v2335
    %v2763 = vpack.c.b16 %v2350, %v2343
    %v2764 = vpack.c.b16 %v2351, %v2344
    %v2765 = vpack.c.b16 %v2352, %v2345
    %v2766 = vpack.c.b16 %v2353, %v2346
    %v2767 = vpack.c.b16 %v2354, %v2347
    %v2768 = vpack.c.b16 %v2355, %v2348
    %v2769 = vpack.c.b16 %v2356, %v2349
    %v2770 = vpack.c.b16 %v2364, %v2357
    %v2771 = vpack.c.b16 %v2365, %v2358
    %v2772 = vpack.c.b16 %v2366, %v2359
    %v2773 = vpack.c.b16 %v2367, %v2360
    %v2774 = vpack.c.b16 %v2368, %v2361
    %v2775 = vpack.c.b16 %v2369, %v2362
    %v2776 = vpack.c.b16 %v2370, %v2363
    %v2777 = vpack.c.b16 %v2378, %v2371
    %v2778 = vpack.c.b16 %v2379, %v2372
    %v2779 = vpack.c.b16 %v2380, %v2373
    %v2780 = vpack.c.b16 %v2381, %v2374
    %v2781 = vpack.c.b16 %v2382, %v2375
    %v2782 = vpack.c.b16 %v2383, %v2376
    %v2783 = vpack.c.b16 %v2384, %v2377
    %v2784 = vpack.c.b16 %v2392, %v2385
    %v2785 = vpack.c.b16 %v2393, %v2386
    %v2786 = vpack.c.b16 %v2394, %v2387
    %v2787 = vpack.c.b16 %v2395, %v2388
    %v2788 = vpack.c.b16 %v2396, %v2389
    %v2789 = vpack.c.b16 %v2397, %v2390
    %v2790 = vpack.c.b16 %v2398, %v2391
    %3183 = vmatprep.subr.bf16.mxu0 %v2400
    %3184 = vmatpush1.bf16.msra.mxu0 %v2399
    %3185 = vmatprep.subr.bf16.mxu0 %v2407
    %3186 = vmatpush1.bf16.msra.mxu0 %v2406
    %3187 = vmatprep.subr.bf16.mxu0 %v2414
    %3188 = vmatpush1.bf16.msra.mxu0 %v2413
    %3189 = vmatprep.subr.bf16.mxu0 %v2421
    %3190 = vmatpush1.bf16.msra.mxu0 %v2420
    %3191 = vmatprep.subr.bf16.mxu0 %v2428
    %3192 = vmatpush1.bf16.msra.mxu0 %v2427
    %3193 = vmatprep.subr.bf16.mxu0 %v2435
    %3194 = vmatpush1.bf16.msra.mxu0 %v2434
    %3195 = vmatprep.subr.bf16.mxu0 %v2442
    %3196 = vmatpush1.bf16.msra.mxu0 %v2441
    %3197 = vmatprep.subr.bf16.mxu0 %v2449
    %3198 = vmatpush1.bf16.msra.mxu0 %v2448
    %3199 = vmatprep.subr.bf16.mxu0 %v2456
    %3200 = vmatpush1.bf16.msra.mxu0 %v2455
    %3201 = vmatprep.subr.bf16.mxu0 %v2463
    %3202 = vmatpush1.bf16.msra.mxu0 %v2462
    %3203 = vmatprep.subr.bf16.mxu0 %v2470
    %3204 = vmatpush1.bf16.msra.mxu0 %v2469
    %3205 = vmatprep.subr.bf16.mxu0 %v2477
    %3206 = vmatpush1.bf16.msra.mxu0 %v2476
    %3207 = vmatprep.subr.bf16.mxu0 %v2484
    %3208 = vmatpush1.bf16.msra.mxu0 %v2483
    %3209 = vmatprep.subr.bf16.mxu0 %v2491
    %3210 = vmatpush1.bf16.msra.mxu0 %v2490
    %3211 = vmatprep.subr.bf16.mxu0 %v2498
    %3212 = vmatpush1.bf16.msra.mxu0 %v2497
    %3213 = vmatprep.subr.bf16.mxu0 %v2505
    %3214 = vmatpush1.bf16.msra.mxu0 %v2504
    %3215 = vmatprep.mubr.bf16.mxu0 %v676
    %3216 = vmatmul.mubr.bf16.gmra.mrb[0].mxu0 %v675
    %v3217 = vpop.f32.mrb[0].mxu0
    %v3218 = vadd.f32 %v1135, %v3217
    %v3219 = vpop.f32.mrb[0].mxu0
    %v3220 = vadd.f32 %v1139, %v3219
    %v3221 = vpop.f32.mrb[0].mxu0
    %v3222 = vpop.f32.mrb[0].mxu0
    %3223 = vdwg.mxu0
    %3224 = vmatprep.subr.bf16.mxu0 %v2512
    %3225 = vmatpush1.bf16.msra.mxu0 %v2511
    %3226 = vmatprep.subr.bf16.mxu0 %v2519
    %3227 = vmatpush1.bf16.msra.mxu0 %v2518
    %3228 = vmatprep.subr.bf16.mxu0 %v2526
    %3229 = vmatpush1.bf16.msra.mxu0 %v2525
    %3230 = vmatprep.subr.bf16.mxu0 %v2533
    %3231 = vmatpush1.bf16.msra.mxu0 %v2532
    %3232 = vmatprep.subr.bf16.mxu0 %v2540
    %3233 = vmatpush1.bf16.msra.mxu0 %v2539
    %3234 = vmatprep.subr.bf16.mxu0 %v2547
    %3235 = vmatpush1.bf16.msra.mxu0 %v2546
    %3236 = vmatprep.subr.bf16.mxu0 %v2554
    %3237 = vmatpush1.bf16.msra.mxu0 %v2553
    %3238 = vmatprep.subr.bf16.mxu0 %v2561
    %3239 = vmatpush1.bf16.msra.mxu0 %v2560
    %3240 = vmatprep.subr.bf16.mxu0 %v2568
    %3241 = vmatpush1.bf16.msra.mxu0 %v2567
    %3242 = vmatprep.subr.bf16.mxu0 %v2575
    %3243 = vmatpush1.bf16.msra.mxu0 %v2574
    %3244 = vmatprep.subr.bf16.mxu0 %v2582
    %3245 = vmatpush1.bf16.msra.mxu0 %v2581
    %3246 = vmatprep.subr.bf16.mxu0 %v2589
    %3247 = vmatpush1.bf16.msra.mxu0 %v2588
    %3248 = vmatprep.subr.bf16.mxu0 %v2596
    %3249 = vmatpush1.bf16.msra.mxu0 %v2595
    %3250 = vmatprep.subr.bf16.mxu0 %v2603
    %3251 = vmatpush1.bf16.msra.mxu0 %v2602
    %3252 = vmatprep.subr.bf16.mxu0 %v2610
    %3253 = vmatpush1.bf16.msra.mxu0 %v2609
    %3254 = vmatprep.subr.bf16.mxu0 %v2617
    %3255 = vmatpush1.bf16.msra.mxu0 %v2616
    %3256 = vmatprep.mubr.bf16.mxu0 %v678
    %3257 = vmatmul.mubr.bf16.gmra.mrb[0].mxu0 %v677
    %v3258 = vpop.f32.mrb[0].mxu0
    %v3259 = vadd.f32 %v3218, %v3258
    %v3260 = vpop.f32.mrb[0].mxu0
    %v3261 = vadd.f32 %v3220, %v3260
    %v3262 = vpop.f32.mrb[0].mxu0
    %v3263 = vpop.f32.mrb[0].mxu0
    %3264 = vdwg.mxu0
    %3265 = vmatprep.subr.bf16.mxu0 %v2624
    %3266 = vmatpush1.bf16.msra.mxu0 %v2623
    %3267 = vmatprep.subr.bf16.mxu0 %v2631
    %3268 = vmatpush1.bf16.msra.mxu0 %v2630
    %3269 = vmatprep.subr.bf16.mxu0 %v2638
    %3270 = vmatpush1.bf16.msra.mxu0 %v2637
    %3271 = vmatprep.subr.bf16.mxu0 %v2645
    %3272 = vmatpush1.bf16.msra.mxu0 %v2644
    %3273 = vmatprep.subr.bf16.mxu0 %v2652
    %3274 = vmatpush1.bf16.msra.mxu0 %v2651
    %3275 = vmatprep.subr.bf16.mxu0 %v2659
    %3276 = vmatpush1.bf16.msra.mxu0 %v2658
    %3277 = vmatprep.subr.bf16.mxu0 %v2666
    %3278 = vmatpush1.bf16.msra.mxu0 %v2665
    %3279 = vmatprep.subr.bf16.mxu0 %v2673
    %3280 = vmatpush1.bf16.msra.mxu0 %v2672
    %3281 = vmatprep.subr.bf16.mxu0 %v2680
    %3282 = vmatpush1.bf16.msra.mxu0 %v2679
    %3283 = vmatprep.subr.bf16.mxu0 %v2687
    %3284 = vmatpush1.bf16.msra.mxu0 %v2686
    %3285 = vmatprep.subr.bf16.mxu0 %v2694
    %3286 = vmatpush1.bf16.msra.mxu0 %v2693
    %3287 = vmatprep.subr.bf16.mxu0 %v2701
    %3288 = vmatpush1.bf16.msra.mxu0 %v2700
    %3289 = vmatprep.subr.bf16.mxu0 %v2708
    %3290 = vmatpush1.bf16.msra.mxu0 %v2707
    %3291 = vmatprep.subr.bf16.mxu0 %v2715
    %3292 = vmatpush1.bf16.msra.mxu0 %v2714
    %3293 = vmatprep.subr.bf16.mxu0 %v2722
    %3294 = vmatpush1.bf16.msra.mxu0 %v2721
    %3295 = vmatprep.subr.bf16.mxu0 %v2729
    %3296 = vmatpush1.bf16.msra.mxu0 %v2728
    %3297 = vmatprep.mubr.bf16.mxu0 %v680
    %3298 = vmatmul.mubr.bf16.gmra.mrb[0].mxu0 %v679
    %v3299 = vpop.f32.mrb[0].mxu0
    %v3300 = vadd.f32 %v3259, %v3299
    %v3301 = vpop.f32.mrb[0].mxu0
    %v3302 = vadd.f32 %v3261, %v3301
    %v3303 = vpop.f32.mrb[0].mxu0
    %v3304 = vpop.f32.mrb[0].mxu0
    %3305 = vdwg.mxu0
    %3306 = vmatprep.subr.bf16.mxu0 %v2736
    %3307 = vmatpush1.bf16.msra.mxu0 %v2735
    %3308 = vmatprep.subr.bf16.mxu0 %v2743
    %3309 = vmatpush1.bf16.msra.mxu0 %v2742
    %3310 = vmatprep.subr.bf16.mxu0 %v2750
    %3311 = vmatpush1.bf16.msra.mxu0 %v2749
    %3312 = vmatprep.subr.bf16.mxu0 %v2757
    %3313 = vmatpush1.bf16.msra.mxu0 %v2756
    %3314 = vmatprep.subr.bf16.mxu0 %v2764
    %3315 = vmatpush1.bf16.msra.mxu0 %v2763
    %3316 = vmatprep.subr.bf16.mxu0 %v2771
    %3317 = vmatpush1.bf16.msra.mxu0 %v2770
    %3318 = vmatprep.subr.bf16.mxu0 %v2778
    %3319 = vmatpush1.bf16.msra.mxu0 %v2777
    %3320 = vmatprep.subr.bf16.mxu0 %v2785
    %3321 = vmatpush1.bf16.msra.mxu0 %v2784
    %3322 = vmatprep.subr.bf16.mxu0 0
    %3323 = vmatpush1.bf16.msra.mxu0 0
    %3324 = vmatprep.subr.bf16.mxu0 0
    %3325 = vmatpush1.bf16.msra.mxu0 0
    %3326 = vmatprep.subr.bf16.mxu0 0
    %3327 = vmatpush1.bf16.msra.mxu0 0
    %3328 = vmatprep.subr.bf16.mxu0 0
    %3329 = vmatpush1.bf16.msra.mxu0 0
    %3330 = vmatprep.subr.bf16.mxu0 0
    %3331 = vmatpush1.bf16.msra.mxu0 0
    %3332 = vmatprep.subr.bf16.mxu0 0
    %3333 = vmatpush1.bf16.msra.mxu0 0
    %3334 = vmatprep.subr.bf16.mxu0 0
    %3335 = vmatpush1.bf16.msra.mxu0 0
    %3336 = vmatprep.subr.bf16.mxu0 0
    %3337 = vmatpush1.bf16.msra.mxu0 0
    %3338 = vmatprep.mubr.bf16.mxu0 0
    %3339 = vmatmul.mubr.bf16.gmra.mrb[0].mxu0 %v681
    %v3340 = vpop.f32.mrb[0].mxu0
    %v3341 = vadd.f32 %v3300, %v3340
    %v3342 = vpop.f32.mrb[0].mxu0
    %v3343 = vadd.f32 %v3302, %v3342
    %v3344 = vpop.f32.mrb[0].mxu0
    %v3345 = vpop.f32.mrb[0].mxu0
    %3346 = vdwg.mxu0
    %3347 = vmatprep.subr.bf16.mxu0 %v2402
    %3348 = vmatpush1.bf16.msra.mxu0 %v2401
    %3349 = vmatprep.subr.bf16.mxu0 %v2409
    %3350 = vmatpush1.bf16.msra.mxu0 %v2408
    %3351 = vmatprep.subr.bf16.mxu0 %v2416
    %3352 = vmatpush1.bf16.msra.mxu0 %v2415
    %3353 = vmatprep.subr.bf16.mxu0 %v2423
    %3354 = vmatpush1.bf16.msra.mxu0 %v2422
    %3355 = vmatprep.subr.bf16.mxu0 %v2430
    %3356 = vmatpush1.bf16.msra.mxu0 %v2429
    %3357 = vmatprep.subr.bf16.mxu0 %v2437
    %3358 = vmatpush1.bf16.msra.mxu0 %v2436
    %3359 = vmatprep.subr.bf16.mxu0 %v2444
    %3360 = vmatpush1.bf16.msra.mxu0 %v2443
    %3361 = vmatprep.subr.bf16.mxu0 %v2451
    %3362 = vmatpush1.bf16.msra.mxu0 %v2450
    %3363 = vmatprep.subr.bf16.mxu0 %v2458
    %3364 = vmatpush1.bf16.msra.mxu0 %v2457
    %3365 = vmatprep.subr.bf16.mxu0 %v2465
    %3366 = vmatpush1.bf16.msra.mxu0 %v2464
    %3367 = vmatprep.subr.bf16.mxu0 %v2472
    %3368 = vmatpush1.bf16.msra.mxu0 %v2471
    %3369 = vmatprep.subr.bf16.mxu0 %v2479
    %3370 = vmatpush1.bf16.msra.mxu0 %v2478
    %3371 = vmatprep.subr.bf16.mxu0 %v2486
    %3372 = vmatpush1.bf16.msra.mxu0 %v2485
    %3373 = vmatprep.subr.bf16.mxu0 %v2493
    %3374 = vmatpush1.bf16.msra.mxu0 %v2492
    %3375 = vmatprep.subr.bf16.mxu0 %v2500
    %3376 = vmatpush1.bf16.msra.mxu0 %v2499
    %3377 = vmatprep.subr.bf16.mxu0 %v2507
    %3378 = vmatpush1.bf16.msra.mxu0 %v2506
    %3379 = vmatprep.mubr.bf16.mxu0 %v676
    %3380 = vmatmul.mubr.bf16.gmra.mrb[0].mxu0 %v675
    %v3381 = vpop.f32.mrb[0].mxu0
    %v3382 = vadd.f32 %v1143, %v3381
    %v3383 = vpop.f32.mrb[0].mxu0
    %v3384 = vadd.f32 %v1147, %v3383
    %v3385 = vpop.f32.mrb[0].mxu0
    %v3386 = vpop.f32.mrb[0].mxu0
    %3387 = vdwg.mxu0
    %3388 = vmatprep.subr.bf16.mxu0 %v2514
    %3389 = vmatpush1.bf16.msra.mxu0 %v2513
    %3390 = vmatprep.subr.bf16.mxu0 %v2521
    %3391 = vmatpush1.bf16.msra.mxu0 %v2520
    %3392 = vmatprep.subr.bf16.mxu0 %v2528
    %3393 = vmatpush1.bf16.msra.mxu0 %v2527
    %3394 = vmatprep.subr.bf16.mxu0 %v2535
    %3395 = vmatpush1.bf16.msra.mxu0 %v2534
    %3396 = vmatprep.subr.bf16.mxu0 %v2542
    %3397 = vmatpush1.bf16.msra.mxu0 %v2541
    %3398 = vmatprep.subr.bf16.mxu0 %v2549
    %3399 = vmatpush1.bf16.msra.mxu0 %v2548
    %3400 = vmatprep.subr.bf16.mxu0 %v2556
    %3401 = vmatpush1.bf16.msra.mxu0 %v2555
    %3402 = vmatprep.subr.bf16.mxu0 %v2563
    %3403 = vmatpush1.bf16.msra.mxu0 %v2562
    %3404 = vmatprep.subr.bf16.mxu0 %v2570
    %3405 = vmatpush1.bf16.msra.mxu0 %v2569
    %3406 = vmatprep.subr.bf16.mxu0 %v2577
    %3407 = vmatpush1.bf16.msra.mxu0 %v2576
    %3408 = vmatprep.subr.bf16.mxu0 %v2584
    %3409 = vmatpush1.bf16.msra.mxu0 %v2583
    %3410 = vmatprep.subr.bf16.mxu0 %v2591
    %3411 = vmatpush1.bf16.msra.mxu0 %v2590
    %3412 = vmatprep.subr.bf16.mxu0 %v2598
    %3413 = vmatpush1.bf16.msra.mxu0 %v2597
    %3414 = vmatprep.subr.bf16.mxu0 %v2605
    %3415 = vmatpush1.bf16.msra.mxu0 %v2604
    %3416 = vmatprep.subr.bf16.mxu0 %v2612
    %3417 = vmatpush1.bf16.msra.mxu0 %v2611
    %3418 = vmatprep.subr.bf16.mxu0 %v2619
    %3419 = vmatpush1.bf16.msra.mxu0 %v2618
    %3420 = vmatprep.mubr.bf16.mxu0 %v678
    %3421 = vmatmul.mubr.bf16.gmra.mrb[0].mxu0 %v677
    %v3422 = vpop.f32.mrb[0].mxu0
    %v3423 = vadd.f32 %v3382, %v3422
    %v3424 = vpop.f32.mrb[0].mxu0
    %v3425 = vadd.f32 %v3384, %v3424
    %v3426 = vpop.f32.mrb[0].mxu0
    %v3427 = vpop.f32.mrb[0].mxu0
    %3428 = vdwg.mxu0
    %3429 = vmatprep.subr.bf16.mxu0 %v2626
    %3430 = vmatpush1.bf16.msra.mxu0 %v2625
    %3431 = vmatprep.subr.bf16.mxu0 %v2633
    %3432 = vmatpush1.bf16.msra.mxu0 %v2632
    %3433 = vmatprep.subr.bf16.mxu0 %v2640
    %3434 = vmatpush1.bf16.msra.mxu0 %v2639
    %3435 = vmatprep.subr.bf16.mxu0 %v2647
    %3436 = vmatpush1.bf16.msra.mxu0 %v2646
    %3437 = vmatprep.subr.bf16.mxu0 %v2654
    %3438 = vmatpush1.bf16.msra.mxu0 %v2653
    %3439 = vmatprep.subr.bf16.mxu0 %v2661
    %3440 = vmatpush1.bf16.msra.mxu0 %v2660
    %3441 = vmatprep.subr.bf16.mxu0 %v2668
    %3442 = vmatpush1.bf16.msra.mxu0 %v2667
    %3443 = vmatprep.subr.bf16.mxu0 %v2675
    %3444 = vmatpush1.bf16.msra.mxu0 %v2674
    %3445 = vmatprep.subr.bf16.mxu0 %v2682
    %3446 = vmatpush1.bf16.msra.mxu0 %v2681
    %3447 = vmatprep.subr.bf16.mxu0 %v2689
    %3448 = vmatpush1.bf16.msra.mxu0 %v2688
    %3449 = vmatprep.subr.bf16.mxu0 %v2696
    %3450 = vmatpush1.bf16.msra.mxu0 %v2695
    %3451 = vmatprep.subr.bf16.mxu0 %v2703
    %3452 = vmatpush1.bf16.msra.mxu0 %v2702
    %3453 = vmatprep.subr.bf16.mxu0 %v2710
    %3454 = vmatpush1.bf16.msra.mxu0 %v2709
    %3455 = vmatprep.subr.bf16.mxu0 %v2717
    %3456 = vmatpush1.bf16.msra.mxu0 %v2716
    %3457 = vmatprep.subr.bf16.mxu0 %v2724
    %3458 = vmatpush1.bf16.msra.mxu0 %v2723
    %3459 = vmatprep.subr.bf16.mxu0 %v2731
    %3460 = vmatpush1.bf16.msra.mxu0 %v2730
    %3461 = vmatprep.mubr.bf16.mxu0 %v680
    %3462 = vmatmul.mubr.bf16.gmra.mrb[0].mxu0 %v679
    %v3463 = vpop.f32.mrb[0].mxu0
    %v3464 = vadd.f32 %v3423, %v3463
    %v3465 = vpop.f32.mrb[0].mxu0
    %v3466 = vadd.f32 %v3425, %v3465
    %v3467 = vpop.f32.mrb[0].mxu0
    %v3468 = vpop.f32.mrb[0].mxu0
    %3469 = vdwg.mxu0
    %3470 = vmatprep.subr.bf16.mxu0 %v2738
    %3471 = vmatpush1.bf16.msra.mxu0 %v2737
    %3472 = vmatprep.subr.bf16.mxu0 %v2745
    %3473 = vmatpush1.bf16.msra.mxu0 %v2744
    %3474 = vmatprep.subr.bf16.mxu0 %v2752
    %3475 = vmatpush1.bf16.msra.mxu0 %v2751
    %3476 = vmatprep.subr.bf16.mxu0 %v2759
    %3477 = vmatpush1.bf16.msra.mxu0 %v2758
    %3478 = vmatprep.subr.bf16.mxu0 %v2766
    %3479 = vmatpush1.bf16.msra.mxu0 %v2765
    %3480 = vmatprep.subr.bf16.mxu0 %v2773
    %3481 = vmatpush1.bf16.msra.mxu0 %v2772
    %3482 = vmatprep.subr.bf16.mxu0 %v2780
    %3483 = vmatpush1.bf16.msra.mxu0 %v2779
    %3484 = vmatprep.subr.bf16.mxu0 %v2787
    %3485 = vmatpush1.bf16.msra.mxu0 %v2786
    %3486 = vmatprep.subr.bf16.mxu0 0
    %3487 = vmatpush1.bf16.msra.mxu0 0
    %3488 = vmatprep.subr.bf16.mxu0 0
    %3489 = vmatpush1.bf16.msra.mxu0 0
    %3490 = vmatprep.subr.bf16.mxu0 0
    %3491 = vmatpush1.bf16.msra.mxu0 0
    %3492 = vmatprep.subr.bf16.mxu0 0
    %3493 = vmatpush1.bf16.msra.mxu0 0
    %3494 = vmatprep.subr.bf16.mxu0 0
    %3495 = vmatpush1.bf16.msra.mxu0 0
    %3496 = vmatprep.subr.bf16.mxu0 0
    %3497 = vmatpush1.bf16.msra.mxu0 0
    %3498 = vmatprep.subr.bf16.mxu0 0
    %3499 = vmatpush1.bf16.msra.mxu0 0
    %3500 = vmatprep.subr.bf16.mxu0 0
    %3501 = vmatpush1.bf16.msra.mxu0 0
    %3502 = vmatprep.mubr.bf16.mxu0 0
    %3503 = vmatmul.mubr.bf16.gmra.mrb[0].mxu0 %v681
    %v3504 = vpop.f32.mrb[0].mxu0
    %v3505 = vadd.f32 %v3464, %v3504
    %v3506 = vpop.f32.mrb[0].mxu0
    %v3507 = vadd.f32 %v3466, %v3506
    %v3508 = vpop.f32.mrb[0].mxu0
    %v3509 = vpop.f32.mrb[0].mxu0
    %3510 = vdwg.mxu0
    %3511 = vmatprep.subr.bf16.mxu0 %v2404
    %3512 = vmatpush1.bf16.msra.mxu0 %v2403
    %3513 = vmatprep.subr.bf16.mxu0 %v2411
    %3514 = vmatpush1.bf16.msra.mxu0 %v2410
    %3515 = vmatprep.subr.bf16.mxu0 %v2418
    %3516 = vmatpush1.bf16.msra.mxu0 %v2417
    %3517 = vmatprep.subr.bf16.mxu0 %v2425
    %3518 = vmatpush1.bf16.msra.mxu0 %v2424
    %3519 = vmatprep.subr.bf16.mxu0 %v2432
    %3520 = vmatpush1.bf16.msra.mxu0 %v2431
    %3521 = vmatprep.subr.bf16.mxu0 %v2439
    %3522 = vmatpush1.bf16.msra.mxu0 %v2438
    %3523 = vmatprep.subr.bf16.mxu0 %v2446
    %3524 = vmatpush1.bf16.msra.mxu0 %v2445
    %3525 = vmatprep.subr.bf16.mxu0 %v2453
    %3526 = vmatpush1.bf16.msra.mxu0 %v2452
    %3527 = vmatprep.subr.bf16.mxu0 %v2460
    %3528 = vmatpush1.bf16.msra.mxu0 %v2459
    %3529 = vmatprep.subr.bf16.mxu0 %v2467
    %3530 = vmatpush1.bf16.msra.mxu0 %v2466
    %3531 = vmatprep.subr.bf16.mxu0 %v2474
    %3532 = vmatpush1.bf16.msra.mxu0 %v2473
    %3533 = vmatprep.subr.bf16.mxu0 %v2481
    %3534 = vmatpush1.bf16.msra.mxu0 %v2480
    %3535 = vmatprep.subr.bf16.mxu0 %v2488
    %3536 = vmatpush1.bf16.msra.mxu0 %v2487
    %3537 = vmatprep.subr.bf16.mxu0 %v2495
    %3538 = vmatpush1.bf16.msra.mxu0 %v2494
    %3539 = vmatprep.subr.bf16.mxu0 %v2502
    %3540 = vmatpush1.bf16.msra.mxu0 %v2501
    %3541 = vmatprep.subr.bf16.mxu0 %v2509
    %3542 = vmatpush1.bf16.msra.mxu0 %v2508
    %3543 = vmatprep.mubr.bf16.mxu0 %v676
    %3544 = vmatmul.mubr.bf16.gmra.mrb[0].mxu0 %v675
    %v3545 = vpop.f32.mrb[0].mxu0
    %v3546 = vadd.f32 %v1151, %v3545
    %v3547 = vpop.f32.mrb[0].mxu0
    %v3548 = vadd.f32 %v1155, %v3547
    %v3549 = vpop.f32.mrb[0].mxu0
    %v3550 = vpop.f32.mrb[0].mxu0
    %3551 = vdwg.mxu0
    %3552 = vmatprep.subr.bf16.mxu0 %v2516
    %3553 = vmatpush1.bf16.msra.mxu0 %v2515
    %3554 = vmatprep.subr.bf16.mxu0 %v2523
    %3555 = vmatpush1.bf16.msra.mxu0 %v2522
    %3556 = vmatprep.subr.bf16.mxu0 %v2530
    %3557 = vmatpush1.bf16.msra.mxu0 %v2529
    %3558 = vmatprep.subr.bf16.mxu0 %v2537
    %3559 = vmatpush1.bf16.msra.mxu0 %v2536
    %3560 = vmatprep.subr.bf16.mxu0 %v2544
    %3561 = vmatpush1.bf16.msra.mxu0 %v2543
    %3562 = vmatprep.subr.bf16.mxu0 %v2551
    %3563 = vmatpush1.bf16.msra.mxu0 %v2550
    %3564 = vmatprep.subr.bf16.mxu0 %v2558
    %3565 = vmatpush1.bf16.msra.mxu0 %v2557
    %3566 = vmatprep.subr.bf16.mxu0 %v2565
    %3567 = vmatpush1.bf16.msra.mxu0 %v2564
    %3568 = vmatprep.subr.bf16.mxu0 %v2572
    %3569 = vmatpush1.bf16.msra.mxu0 %v2571
    %3570 = vmatprep.subr.bf16.mxu0 %v2579
    %3571 = vmatpush1.bf16.msra.mxu0 %v2578
    %3572 = vmatprep.subr.bf16.mxu0 %v2586
    %3573 = vmatpush1.bf16.msra.mxu0 %v2585
    %3574 = vmatprep.subr.bf16.mxu0 %v2593
    %3575 = vmatpush1.bf16.msra.mxu0 %v2592
    %3576 = vmatprep.subr.bf16.mxu0 %v2600
    %3577 = vmatpush1.bf16.msra.mxu0 %v2599
    %3578 = vmatprep.subr.bf16.mxu0 %v2607
    %3579 = vmatpush1.bf16.msra.mxu0 %v2606
    %3580 = vmatprep.subr.bf16.mxu0 %v2614
    %3581 = vmatpush1.bf16.msra.mxu0 %v2613
    %3582 = vmatprep.subr.bf16.mxu0 %v2621
    %3583 = vmatpush1.bf16.msra.mxu0 %v2620
    %3584 = vmatprep.mubr.bf16.mxu0 %v678
    %3585 = vmatmul.mubr.bf16.gmra.mrb[0].mxu0 %v677
    %v3586 = vpop.f32.mrb[0].mxu0
    %v3587 = vadd.f32 %v3546, %v3586
    %v3588 = vpop.f32.mrb[0].mxu0
    %v3589 = vadd.f32 %v3548, %v3588
    %v3590 = vpop.f32.mrb[0].mxu0
    %v3591 = vpop.f32.mrb[0].mxu0
    %3592 = vdwg.mxu0
    %3593 = vmatprep.subr.bf16.mxu0 %v2628
    %3594 = vmatpush1.bf16.msra.mxu0 %v2627
    %3595 = vmatprep.subr.bf16.mxu0 %v2635
    %3596 = vmatpush1.bf16.msra.mxu0 %v2634
    %3597 = vmatprep.subr.bf16.mxu0 %v2642
    %3598 = vmatpush1.bf16.msra.mxu0 %v2641
    %3599 = vmatprep.subr.bf16.mxu0 %v2649
    %3600 = vmatpush1.bf16.msra.mxu0 %v2648
    %3601 = vmatprep.subr.bf16.mxu0 %v2656
    %3602 = vmatpush1.bf16.msra.mxu0 %v2655
    %3603 = vmatprep.subr.bf16.mxu0 %v2663
    %3604 = vmatpush1.bf16.msra.mxu0 %v2662
    %3605 = vmatprep.subr.bf16.mxu0 %v2670
    %3606 = vmatpush1.bf16.msra.mxu0 %v2669
    %3607 = vmatprep.subr.bf16.mxu0 %v2677
    %3608 = vmatpush1.bf16.msra.mxu0 %v2676
    %3609 = vmatprep.subr.bf16.mxu0 %v2684
    %3610 = vmatpush1.bf16.msra.mxu0 %v2683
    %3611 = vmatprep.subr.bf16.mxu0 %v2691
    %3612 = vmatpush1.bf16.msra.mxu0 %v2690
    %3613 = vmatprep.subr.bf16.mxu0 %v2698
    %3614 = vmatpush1.bf16.msra.mxu0 %v2697
    %3615 = vmatprep.subr.bf16.mxu0 %v2705
    %3616 = vmatpush1.bf16.msra.mxu0 %v2704
    %3617 = vmatprep.subr.bf16.mxu0 %v2712
    %3618 = vmatpush1.bf16.msra.mxu0 %v2711
    %3619 = vmatprep.subr.bf16.mxu0 %v2719
    %3620 = vmatpush1.bf16.msra.mxu0 %v2718
    %3621 = vmatprep.subr.bf16.mxu0 %v2726
    %3622 = vmatpush1.bf16.msra.mxu0 %v2725
    %3623 = vmatprep.subr.bf16.mxu0 %v2733
    %3624 = vmatpush1.bf16.msra.mxu0 %v2732
    %3625 = vmatprep.mubr.bf16.mxu0 %v680
    %3626 = vmatmul.mubr.bf16.gmra.mrb[0].mxu0 %v679
    %v3627 = vpop.f32.mrb[0].mxu0
    %v3628 = vadd.f32 %v3587, %v3627
    %v3629 = vpop.f32.mrb[0].mxu0
    %v3630 = vadd.f32 %v3589, %v3629
    %v3631 = vpop.f32.mrb[0].mxu0
    %v3632 = vpop.f32.mrb[0].mxu0
    %3633 = vdwg.mxu0
    %3634 = vmatprep.subr.bf16.mxu0 %v2740
    %3635 = vmatpush1.bf16.msra.mxu0 %v2739
    %3636 = vmatprep.subr.bf16.mxu0 %v2747
    %3637 = vmatpush1.bf16.msra.mxu0 %v2746
    %3638 = vmatprep.subr.bf16.mxu0 %v2754
    %3639 = vmatpush1.bf16.msra.mxu0 %v2753
    %3640 = vmatprep.subr.bf16.mxu0 %v2761
    %3641 = vmatpush1.bf16.msra.mxu0 %v2760
    %3642 = vmatprep.subr.bf16.mxu0 %v2768
    %3643 = vmatpush1.bf16.msra.mxu0 %v2767
    %3644 = vmatprep.subr.bf16.mxu0 %v2775
    %3645 = vmatpush1.bf16.msra.mxu0 %v2774
    %3646 = vmatprep.subr.bf16.mxu0 %v2782
    %3647 = vmatpush1.bf16.msra.mxu0 %v2781
    %3648 = vmatprep.subr.bf16.mxu0 %v2789
    %3649 = vmatpush1.bf16.msra.mxu0 %v2788
    %3650 = vmatprep.subr.bf16.mxu0 0
    %3651 = vmatpush1.bf16.msra.mxu0 0
    %3652 = vmatprep.subr.bf16.mxu0 0
    %3653 = vmatpush1.bf16.msra.mxu0 0
    %3654 = vmatprep.subr.bf16.mxu0 0
    %3655 = vmatpush1.bf16.msra.mxu0 0
    %3656 = vmatprep.subr.bf16.mxu0 0
    %3657 = vmatpush1.bf16.msra.mxu0 0
    %3658 = vmatprep.subr.bf16.mxu0 0
    %3659 = vmatpush1.bf16.msra.mxu0 0
    %3660 = vmatprep.subr.bf16.mxu0 0
    %3661 = vmatpush1.bf16.msra.mxu0 0
    %3662 = vmatprep.subr.bf16.mxu0 0
    %3663 = vmatpush1.bf16.msra.mxu0 0
    %3664 = vmatprep.subr.bf16.mxu0 0
    %3665 = vmatpush1.bf16.msra.mxu0 0
    %3666 = vmatprep.mubr.bf16.mxu0 0
    %3667 = vmatmul.mubr.bf16.gmra.mrb[0].mxu0 %v681
    %v3668 = vpop.f32.mrb[0].mxu0
    %v3669 = vadd.f32 %v3628, %v3668
    %v3670 = vpop.f32.mrb[0].mxu0
    %v3671 = vadd.f32 %v3630, %v3670
    %v3672 = vpop.f32.mrb[0].mxu0
    %v3673 = vpop.f32.mrb[0].mxu0
    %3674 = vdwg.mxu0
    %3675 = vmatprep.subr.bf16.mxu0 0
    %3676 = vmatpush1.bf16.msra.mxu0 %v2405
    %3677 = vmatprep.subr.bf16.mxu0 0
    %3678 = vmatpush1.bf16.msra.mxu0 %v2412
    %3679 = vmatprep.subr.bf16.mxu0 0
    %3680 = vmatpush1.bf16.msra.mxu0 %v2419
    %3681 = vmatprep.subr.bf16.mxu0 0
    %3682 = vmatpush1.bf16.msra.mxu0 %v2426
    %3683 = vmatprep.subr.bf16.mxu0 0
    %3684 = vmatpush1.bf16.msra.mxu0 %v2433
    %3685 = vmatprep.subr.bf16.mxu0 0
    %3686 = vmatpush1.bf16.msra.mxu0 %v2440
    %3687 = vmatprep.subr.bf16.mxu0 0
    %3688 = vmatpush1.bf16.msra.mxu0 %v2447
    %3689 = vmatprep.subr.bf16.mxu0 0
    %3690 = vmatpush1.bf16.msra.mxu0 %v2454
    %3691 = vmatprep.subr.bf16.mxu0 0
    %3692 = vmatpush1.bf16.msra.mxu0 %v2461
    %3693 = vmatprep.subr.bf16.mxu0 0
    %3694 = vmatpush1.bf16.msra.mxu0 %v2468
    %3695 = vmatprep.subr.bf16.mxu0 0
    %3696 = vmatpush1.bf16.msra.mxu0 %v2475
    %3697 = vmatprep.subr.bf16.mxu0 0
    %3698 = vmatpush1.bf16.msra.mxu0 %v2482
    %3699 = vmatprep.subr.bf16.mxu0 0
    %3700 = vmatpush1.bf16.msra.mxu0 %v2489
    %3701 = vmatprep.subr.bf16.mxu0 0
    %3702 = vmatpush1.bf16.msra.mxu0 %v2496
    %3703 = vmatprep.subr.bf16.mxu0 0
    %3704 = vmatpush1.bf16.msra.mxu0 %v2503
    %3705 = vmatprep.subr.bf16.mxu0 0
    %3706 = vmatpush1.bf16.msra.mxu0 %v2510
    %3707 = vmatprep.mubr.bf16.mxu0 %v676
    %3708 = vmatmul.mubr.bf16.gmra.mrb[0].mxu0 %v675
    %v3709 = vpop.f32.mrb[0].mxu0
    %v3710 = vadd.f32 %v1159, %v3709
    %v3711 = vpop.f32.mrb[0].mxu0
    %v3712 = vpop.f32.mrb[0].mxu0
    %v3713 = vpop.f32.mrb[0].mxu0
    %3714 = vdwg.mxu0
    %3715 = vmatprep.subr.bf16.mxu0 0
    %3716 = vmatpush1.bf16.msra.mxu0 %v2517
    %3717 = vmatprep.subr.bf16.mxu0 0
    %3718 = vmatpush1.bf16.msra.mxu0 %v2524
    %3719 = vmatprep.subr.bf16.mxu0 0
    %3720 = vmatpush1.bf16.msra.mxu0 %v2531
    %3721 = vmatprep.subr.bf16.mxu0 0
    %3722 = vmatpush1.bf16.msra.mxu0 %v2538
    %3723 = vmatprep.subr.bf16.mxu0 0
    %3724 = vmatpush1.bf16.msra.mxu0 %v2545
    %3725 = vmatprep.subr.bf16.mxu0 0
    %3726 = vmatpush1.bf16.msra.mxu0 %v2552
    %3727 = vmatprep.subr.bf16.mxu0 0
    %3728 = vmatpush1.bf16.msra.mxu0 %v2559
    %3729 = vmatprep.subr.bf16.mxu0 0
    %3730 = vmatpush1.bf16.msra.mxu0 %v2566
    %3731 = vmatprep.subr.bf16.mxu0 0
    %3732 = vmatpush1.bf16.msra.mxu0 %v2573
    %3733 = vmatprep.subr.bf16.mxu0 0
    %3734 = vmatpush1.bf16.msra.mxu0 %v2580
    %3735 = vmatprep.subr.bf16.mxu0 0
    %3736 = vmatpush1.bf16.msra.mxu0 %v2587
    %3737 = vmatprep.subr.bf16.mxu0 0
    %3738 = vmatpush1.bf16.msra.mxu0 %v2594
    %3739 = vmatprep.subr.bf16.mxu0 0
    %3740 = vmatpush1.bf16.msra.mxu0 %v2601
    %3741 = vmatprep.subr.bf16.mxu0 0
    %3742 = vmatpush1.bf16.msra.mxu0 %v2608
    %3743 = vmatprep.subr.bf16.mxu0 0
    %3744 = vmatpush1.bf16.msra.mxu0 %v2615
    %3745 = vmatprep.subr.bf16.mxu0 0
    %3746 = vmatpush1.bf16.msra.mxu0 %v2622
    %3747 = vmatprep.mubr.bf16.mxu0 %v678
    %3748 = vmatmul.mubr.bf16.gmra.mrb[0].mxu0 %v677
    %v3749 = vpop.f32.mrb[0].mxu0
    %v3750 = vadd.f32 %v3710, %v3749
    %v3751 = vpop.f32.mrb[0].mxu0
    %v3752 = vpop.f32.mrb[0].mxu0
    %v3753 = vpop.f32.mrb[0].mxu0
    %3754 = vdwg.mxu0
    %3755 = vmatprep.subr.bf16.mxu0 0
    %3756 = vmatpush1.bf16.msra.mxu0 %v2629
    %3757 = vmatprep.subr.bf16.mxu0 0
    %3758 = vmatpush1.bf16.msra.mxu0 %v2636
    %3759 = vmatprep.subr.bf16.mxu0 0
    %3760 = vmatpush1.bf16.msra.mxu0 %v2643
    %3761 = vmatprep.subr.bf16.mxu0 0
    %3762 = vmatpush1.bf16.msra.mxu0 %v2650
    %3763 = vmatprep.subr.bf16.mxu0 0
    %3764 = vmatpush1.bf16.msra.mxu0 %v2657
    %3765 = vmatprep.subr.bf16.mxu0 0
    %3766 = vmatpush1.bf16.msra.mxu0 %v2664
    %3767 = vmatprep.subr.bf16.mxu0 0
    %3768 = vmatpush1.bf16.msra.mxu0 %v2671
    %3769 = vmatprep.subr.bf16.mxu0 0
    %3770 = vmatpush1.bf16.msra.mxu0 %v2678
    %3771 = vmatprep.subr.bf16.mxu0 0
    %3772 = vmatpush1.bf16.msra.mxu0 %v2685
    %3773 = vmatprep.subr.bf16.mxu0 0
    %3774 = vmatpush1.bf16.msra.mxu0 %v2692
    %3775 = vmatprep.subr.bf16.mxu0 0
    %3776 = vmatpush1.bf16.msra.mxu0 %v2699
    %3777 = vmatprep.subr.bf16.mxu0 0
    %3778 = vmatpush1.bf16.msra.mxu0 %v2706
    %3779 = vmatprep.subr.bf16.mxu0 0
    %3780 = vmatpush1.bf16.msra.mxu0 %v2713
    %3781 = vmatprep.subr.bf16.mxu0 0
    %3782 = vmatpush1.bf16.msra.mxu0 %v2720
    %3783 = vmatprep.subr.bf16.mxu0 0
    %3784 = vmatpush1.bf16.msra.mxu0 %v2727
    %3785 = vmatprep.subr.bf16.mxu0 0
    %3786 = vmatpush1.bf16.msra.mxu0 %v2734
    %3787 = vmatprep.mubr.bf16.mxu0 %v680
    %3788 = vmatmul.mubr.bf16.gmra.mrb[0].mxu0 %v679
    %v3789 = vpop.f32.mrb[0].mxu0
    %v3790 = vadd.f32 %v3750, %v3789
    %v3791 = vpop.f32.mrb[0].mxu0
    %v3792 = vpop.f32.mrb[0].mxu0
    %v3793 = vpop.f32.mrb[0].mxu0
    %3794 = vdwg.mxu0
    %3795 = vmatprep.subr.bf16.mxu0 0
    %3796 = vmatpush1.bf16.msra.mxu0 %v2741
    %3797 = vmatprep.subr.bf16.mxu0 0
    %3798 = vmatpush1.bf16.msra.mxu0 %v2748
    %3799 = vmatprep.subr.bf16.mxu0 0
    %3800 = vmatpush1.bf16.msra.mxu0 %v2755
    %3801 = vmatprep.subr.bf16.mxu0 0
    %3802 = vmatpush1.bf16.msra.mxu0 %v2762
    %3803 = vmatprep.subr.bf16.mxu0 0
    %3804 = vmatpush1.bf16.msra.mxu0 %v2769
    %3805 = vmatprep.subr.bf16.mxu0 0
    %3806 = vmatpush1.bf16.msra.mxu0 %v2776
    %3807 = vmatprep.subr.bf16.mxu0 0
    %3808 = vmatpush1.bf16.msra.mxu0 %v2783
    %3809 = vmatprep.subr.bf16.mxu0 0
    %3810 = vmatpush1.bf16.msra.mxu0 %v2790
    %3811 = vmatprep.subr.bf16.mxu0 0
    %3812 = vmatpush1.bf16.msra.mxu0 0
    %3813 = vmatprep.subr.bf16.mxu0 0
    %3814 = vmatpush1.bf16.msra.mxu0 0
    %3815 = vmatprep.subr.bf16.mxu0 0
    %3816 = vmatpush1.bf16.msra.mxu0 0
    %3817 = vmatprep.subr.bf16.mxu0 0
    %3818 = vmatpush1.bf16.msra.mxu0 0
    %3819 = vmatprep.subr.bf16.mxu0 0
    %3820 = vmatpush1.bf16.msra.mxu0 0
    %3821 = vmatprep.subr.bf16.mxu0 0
    %3822 = vmatpush1.bf16.msra.mxu0 0
    %3823 = vmatprep.subr.bf16.mxu0 0
    %3824 = vmatpush1.bf16.msra.mxu0 0
    %3825 = vmatprep.subr.bf16.mxu0 0
    %3826 = vmatpush1.bf16.msra.mxu0 0
    %3827 = vmatprep.mubr.bf16.mxu0 0
    %3828 = vmatmul.mubr.bf16.gmra.mrb[0].mxu0 %v681
    %v3829 = vpop.f32.mrb[0].mxu0
    %v3830 = vadd.f32 %v3790, %v3829
    %v3831 = vpop.f32.mrb[0].mxu0
    %v3832 = vpop.f32.mrb[0].mxu0
    %v3833 = vpop.f32.mrb[0].mxu0
    %3834 = vdwg.mxu0
    %v3835 = vmax.f32 %v3341, 0.0
    %v3836 = vmax.f32 %v3343, 0.0
    %v3837 = vmax.f32 %v3505, 0.0
    %v3838 = vmax.f32 %v3507, 0.0
    %v3839 = vmax.f32 %v3669, 0.0
    %v3840 = vmax.f32 %v3671, 0.0
    %v3841 = vmax.f32 %v3830, 0.0
    %v3842 = vpack.c.bf16 %v3835, %v3835
    %v3843 = vpack.c.bf16 %v3836, %v3836
    %v3844 = vpack.c.bf16 %v3837, %v3837
    %v3845 = vpack.c.bf16 %v3838, %v3838
    %v3846 = vpack.c.bf16 %v3839, %v3839
    %v3847 = vpack.c.bf16 %v3840, %v3840
    %v3848 = vpack.c.bf16 %v3841, %v3841
    %v3849 = vld [vmem:[#allocation11] sm:$0xff]
    %v3850 = vld [vmem:[#allocation11 + $0x8] sm:$0xff]
    %v3851 = vld [vmem:[#allocation11 + $0x10] sm:$0xff]
    %v3852 = vld [vmem:[#allocation11 + $0x18] sm:$0xf]
    %v3853 = vld [vmem:[#allocation11 + $0x1c] sm:$0xff]
    %v3854 = vld [vmem:[#allocation11 + $0x24] sm:$0xff]
    %v3855 = vld [vmem:[#allocation11 + $0x2c] sm:$0xff]
    %v3856 = vld [vmem:[#allocation11 + $0x34] sm:$0xf]
    %v3857 = vld [vmem:[#allocation11 + $0x38] sm:$0xff]
    %v3858 = vld [vmem:[#allocation11 + $0x40] sm:$0xff]
    %v3859 = vld [vmem:[#allocation11 + $0x48] sm:$0xff]
    %v3860 = vld [vmem:[#allocation11 + $0x50] sm:$0xf]
    %v3861 = vld [vmem:[#allocation11 + $0x54] sm:$0xff]
    %v3862 = vld [vmem:[#allocation11 + $0x5c] sm:$0xff]
    %v3863 = vld [vmem:[#allocation11 + $0x64] sm:$0xff]
    %v3864 = vld [vmem:[#allocation11 + $0x6c] sm:$0xf]
    %v3865 = vld [vmem:[#allocation11 + $0x70] sm:$0xff]
    %v3866 = vld [vmem:[#allocation11 + $0x78] sm:$0xff]
    %v3867 = vld [vmem:[#allocation11 + $0x80] sm:$0xff]
    %v3868 = vld [vmem:[#allocation11 + $0x88] sm:$0xf]
    %v3869 = vld [vmem:[#allocation11 + $0x8c] sm:$0xff]
    %v3870 = vld [vmem:[#allocation11 + $0x94] sm:$0xff]
    %v3871 = vld [vmem:[#allocation11 + $0x9c] sm:$0xff]
    %v3872 = vld [vmem:[#allocation11 + $0xa4] sm:$0xf]
    %v3873 = vld [vmem:[#allocation11 + $0xa8] sm:$0xff]
    %v3874 = vld [vmem:[#allocation11 + $0xb0] sm:$0xff]
    %v3875 = vld [vmem:[#allocation11 + $0xb8] sm:$0xff]
    %v3876 = vld [vmem:[#allocation11 + $0xc0] sm:$0xf]
    %v3877 = vld [vmem:[#allocation11 + $0xc4] sm:$0xff]
    %v3878 = vld [vmem:[#allocation11 + $0xcc] sm:$0xff]
    %v3879 = vld [vmem:[#allocation11 + $0xd4] sm:$0xff]
    %v3880 = vld [vmem:[#allocation11 + $0xdc] sm:$0xf]
    %v3881 = vld [vmem:[#allocation11 + $0xe0] sm:$0xff]
    %v3882 = vld [vmem:[#allocation11 + $0xe8] sm:$0xff]
    %v3883 = vld [vmem:[#allocation11 + $0xf0] sm:$0xff]
    %v3884 = vld [vmem:[#allocation11 + $0xf8] sm:$0xf]
    %v3885 = vld [vmem:[#allocation11 + $0xfc] sm:$0xff]
    %v3886 = vld [vmem:[#allocation11 + $0x104] sm:$0xff]
    %v3887 = vld [vmem:[#allocation11 + $0x10c] sm:$0xff]
    %v3888 = vld [vmem:[#allocation11 + $0x114] sm:$0xf]
    %v3889 = vld [vmem:[#allocation11 + $0x118] sm:$0xff]
    %v3890 = vld [vmem:[#allocation11 + $0x120] sm:$0xff]
    %v3891 = vld [vmem:[#allocation11 + $0x128] sm:$0xff]
    %v3892 = vld [vmem:[#allocation11 + $0x130] sm:$0xf]
    %v3893 = vld [vmem:[#allocation11 + $0x134] sm:$0xff]
    %v3894 = vld [vmem:[#allocation11 + $0x13c] sm:$0xff]
    %v3895 = vld [vmem:[#allocation11 + $0x144] sm:$0xff]
    %v3896 = vld [vmem:[#allocation11 + $0x14c] sm:$0xf]
    %v3897 = vld [vmem:[#allocation11 + $0x150] sm:$0xff]
    %v3898 = vld [vmem:[#allocation11 + $0x158] sm:$0xff]
    %v3899 = vld [vmem:[#allocation11 + $0x160] sm:$0xff]
    %v3900 = vld [vmem:[#allocation11 + $0x168] sm:$0xf]
    %v3901 = vld [vmem:[#allocation11 + $0x16c] sm:$0xff]
    %v3902 = vld [vmem:[#allocation11 + $0x174] sm:$0xff]
    %v3903 = vld [vmem:[#allocation11 + $0x17c] sm:$0xff]
    %v3904 = vld [vmem:[#allocation11 + $0x184] sm:$0xf]
    %v3905 = vld [vmem:[#allocation11 + $0x188] sm:$0xff]
    %v3906 = vld [vmem:[#allocation11 + $0x190] sm:$0xff]
    %v3907 = vld [vmem:[#allocation11 + $0x198] sm:$0xff]
    %v3908 = vld [vmem:[#allocation11 + $0x1a0] sm:$0xf]
    %v3909 = vld [vmem:[#allocation11 + $0x1a4] sm:$0xff]
    %v3910 = vld [vmem:[#allocation11 + $0x1ac] sm:$0xff]
    %v3911 = vld [vmem:[#allocation11 + $0x1b4] sm:$0xff]
    %v3912 = vld [vmem:[#allocation11 + $0x1bc] sm:$0xf]
    %v3913 = vld [vmem:[#allocation11 + $0x1c0] sm:$0xff]
    %v3914 = vld [vmem:[#allocation11 + $0x1c8] sm:$0xff]
    %v3915 = vld [vmem:[#allocation11 + $0x1d0] sm:$0xff]
    %v3916 = vld [vmem:[#allocation11 + $0x1d8] sm:$0xf]
    %v3917 = vld [vmem:[#allocation11 + $0x1dc] sm:$0xff]
    %v3918 = vld [vmem:[#allocation11 + $0x1e4] sm:$0xff]
    %v3919 = vld [vmem:[#allocation11 + $0x1ec] sm:$0xff]
    %v3920 = vld [vmem:[#allocation11 + $0x1f4] sm:$0xf]
    %v3921 = vld [vmem:[#allocation11 + $0x1f8] sm:$0xff]
    %v3922 = vld [vmem:[#allocation11 + $0x200] sm:$0xff]
    %v3923 = vld [vmem:[#allocation11 + $0x208] sm:$0xff]
    %v3924 = vld [vmem:[#allocation11 + $0x210] sm:$0xf]
    %v3925 = vld [vmem:[#allocation11 + $0x214] sm:$0xff]
    %v3926 = vld [vmem:[#allocation11 + $0x21c] sm:$0xff]
    %v3927 = vld [vmem:[#allocation11 + $0x224] sm:$0xff]
    %v3928 = vld [vmem:[#allocation11 + $0x22c] sm:$0xf]
    %v3929 = vld [vmem:[#allocation11 + $0x230] sm:$0xff]
    %v3930 = vld [vmem:[#allocation11 + $0x238] sm:$0xff]
    %v3931 = vld [vmem:[#allocation11 + $0x240] sm:$0xff]
    %v3932 = vld [vmem:[#allocation11 + $0x248] sm:$0xf]
    %v3933 = vld [vmem:[#allocation11 + $0x24c] sm:$0xff]
    %v3934 = vld [vmem:[#allocation11 + $0x254] sm:$0xff]
    %v3935 = vld [vmem:[#allocation11 + $0x25c] sm:$0xff]
    %v3936 = vld [vmem:[#allocation11 + $0x264] sm:$0xf]
    %v3937 = vld [vmem:[#allocation11 + $0x268] sm:$0xff]
    %v3938 = vld [vmem:[#allocation11 + $0x270] sm:$0xff]
    %v3939 = vld [vmem:[#allocation11 + $0x278] sm:$0xff]
    %v3940 = vld [vmem:[#allocation11 + $0x280] sm:$0xf]
    %v3941 = vld [vmem:[#allocation11 + $0x284] sm:$0xff]
    %v3942 = vld [vmem:[#allocation11 + $0x28c] sm:$0xff]
    %v3943 = vld [vmem:[#allocation11 + $0x294] sm:$0xff]
    %v3944 = vld [vmem:[#allocation11 + $0x29c] sm:$0xf]
    %v3945 = vld [vmem:[#allocation11 + $0x2a0] sm:$0xff]
    %v3946 = vld [vmem:[#allocation11 + $0x2a8] sm:$0xff]
    %v3947 = vld [vmem:[#allocation11 + $0x2b0] sm:$0xff]
    %v3948 = vld [vmem:[#allocation11 + $0x2b8] sm:$0xf]
    %v3949 = vld [vmem:[#allocation11 + $0x2bc] sm:$0xff]
    %v3950 = vld [vmem:[#allocation11 + $0x2c4] sm:$0xff]
    %v3951 = vld [vmem:[#allocation11 + $0x2cc] sm:$0xff]
    %v3952 = vld [vmem:[#allocation11 + $0x2d4] sm:$0xf]
    %v3953 = vld [vmem:[#allocation11 + $0x2d8] sm:$0xff]
    %v3954 = vld [vmem:[#allocation11 + $0x2e0] sm:$0xff]
    %v3955 = vld [vmem:[#allocation11 + $0x2e8] sm:$0xff]
    %v3956 = vld [vmem:[#allocation11 + $0x2f0] sm:$0xf]
    %v3957 = vld [vmem:[#allocation11 + $0x2f4] sm:$0xff]
    %v3958 = vld [vmem:[#allocation11 + $0x2fc] sm:$0xff]
    %v3959 = vld [vmem:[#allocation11 + $0x304] sm:$0xff]
    %v3960 = vld [vmem:[#allocation11 + $0x30c] sm:$0xf]
    %v3961 = vld [vmem:[#allocation11 + $0x310] sm:$0xff]
    %v3962 = vld [vmem:[#allocation11 + $0x318] sm:$0xff]
    %v3963 = vld [vmem:[#allocation11 + $0x320] sm:$0xff]
    %v3964 = vld [vmem:[#allocation11 + $0x328] sm:$0xf]
    %v3965 = vld [vmem:[#allocation11 + $0x32c] sm:$0xff]
    %v3966 = vld [vmem:[#allocation11 + $0x334] sm:$0xff]
    %v3967 = vld [vmem:[#allocation11 + $0x33c] sm:$0xff]
    %v3968 = vld [vmem:[#allocation11 + $0x344] sm:$0xf]
    %v3969 = vld [vmem:[#allocation11 + $0x348] sm:$0xff]
    %v3970 = vld [vmem:[#allocation11 + $0x350] sm:$0xff]
    %v3971 = vld [vmem:[#allocation11 + $0x358] sm:$0xff]
    %v3972 = vld [vmem:[#allocation11 + $0x360] sm:$0xf]
    %v3973 = vld [vmem:[#allocation11 + $0x364] sm:$0xff]
    %v3974 = vld [vmem:[#allocation11 + $0x36c] sm:$0xff]
    %v3975 = vld [vmem:[#allocation11 + $0x374] sm:$0xff]
    %v3976 = vld [vmem:[#allocation11 + $0x37c] sm:$0xf]
    %v3977 = vld [vmem:[#allocation11 + $0x380] sm:$0xff]
    %v3978 = vld [vmem:[#allocation11 + $0x388] sm:$0xff]
    %v3979 = vld [vmem:[#allocation11 + $0x390] sm:$0xff]
    %v3980 = vld [vmem:[#allocation11 + $0x398] sm:$0xf]
    %v3981 = vld [vmem:[#allocation11 + $0x39c] sm:$0xff]
    %v3982 = vld [vmem:[#allocation11 + $0x3a4] sm:$0xff]
    %v3983 = vld [vmem:[#allocation11 + $0x3ac] sm:$0xff]
    %v3984 = vld [vmem:[#allocation11 + $0x3b4] sm:$0xf]
    %v3985 = vld [vmem:[#allocation11 + $0x3b8] sm:$0xff]
    %v3986 = vld [vmem:[#allocation11 + $0x3c0] sm:$0xff]
    %v3987 = vld [vmem:[#allocation11 + $0x3c8] sm:$0xff]
    %v3988 = vld [vmem:[#allocation11 + $0x3d0] sm:$0xf]
    %v3989 = vld [vmem:[#allocation11 + $0x3d4] sm:$0xff]
    %v3990 = vld [vmem:[#allocation11 + $0x3dc] sm:$0xff]
    %v3991 = vld [vmem:[#allocation11 + $0x3e4] sm:$0xff]
    %v3992 = vld [vmem:[#allocation11 + $0x3ec] sm:$0xf]
    %v3993 = vld [vmem:[#allocation11 + $0x3f0] sm:$0xff]
    %v3994 = vld [vmem:[#allocation11 + $0x3f8] sm:$0xff]
    %v3995 = vld [vmem:[#allocation11 + $0x400] sm:$0xff]
    %v3996 = vld [vmem:[#allocation11 + $0x408] sm:$0xf]
    %v3997 = vld [vmem:[#allocation11 + $0x40c] sm:$0xff]
    %v3998 = vld [vmem:[#allocation11 + $0x414] sm:$0xff]
    %v3999 = vld [vmem:[#allocation11 + $0x41c] sm:$0xff]
    %v4000 = vld [vmem:[#allocation11 + $0x424] sm:$0xf]
    %v4001 = vld [vmem:[#allocation11 + $0x428] sm:$0xff]
    %v4002 = vld [vmem:[#allocation11 + $0x430] sm:$0xff]
    %v4003 = vld [vmem:[#allocation11 + $0x438] sm:$0xff]
    %v4004 = vld [vmem:[#allocation11 + $0x440] sm:$0xf]
    %v4005 = vld [vmem:[#allocation11 + $0x444] sm:$0xff]
    %v4006 = vld [vmem:[#allocation11 + $0x44c] sm:$0xff]
    %v4007 = vld [vmem:[#allocation11 + $0x454] sm:$0xff]
    %v4008 = vld [vmem:[#allocation11 + $0x45c] sm:$0xf]
    %v4009 = vld [vmem:[#allocation11 + $0x460] sm:$0xff]
    %v4010 = vld [vmem:[#allocation11 + $0x468] sm:$0xff]
    %v4011 = vld [vmem:[#allocation11 + $0x470] sm:$0xff]
    %v4012 = vld [vmem:[#allocation11 + $0x478] sm:$0xf]
    %v4013 = vld [vmem:[#allocation11 + $0x47c] sm:$0xff]
    %v4014 = vld [vmem:[#allocation11 + $0x484] sm:$0xff]
    %v4015 = vld [vmem:[#allocation11 + $0x48c] sm:$0xff]
    %v4016 = vld [vmem:[#allocation11 + $0x494] sm:$0xf]
    %v4017 = vld [vmem:[#allocation11 + $0x498] sm:$0xff]
    %v4018 = vld [vmem:[#allocation11 + $0x4a0] sm:$0xff]
    %v4019 = vld [vmem:[#allocation11 + $0x4a8] sm:$0xff]
    %v4020 = vld [vmem:[#allocation11 + $0x4b0] sm:$0xf]
    %v4021 = vld [vmem:[#allocation11 + $0x4b4] sm:$0xff]
    %v4022 = vld [vmem:[#allocation11 + $0x4bc] sm:$0xff]
    %v4023 = vld [vmem:[#allocation11 + $0x4c4] sm:$0xff]
    %v4024 = vld [vmem:[#allocation11 + $0x4cc] sm:$0xf]
    %v4025 = vld [vmem:[#allocation11 + $0x4d0] sm:$0xff]
    %v4026 = vld [vmem:[#allocation11 + $0x4d8] sm:$0xff]
    %v4027 = vld [vmem:[#allocation11 + $0x4e0] sm:$0xff]
    %v4028 = vld [vmem:[#allocation11 + $0x4e8] sm:$0xf]
    %v4029 = vld [vmem:[#allocation11 + $0x4ec] sm:$0xff]
    %v4030 = vld [vmem:[#allocation11 + $0x4f4] sm:$0xff]
    %v4031 = vld [vmem:[#allocation11 + $0x4fc] sm:$0xff]
    %v4032 = vld [vmem:[#allocation11 + $0x504] sm:$0xf]
    %v4033 = vld [vmem:[#allocation11 + $0x508] sm:$0xff]
    %v4034 = vld [vmem:[#allocation11 + $0x510] sm:$0xff]
    %v4035 = vld [vmem:[#allocation11 + $0x518] sm:$0xff]
    %v4036 = vld [vmem:[#allocation11 + $0x520] sm:$0xf]
    %v4037 = vld [vmem:[#allocation11 + $0x524] sm:$0xff]
    %v4038 = vld [vmem:[#allocation11 + $0x52c] sm:$0xff]
    %v4039 = vld [vmem:[#allocation11 + $0x534] sm:$0xff]
    %v4040 = vld [vmem:[#allocation11 + $0x53c] sm:$0xf]
    %v4041 = vld [vmem:[#allocation11 + $0x540] sm:$0xff]
    %v4042 = vld [vmem:[#allocation11 + $0x548] sm:$0xff]
    %v4043 = vld [vmem:[#allocation11 + $0x550] sm:$0xff]
    %v4044 = vld [vmem:[#allocation11 + $0x558] sm:$0xf]
    %v4045 = vld [vmem:[#allocation11 + $0x55c] sm:$0xff]
    %v4046 = vld [vmem:[#allocation11 + $0x564] sm:$0xff]
    %v4047 = vld [vmem:[#allocation11 + $0x56c] sm:$0xff]
    %v4048 = vld [vmem:[#allocation11 + $0x574] sm:$0xf]
    %v4049 = vld [vmem:[#allocation11 + $0x578] sm:$0xff]
    %v4050 = vld [vmem:[#allocation11 + $0x580] sm:$0xff]
    %v4051 = vld [vmem:[#allocation11 + $0x588] sm:$0xff]
    %v4052 = vld [vmem:[#allocation11 + $0x590] sm:$0xf]
    %v4053 = vld [vmem:[#allocation11 + $0x594] sm:$0xff]
    %v4054 = vld [vmem:[#allocation11 + $0x59c] sm:$0xff]
    %v4055 = vld [vmem:[#allocation11 + $0x5a4] sm:$0xff]
    %v4056 = vld [vmem:[#allocation11 + $0x5ac] sm:$0xf]
    %v4057 = vld [vmem:[#allocation11 + $0x5b0] sm:$0xff]
    %v4058 = vld [vmem:[#allocation11 + $0x5b8] sm:$0xff]
    %v4059 = vld [vmem:[#allocation11 + $0x5c0] sm:$0xff]
    %v4060 = vld [vmem:[#allocation11 + $0x5c8] sm:$0xf]
    %v4061 = vld [vmem:[#allocation11 + $0x5cc] sm:$0xff]
    %v4062 = vld [vmem:[#allocation11 + $0x5d4] sm:$0xff]
    %v4063 = vld [vmem:[#allocation11 + $0x5dc] sm:$0xff]
    %v4064 = vld [vmem:[#allocation11 + $0x5e4] sm:$0xf]
    %v4065 = vld [vmem:[#allocation11 + $0x5e8] sm:$0xff]
    %v4066 = vld [vmem:[#allocation11 + $0x5f0] sm:$0xff]
    %v4067 = vld [vmem:[#allocation11 + $0x5f8] sm:$0xff]
    %v4068 = vld [vmem:[#allocation11 + $0x600] sm:$0xf]
    %v4069 = vld [vmem:[#allocation11 + $0x604] sm:$0xff]
    %v4070 = vld [vmem:[#allocation11 + $0x60c] sm:$0xff]
    %v4071 = vld [vmem:[#allocation11 + $0x614] sm:$0xff]
    %v4072 = vld [vmem:[#allocation11 + $0x61c] sm:$0xf]
    %v4073 = vld [vmem:[#allocation11 + $0x620] sm:$0xff]
    %v4074 = vld [vmem:[#allocation11 + $0x628] sm:$0xff]
    %v4075 = vld [vmem:[#allocation11 + $0x630] sm:$0xff]
    %v4076 = vld [vmem:[#allocation11 + $0x638] sm:$0xf]
    %v4077 = vld [vmem:[#allocation11 + $0x63c] sm:$0xff]
    %v4078 = vld [vmem:[#allocation11 + $0x644] sm:$0xff]
    %v4079 = vld [vmem:[#allocation11 + $0x64c] sm:$0xff]
    %v4080 = vld [vmem:[#allocation11 + $0x654] sm:$0xf]
    %v4081 = vld [vmem:[#allocation11 + $0x658] sm:$0xff]
    %v4082 = vld [vmem:[#allocation11 + $0x660] sm:$0xff]
    %v4083 = vld [vmem:[#allocation11 + $0x668] sm:$0xff]
    %v4084 = vld [vmem:[#allocation11 + $0x670] sm:$0xf]
    %v4085 = vld [vmem:[#allocation11 + $0x674] sm:$0xff]
    %v4086 = vld [vmem:[#allocation11 + $0x67c] sm:$0xff]
    %v4087 = vld [vmem:[#allocation11 + $0x684] sm:$0xff]
    %v4088 = vld [vmem:[#allocation11 + $0x68c] sm:$0xf]
    %v4089 = vld [vmem:[#allocation11 + $0x690] sm:$0xff]
    %v4090 = vld [vmem:[#allocation11 + $0x698] sm:$0xff]
    %v4091 = vld [vmem:[#allocation11 + $0x6a0] sm:$0xff]
    %v4092 = vld [vmem:[#allocation11 + $0x6a8] sm:$0xf]
    %v4093 = vld [vmem:[#allocation11 + $0x6ac] sm:$0xff]
    %v4094 = vld [vmem:[#allocation11 + $0x6b4] sm:$0xff]
    %v4095 = vld [vmem:[#allocation11 + $0x6bc] sm:$0xff]
    %v4096 = vld [vmem:[#allocation11 + $0x6c4] sm:$0xf]
    %v4097 = vld [vmem:[#allocation11 + $0x6c8] sm:$0xff]
    %v4098 = vld [vmem:[#allocation11 + $0x6d0] sm:$0xff]
    %v4099 = vld [vmem:[#allocation11 + $0x6d8] sm:$0xff]
    %v4100 = vld [vmem:[#allocation11 + $0x6e0] sm:$0xf]
    %v4101 = vld [vmem:[#allocation11 + $0x6e4] sm:$0xff]
    %v4102 = vld [vmem:[#allocation11 + $0x6ec] sm:$0xff]
    %v4103 = vld [vmem:[#allocation11 + $0x6f4] sm:$0xff]
    %v4104 = vld [vmem:[#allocation11 + $0x6fc] sm:$0xf]
    %v4105 = vld [vmem:[#allocation11 + $0x700] sm:$0xff]
    %v4106 = vld [vmem:[#allocation11 + $0x708] sm:$0xff]
    %v4107 = vld [vmem:[#allocation11 + $0x710] sm:$0xff]
    %v4108 = vld [vmem:[#allocation11 + $0x718] sm:$0xf]
    %v4109 = vld [vmem:[#allocation11 + $0x71c] sm:$0xff]
    %v4110 = vld [vmem:[#allocation11 + $0x724] sm:$0xff]
    %v4111 = vld [vmem:[#allocation11 + $0x72c] sm:$0xff]
    %v4112 = vld [vmem:[#allocation11 + $0x734] sm:$0xf]
    %v4113 = vld [vmem:[#allocation11 + $0x738] sm:$0xff]
    %v4114 = vld [vmem:[#allocation11 + $0x740] sm:$0xff]
    %v4115 = vld [vmem:[#allocation11 + $0x748] sm:$0xff]
    %v4116 = vld [vmem:[#allocation11 + $0x750] sm:$0xf]
    %v4117 = vld [vmem:[#allocation11 + $0x754] sm:$0xff]
    %v4118 = vld [vmem:[#allocation11 + $0x75c] sm:$0xff]
    %v4119 = vld [vmem:[#allocation11 + $0x764] sm:$0xff]
    %v4120 = vld [vmem:[#allocation11 + $0x76c] sm:$0xf]
    %v4121 = vld [vmem:[#allocation11 + $0x770] sm:$0xff]
    %v4122 = vld [vmem:[#allocation11 + $0x778] sm:$0xff]
    %v4123 = vld [vmem:[#allocation11 + $0x780] sm:$0xff]
    %v4124 = vld [vmem:[#allocation11 + $0x788] sm:$0xf]
    %v4125 = vld [vmem:[#allocation11 + $0x78c] sm:$0xff]
    %v4126 = vld [vmem:[#allocation11 + $0x794] sm:$0xff]
    %v4127 = vld [vmem:[#allocation11 + $0x79c] sm:$0xff]
    %v4128 = vld [vmem:[#allocation11 + $0x7a4] sm:$0xf]
    %v4129 = vld [vmem:[#allocation11 + $0x7a8] sm:$0xff]
    %v4130 = vld [vmem:[#allocation11 + $0x7b0] sm:$0xff]
    %v4131 = vld [vmem:[#allocation11 + $0x7b8] sm:$0xff]
    %v4132 = vld [vmem:[#allocation11 + $0x7c0] sm:$0xf]
    %v4133 = vld [vmem:[#allocation11 + $0x7c4] sm:$0xff]
    %v4134 = vld [vmem:[#allocation11 + $0x7cc] sm:$0xff]
    %v4135 = vld [vmem:[#allocation11 + $0x7d4] sm:$0xff]
    %v4136 = vld [vmem:[#allocation11 + $0x7dc] sm:$0xf]
    %v4137 = vld [vmem:[#allocation11 + $0x7e0] sm:$0xff]
    %v4138 = vld [vmem:[#allocation11 + $0x7e8] sm:$0xff]
    %v4139 = vld [vmem:[#allocation11 + $0x7f0] sm:$0xff]
    %v4140 = vld [vmem:[#allocation11 + $0x7f8] sm:$0xf]
    %v4141 = vld [vmem:[#allocation11 + $0x7fc] sm:$0xff]
    %v4142 = vld [vmem:[#allocation11 + $0x804] sm:$0xff]
    %v4143 = vld [vmem:[#allocation11 + $0x80c] sm:$0xff]
    %v4144 = vld [vmem:[#allocation11 + $0x814] sm:$0xf]
    %v4145 = vld [vmem:[#allocation11 + $0x818] sm:$0xff]
    %v4146 = vld [vmem:[#allocation11 + $0x820] sm:$0xff]
    %v4147 = vld [vmem:[#allocation11 + $0x828] sm:$0xff]
    %v4148 = vld [vmem:[#allocation11 + $0x830] sm:$0xf]
    %v4149 = vld [vmem:[#allocation11 + $0x834] sm:$0xff]
    %v4150 = vld [vmem:[#allocation11 + $0x83c] sm:$0xff]
    %v4151 = vld [vmem:[#allocation11 + $0x844] sm:$0xff]
    %v4152 = vld [vmem:[#allocation11 + $0x84c] sm:$0xf]
    %v4153 = vld [vmem:[#allocation11 + $0x850] sm:$0xff]
    %v4154 = vld [vmem:[#allocation11 + $0x858] sm:$0xff]
    %v4155 = vld [vmem:[#allocation11 + $0x860] sm:$0xff]
    %v4156 = vld [vmem:[#allocation11 + $0x868] sm:$0xf]
    %v4157 = vld [vmem:[#allocation11 + $0x86c] sm:$0xff]
    %v4158 = vld [vmem:[#allocation11 + $0x874] sm:$0xff]
    %v4159 = vld [vmem:[#allocation11 + $0x87c] sm:$0xff]
    %v4160 = vld [vmem:[#allocation11 + $0x884] sm:$0xf]
    %v4161 = vld [vmem:[#allocation11 + $0x888] sm:$0xff]
    %v4162 = vld [vmem:[#allocation11 + $0x890] sm:$0xff]
    %v4163 = vld [vmem:[#allocation11 + $0x898] sm:$0xff]
    %v4164 = vld [vmem:[#allocation11 + $0x8a0] sm:$0xf]
    %v4165 = vld [vmem:[#allocation11 + $0x8a4] sm:$0xff]
    %v4166 = vld [vmem:[#allocation11 + $0x8ac] sm:$0xff]
    %v4167 = vld [vmem:[#allocation11 + $0x8b4] sm:$0xff]
    %v4168 = vld [vmem:[#allocation11 + $0x8bc] sm:$0xf]
    %v4169 = vld [vmem:[#allocation11 + $0x8c0] sm:$0xff]
    %v4170 = vld [vmem:[#allocation11 + $0x8c8] sm:$0xff]
    %v4171 = vld [vmem:[#allocation11 + $0x8d0] sm:$0xff]
    %v4172 = vld [vmem:[#allocation11 + $0x8d8] sm:$0xf]
    %v4173 = vld [vmem:[#allocation11 + $0x8dc] sm:$0xff]
    %v4174 = vld [vmem:[#allocation11 + $0x8e4] sm:$0xff]
    %v4175 = vld [vmem:[#allocation11 + $0x8ec] sm:$0xff]
    %v4176 = vld [vmem:[#allocation11 + $0x8f4] sm:$0xf]
    %v4177 = vld [vmem:[#allocation11 + $0x8f8] sm:$0xff]
    %v4178 = vld [vmem:[#allocation11 + $0x900] sm:$0xff]
    %v4179 = vld [vmem:[#allocation11 + $0x908] sm:$0xff]
    %v4180 = vld [vmem:[#allocation11 + $0x910] sm:$0xf]
    %v4181 = vld [vmem:[#allocation11 + $0x914] sm:$0xff]
    %v4182 = vld [vmem:[#allocation11 + $0x91c] sm:$0xff]
    %v4183 = vld [vmem:[#allocation11 + $0x924] sm:$0xff]
    %v4184 = vld [vmem:[#allocation11 + $0x92c] sm:$0xf]
    %v4185 = vld [vmem:[#allocation11 + $0x930] sm:$0xff]
    %v4186 = vld [vmem:[#allocation11 + $0x938] sm:$0xff]
    %v4187 = vld [vmem:[#allocation11 + $0x940] sm:$0xff]
    %v4188 = vld [vmem:[#allocation11 + $0x948] sm:$0xf]
    %v4189 = vld [vmem:[#allocation11 + $0x94c] sm:$0xff]
    %v4190 = vld [vmem:[#allocation11 + $0x954] sm:$0xff]
    %v4191 = vld [vmem:[#allocation11 + $0x95c] sm:$0xff]
    %v4192 = vld [vmem:[#allocation11 + $0x964] sm:$0xf]
    %v4193 = vld [vmem:[#allocation11 + $0x968] sm:$0xff]
    %v4194 = vld [vmem:[#allocation11 + $0x970] sm:$0xff]
    %v4195 = vld [vmem:[#allocation11 + $0x978] sm:$0xff]
    %v4196 = vld [vmem:[#allocation11 + $0x980] sm:$0xf]
    %v4197 = vld [vmem:[#allocation11 + $0x984] sm:$0xff]
    %v4198 = vld [vmem:[#allocation11 + $0x98c] sm:$0xff]
    %v4199 = vld [vmem:[#allocation11 + $0x994] sm:$0xff]
    %v4200 = vld [vmem:[#allocation11 + $0x99c] sm:$0xf]
    %v4201 = vld [vmem:[#allocation11 + $0x9a0] sm:$0xff]
    %v4202 = vld [vmem:[#allocation11 + $0x9a8] sm:$0xff]
    %v4203 = vld [vmem:[#allocation11 + $0x9b0] sm:$0xff]
    %v4204 = vld [vmem:[#allocation11 + $0x9b8] sm:$0xf]
    %v4205 = vld [vmem:[#allocation11 + $0x9bc] sm:$0xff]
    %v4206 = vld [vmem:[#allocation11 + $0x9c4] sm:$0xff]
    %v4207 = vld [vmem:[#allocation11 + $0x9cc] sm:$0xff]
    %v4208 = vld [vmem:[#allocation11 + $0x9d4] sm:$0xf]
    %v4209 = vld [vmem:[#allocation11 + $0x9d8] sm:$0xff]
    %v4210 = vld [vmem:[#allocation11 + $0x9e0] sm:$0xff]
    %v4211 = vld [vmem:[#allocation11 + $0x9e8] sm:$0xff]
    %v4212 = vld [vmem:[#allocation11 + $0x9f0] sm:$0xf]
    %v4213 = vld [vmem:[#allocation11 + $0x9f4] sm:$0xff]
    %v4214 = vld [vmem:[#allocation11 + $0x9fc] sm:$0xff]
    %v4215 = vld [vmem:[#allocation11 + $0xa04] sm:$0xff]
    %v4216 = vld [vmem:[#allocation11 + $0xa0c] sm:$0xf]
    %v4217 = vld [vmem:[#allocation11 + $0xa10] sm:$0xff]
    %v4218 = vld [vmem:[#allocation11 + $0xa18] sm:$0xff]
    %v4219 = vld [vmem:[#allocation11 + $0xa20] sm:$0xff]
    %v4220 = vld [vmem:[#allocation11 + $0xa28] sm:$0xf]
    %v4221 = vld [vmem:[#allocation11 + $0xa2c] sm:$0xff]
    %v4222 = vld [vmem:[#allocation11 + $0xa34] sm:$0xff]
    %v4223 = vld [vmem:[#allocation11 + $0xa3c] sm:$0xff]
    %v4224 = vld [vmem:[#allocation11 + $0xa44] sm:$0xf]
    %v4225 = vld [vmem:[#allocation11 + $0xa48] sm:$0xff]
    %v4226 = vld [vmem:[#allocation11 + $0xa50] sm:$0xff]
    %v4227 = vld [vmem:[#allocation11 + $0xa58] sm:$0xff]
    %v4228 = vld [vmem:[#allocation11 + $0xa60] sm:$0xf]
    %v4229 = vld [vmem:[#allocation11 + $0xa64] sm:$0xff]
    %v4230 = vld [vmem:[#allocation11 + $0xa6c] sm:$0xff]
    %v4231 = vld [vmem:[#allocation11 + $0xa74] sm:$0xff]
    %v4232 = vld [vmem:[#allocation11 + $0xa7c] sm:$0xf]
    %v4233 = vld [vmem:[#allocation11 + $0xa80] sm:$0xff]
    %v4234 = vld [vmem:[#allocation11 + $0xa88] sm:$0xff]
    %v4235 = vld [vmem:[#allocation11 + $0xa90] sm:$0xff]
    %v4236 = vld [vmem:[#allocation11 + $0xa98] sm:$0xf]
    %v4237 = vld [vmem:[#allocation11 + $0xa9c] sm:$0xff]
    %v4238 = vld [vmem:[#allocation11 + $0xaa4] sm:$0xff]
    %v4239 = vld [vmem:[#allocation11 + $0xaac] sm:$0xff]
    %v4240 = vld [vmem:[#allocation11 + $0xab4] sm:$0xf]
    %v4241 = vld [vmem:[#allocation11 + $0xab8] sm:$0xff]
    %v4242 = vld [vmem:[#allocation11 + $0xac0] sm:$0xff]
    %v4243 = vld [vmem:[#allocation11 + $0xac8] sm:$0xff]
    %v4244 = vld [vmem:[#allocation11 + $0xad0] sm:$0xf]
    %v4245 = vld [vmem:[#allocation11 + $0xad4] sm:$0xff]
    %v4246 = vld [vmem:[#allocation11 + $0xadc] sm:$0xff]
    %v4247 = vld [vmem:[#allocation11 + $0xae4] sm:$0xff]
    %v4248 = vld [vmem:[#allocation11 + $0xaec] sm:$0xf]
    %v4249 = vld [vmem:[#allocation11 + $0xaf0] sm:$0xff]
    %v4250 = vld [vmem:[#allocation11 + $0xaf8] sm:$0xff]
    %v4251 = vld [vmem:[#allocation11 + $0xb00] sm:$0xff]
    %v4252 = vld [vmem:[#allocation11 + $0xb08] sm:$0xf]
    %v4253 = vld [vmem:[#allocation11 + $0xb0c] sm:$0xff]
    %v4254 = vld [vmem:[#allocation11 + $0xb14] sm:$0xff]
    %v4255 = vld [vmem:[#allocation11 + $0xb1c] sm:$0xff]
    %v4256 = vld [vmem:[#allocation11 + $0xb24] sm:$0xf]
    %v4257 = vld [vmem:[#allocation11 + $0xb28] sm:$0xff]
    %v4258 = vld [vmem:[#allocation11 + $0xb30] sm:$0xff]
    %v4259 = vld [vmem:[#allocation11 + $0xb38] sm:$0xff]
    %v4260 = vld [vmem:[#allocation11 + $0xb40] sm:$0xf]
    %v4261 = vld [vmem:[#allocation11 + $0xb44] sm:$0xff]
    %v4262 = vld [vmem:[#allocation11 + $0xb4c] sm:$0xff]
    %v4263 = vld [vmem:[#allocation11 + $0xb54] sm:$0xff]
    %v4264 = vld [vmem:[#allocation11 + $0xb5c] sm:$0xf]
    %v4265 = vld [vmem:[#allocation11 + $0xb60] sm:$0xff]
    %v4266 = vld [vmem:[#allocation11 + $0xb68] sm:$0xff]
    %v4267 = vld [vmem:[#allocation11 + $0xb70] sm:$0xff]
    %v4268 = vld [vmem:[#allocation11 + $0xb78] sm:$0xf]
    %v4269 = vld [vmem:[#allocation11 + $0xb7c] sm:$0xff]
    %v4270 = vld [vmem:[#allocation11 + $0xb84] sm:$0xff]
    %v4271 = vld [vmem:[#allocation11 + $0xb8c] sm:$0xff]
    %v4272 = vld [vmem:[#allocation11 + $0xb94] sm:$0xf]
    %v4273 = vld [vmem:[#allocation11 + $0xb98] sm:$0xff]
    %v4274 = vld [vmem:[#allocation11 + $0xba0] sm:$0xff]
    %v4275 = vld [vmem:[#allocation11 + $0xba8] sm:$0xff]
    %v4276 = vld [vmem:[#allocation11 + $0xbb0] sm:$0xf]
    %v4277 = vld [vmem:[#allocation11 + $0xbb4] sm:$0xff]
    %v4278 = vld [vmem:[#allocation11 + $0xbbc] sm:$0xff]
    %v4279 = vld [vmem:[#allocation11 + $0xbc4] sm:$0xff]
    %v4280 = vld [vmem:[#allocation11 + $0xbcc] sm:$0xf]
    %v4281 = vld [vmem:[#allocation11 + $0xbd0] sm:$0xff]
    %v4282 = vld [vmem:[#allocation11 + $0xbd8] sm:$0xff]
    %v4283 = vld [vmem:[#allocation11 + $0xbe0] sm:$0xff]
    %v4284 = vld [vmem:[#allocation11 + $0xbe8] sm:$0xf]
    %v4285 = vld [vmem:[#allocation11 + $0xbec] sm:$0xff]
    %v4286 = vld [vmem:[#allocation11 + $0xbf4] sm:$0xff]
    %v4287 = vld [vmem:[#allocation11 + $0xbfc] sm:$0xff]
    %v4288 = vld [vmem:[#allocation11 + $0xc04] sm:$0xf]
    %v4289 = vld [vmem:[#allocation11 + $0xc08] sm:$0xff]
    %v4290 = vld [vmem:[#allocation11 + $0xc10] sm:$0xff]
    %v4291 = vld [vmem:[#allocation11 + $0xc18] sm:$0xff]
    %v4292 = vld [vmem:[#allocation11 + $0xc20] sm:$0xf]
    %v4293 = vld [vmem:[#allocation11 + $0xc24] sm:$0xff]
    %v4294 = vld [vmem:[#allocation11 + $0xc2c] sm:$0xff]
    %v4295 = vld [vmem:[#allocation11 + $0xc34] sm:$0xff]
    %v4296 = vld [vmem:[#allocation11 + $0xc3c] sm:$0xf]
    %v4297 = vld [vmem:[#allocation13] sm:$0xff]
    %v4299 = vlaneseq
    %v4300 = vshrl.u32 %v4299, 7
    %v4301 = vsub.s32 0, %v4300
    %v4302 = vrot.slane %v4297, %v4301
    %v4303 = vlaneseq
    %v4304 = vshrl.u32 %v4303, 7
    %v4305 = vsub.s32 1, %v4304
    %v4306 = vrot.slane %v4297, %v4305
    %v4307 = vlaneseq
    %v4308 = vshrl.u32 %v4307, 7
    %v4309 = vsub.s32 2, %v4308
    %v4310 = vrot.slane %v4297, %v4309
    %v4311 = vlaneseq
    %v4312 = vshrl.u32 %v4311, 7
    %v4313 = vsub.s32 3, %v4312
    %v4314 = vrot.slane %v4297, %v4313
    %v4315 = vlaneseq
    %v4316 = vshrl.u32 %v4315, 7
    %v4317 = vsub.s32 4, %v4316
    %v4318 = vrot.slane %v4297, %v4317
    %v4319 = vlaneseq
    %v4320 = vshrl.u32 %v4319, 7
    %v4321 = vsub.s32 5, %v4320
    %v4322 = vrot.slane %v4297, %v4321
    %v4323 = vlaneseq
    %v4324 = vshrl.u32 %v4323, 7
    %v4325 = vsub.s32 6, %v4324
    %v4326 = vrot.slane %v4297, %v4325
    %v4782 = vunpack.c.l.b16 %v3849
    %v4783 = vunpack.c.h.b16 %v3849
    %v4784 = vunpack.c.l.b16 %v3850
    %v4785 = vunpack.c.h.b16 %v3850
    %v4786 = vunpack.c.l.b16 %v3851
    %v4787 = vunpack.c.h.b16 %v3851
    %v4788 = vunpack.c.l.b16 %v3852
    %v4789 = vunpack.c.l.b16 %v3853
    %v4790 = vunpack.c.h.b16 %v3853
    %v4791 = vunpack.c.l.b16 %v3854
    %v4792 = vunpack.c.h.b16 %v3854
    %v4793 = vunpack.c.l.b16 %v3855
    %v4794 = vunpack.c.h.b16 %v3855
    %v4795 = vunpack.c.l.b16 %v3856
    %v4796 = vunpack.c.l.b16 %v3857
    %v4797 = vunpack.c.h.b16 %v3857
    %v4798 = vunpack.c.l.b16 %v3858
    %v4799 = vunpack.c.h.b16 %v3858
    %v4800 = vunpack.c.l.b16 %v3859
    %v4801 = vunpack.c.h.b16 %v3859
    %v4802 = vunpack.c.l.b16 %v3860
    %v4803 = vunpack.c.l.b16 %v3861
    %v4804 = vunpack.c.h.b16 %v3861
    %v4805 = vunpack.c.l.b16 %v3862
    %v4806 = vunpack.c.h.b16 %v3862
    %v4807 = vunpack.c.l.b16 %v3863
    %v4808 = vunpack.c.h.b16 %v3863
    %v4809 = vunpack.c.l.b16 %v3864
    %v4810 = vunpack.c.l.b16 %v3865
    %v4811 = vunpack.c.h.b16 %v3865
    %v4812 = vunpack.c.l.b16 %v3866
    %v4813 = vunpack.c.h.b16 %v3866
    %v4814 = vunpack.c.l.b16 %v3867
    %v4815 = vunpack.c.h.b16 %v3867
    %v4816 = vunpack.c.l.b16 %v3868
    %v4817 = vunpack.c.l.b16 %v3869
    %v4818 = vunpack.c.h.b16 %v3869
    %v4819 = vunpack.c.l.b16 %v3870
    %v4820 = vunpack.c.h.b16 %v3870
    %v4821 = vunpack.c.l.b16 %v3871
    %v4822 = vunpack.c.h.b16 %v3871
    %v4823 = vunpack.c.l.b16 %v3872
    %v4824 = vunpack.c.l.b16 %v3873
    %v4825 = vunpack.c.h.b16 %v3873
    %v4826 = vunpack.c.l.b16 %v3874
    %v4827 = vunpack.c.h.b16 %v3874
    %v4828 = vunpack.c.l.b16 %v3875
    %v4829 = vunpack.c.h.b16 %v3875
    %v4830 = vunpack.c.l.b16 %v3876
    %v4831 = vunpack.c.l.b16 %v3877
    %v4832 = vunpack.c.h.b16 %v3877
    %v4833 = vunpack.c.l.b16 %v3878
    %v4834 = vunpack.c.h.b16 %v3878
    %v4835 = vunpack.c.l.b16 %v3879
    %v4836 = vunpack.c.h.b16 %v3879
    %v4837 = vunpack.c.l.b16 %v3880
    %v4838 = vunpack.c.l.b16 %v3881
    %v4839 = vunpack.c.h.b16 %v3881
    %v4840 = vunpack.c.l.b16 %v3882
    %v4841 = vunpack.c.h.b16 %v3882
    %v4842 = vunpack.c.l.b16 %v3883
    %v4843 = vunpack.c.h.b16 %v3883
    %v4844 = vunpack.c.l.b16 %v3884
    %v4845 = vunpack.c.l.b16 %v3885
    %v4846 = vunpack.c.h.b16 %v3885
    %v4847 = vunpack.c.l.b16 %v3886
    %v4848 = vunpack.c.h.b16 %v3886
    %v4849 = vunpack.c.l.b16 %v3887
    %v4850 = vunpack.c.h.b16 %v3887
    %v4851 = vunpack.c.l.b16 %v3888
    %v4852 = vunpack.c.l.b16 %v3889
    %v4853 = vunpack.c.h.b16 %v3889
    %v4854 = vunpack.c.l.b16 %v3890
    %v4855 = vunpack.c.h.b16 %v3890
    %v4856 = vunpack.c.l.b16 %v3891
    %v4857 = vunpack.c.h.b16 %v3891
    %v4858 = vunpack.c.l.b16 %v3892
    %v4859 = vunpack.c.l.b16 %v3893
    %v4860 = vunpack.c.h.b16 %v3893
    %v4861 = vunpack.c.l.b16 %v3894
    %v4862 = vunpack.c.h.b16 %v3894
    %v4863 = vunpack.c.l.b16 %v3895
    %v4864 = vunpack.c.h.b16 %v3895
    %v4865 = vunpack.c.l.b16 %v3896
    %v4866 = vunpack.c.l.b16 %v3897
    %v4867 = vunpack.c.h.b16 %v3897
    %v4868 = vunpack.c.l.b16 %v3898
    %v4869 = vunpack.c.h.b16 %v3898
    %v4870 = vunpack.c.l.b16 %v3899
    %v4871 = vunpack.c.h.b16 %v3899
    %v4872 = vunpack.c.l.b16 %v3900
    %v4873 = vunpack.c.l.b16 %v3901
    %v4874 = vunpack.c.h.b16 %v3901
    %v4875 = vunpack.c.l.b16 %v3902
    %v4876 = vunpack.c.h.b16 %v3902
    %v4877 = vunpack.c.l.b16 %v3903
    %v4878 = vunpack.c.h.b16 %v3903
    %v4879 = vunpack.c.l.b16 %v3904
    %v4880 = vunpack.c.l.b16 %v3905
    %v4881 = vunpack.c.h.b16 %v3905
    %v4882 = vunpack.c.l.b16 %v3906
    %v4883 = vunpack.c.h.b16 %v3906
    %v4884 = vunpack.c.l.b16 %v3907
    %v4885 = vunpack.c.h.b16 %v3907
    %v4886 = vunpack.c.l.b16 %v3908
    %v4887 = vunpack.c.l.b16 %v3909
    %v4888 = vunpack.c.h.b16 %v3909
    %v4889 = vunpack.c.l.b16 %v3910
    %v4890 = vunpack.c.h.b16 %v3910
    %v4891 = vunpack.c.l.b16 %v3911
    %v4892 = vunpack.c.h.b16 %v3911
    %v4893 = vunpack.c.l.b16 %v3912
    %v4894 = vunpack.c.l.b16 %v3913
    %v4895 = vunpack.c.h.b16 %v3913
    %v4896 = vunpack.c.l.b16 %v3914
    %v4897 = vunpack.c.h.b16 %v3914
    %v4898 = vunpack.c.l.b16 %v3915
    %v4899 = vunpack.c.h.b16 %v3915
    %v4900 = vunpack.c.l.b16 %v3916
    %v4901 = vunpack.c.l.b16 %v3917
    %v4902 = vunpack.c.h.b16 %v3917
    %v4903 = vunpack.c.l.b16 %v3918
    %v4904 = vunpack.c.h.b16 %v3918
    %v4905 = vunpack.c.l.b16 %v3919
    %v4906 = vunpack.c.h.b16 %v3919
    %v4907 = vunpack.c.l.b16 %v3920
    %v4908 = vunpack.c.l.b16 %v3921
    %v4909 = vunpack.c.h.b16 %v3921
    %v4910 = vunpack.c.l.b16 %v3922
    %v4911 = vunpack.c.h.b16 %v3922
    %v4912 = vunpack.c.l.b16 %v3923
    %v4913 = vunpack.c.h.b16 %v3923
    %v4914 = vunpack.c.l.b16 %v3924
    %v4915 = vunpack.c.l.b16 %v3925
    %v4916 = vunpack.c.h.b16 %v3925
    %v4917 = vunpack.c.l.b16 %v3926
    %v4918 = vunpack.c.h.b16 %v3926
    %v4919 = vunpack.c.l.b16 %v3927
    %v4920 = vunpack.c.h.b16 %v3927
    %v4921 = vunpack.c.l.b16 %v3928
    %v4922 = vunpack.c.l.b16 %v3929
    %v4923 = vunpack.c.h.b16 %v3929
    %v4924 = vunpack.c.l.b16 %v3930
    %v4925 = vunpack.c.h.b16 %v3930
    %v4926 = vunpack.c.l.b16 %v3931
    %v4927 = vunpack.c.h.b16 %v3931
    %v4928 = vunpack.c.l.b16 %v3932
    %v4929 = vunpack.c.l.b16 %v3933
    %v4930 = vunpack.c.h.b16 %v3933
    %v4931 = vunpack.c.l.b16 %v3934
    %v4932 = vunpack.c.h.b16 %v3934
    %v4933 = vunpack.c.l.b16 %v3935
    %v4934 = vunpack.c.h.b16 %v3935
    %v4935 = vunpack.c.l.b16 %v3936
    %v4936 = vunpack.c.l.b16 %v3937
    %v4937 = vunpack.c.h.b16 %v3937
    %v4938 = vunpack.c.l.b16 %v3938
    %v4939 = vunpack.c.h.b16 %v3938
    %v4940 = vunpack.c.l.b16 %v3939
    %v4941 = vunpack.c.h.b16 %v3939
    %v4942 = vunpack.c.l.b16 %v3940
    %v4943 = vunpack.c.l.b16 %v3941
    %v4944 = vunpack.c.h.b16 %v3941
    %v4945 = vunpack.c.l.b16 %v3942
    %v4946 = vunpack.c.h.b16 %v3942
    %v4947 = vunpack.c.l.b16 %v3943
    %v4948 = vunpack.c.h.b16 %v3943
    %v4949 = vunpack.c.l.b16 %v3944
    %v4950 = vunpack.c.l.b16 %v3945
    %v4951 = vunpack.c.h.b16 %v3945
    %v4952 = vunpack.c.l.b16 %v3946
    %v4953 = vunpack.c.h.b16 %v3946
    %v4954 = vunpack.c.l.b16 %v3947
    %v4955 = vunpack.c.h.b16 %v3947
    %v4956 = vunpack.c.l.b16 %v3948
    %v4957 = vunpack.c.l.b16 %v3949
    %v4958 = vunpack.c.h.b16 %v3949
    %v4959 = vunpack.c.l.b16 %v3950
    %v4960 = vunpack.c.h.b16 %v3950
    %v4961 = vunpack.c.l.b16 %v3951
    %v4962 = vunpack.c.h.b16 %v3951
    %v4963 = vunpack.c.l.b16 %v3952
    %v4964 = vunpack.c.l.b16 %v3953
    %v4965 = vunpack.c.h.b16 %v3953
    %v4966 = vunpack.c.l.b16 %v3954
    %v4967 = vunpack.c.h.b16 %v3954
    %v4968 = vunpack.c.l.b16 %v3955
    %v4969 = vunpack.c.h.b16 %v3955
    %v4970 = vunpack.c.l.b16 %v3956
    %v4971 = vunpack.c.l.b16 %v3957
    %v4972 = vunpack.c.h.b16 %v3957
    %v4973 = vunpack.c.l.b16 %v3958
    %v4974 = vunpack.c.h.b16 %v3958
    %v4975 = vunpack.c.l.b16 %v3959
    %v4976 = vunpack.c.h.b16 %v3959
    %v4977 = vunpack.c.l.b16 %v3960
    %v4978 = vunpack.c.l.b16 %v3961
    %v4979 = vunpack.c.h.b16 %v3961
    %v4980 = vunpack.c.l.b16 %v3962
    %v4981 = vunpack.c.h.b16 %v3962
    %v4982 = vunpack.c.l.b16 %v3963
    %v4983 = vunpack.c.h.b16 %v3963
    %v4984 = vunpack.c.l.b16 %v3964
    %v4985 = vunpack.c.l.b16 %v3965
    %v4986 = vunpack.c.h.b16 %v3965
    %v4987 = vunpack.c.l.b16 %v3966
    %v4988 = vunpack.c.h.b16 %v3966
    %v4989 = vunpack.c.l.b16 %v3967
    %v4990 = vunpack.c.h.b16 %v3967
    %v4991 = vunpack.c.l.b16 %v3968
    %v4992 = vunpack.c.l.b16 %v3969
    %v4993 = vunpack.c.h.b16 %v3969
    %v4994 = vunpack.c.l.b16 %v3970
    %v4995 = vunpack.c.h.b16 %v3970
    %v4996 = vunpack.c.l.b16 %v3971
    %v4997 = vunpack.c.h.b16 %v3971
    %v4998 = vunpack.c.l.b16 %v3972
    %v4999 = vunpack.c.l.b16 %v3973
    %v5000 = vunpack.c.h.b16 %v3973
    %v5001 = vunpack.c.l.b16 %v3974
    %v5002 = vunpack.c.h.b16 %v3974
    %v5003 = vunpack.c.l.b16 %v3975
    %v5004 = vunpack.c.h.b16 %v3975
    %v5005 = vunpack.c.l.b16 %v3976
    %v5006 = vunpack.c.l.b16 %v3977
    %v5007 = vunpack.c.h.b16 %v3977
    %v5008 = vunpack.c.l.b16 %v3978
    %v5009 = vunpack.c.h.b16 %v3978
    %v5010 = vunpack.c.l.b16 %v3979
    %v5011 = vunpack.c.h.b16 %v3979
    %v5012 = vunpack.c.l.b16 %v3980
    %v5013 = vunpack.c.l.b16 %v3981
    %v5014 = vunpack.c.h.b16 %v3981
    %v5015 = vunpack.c.l.b16 %v3982
    %v5016 = vunpack.c.h.b16 %v3982
    %v5017 = vunpack.c.l.b16 %v3983
    %v5018 = vunpack.c.h.b16 %v3983
    %v5019 = vunpack.c.l.b16 %v3984
    %v5020 = vunpack.c.l.b16 %v3985
    %v5021 = vunpack.c.h.b16 %v3985
    %v5022 = vunpack.c.l.b16 %v3986
    %v5023 = vunpack.c.h.b16 %v3986
    %v5024 = vunpack.c.l.b16 %v3987
    %v5025 = vunpack.c.h.b16 %v3987
    %v5026 = vunpack.c.l.b16 %v3988
    %v5027 = vunpack.c.l.b16 %v3989
    %v5028 = vunpack.c.h.b16 %v3989
    %v5029 = vunpack.c.l.b16 %v3990
    %v5030 = vunpack.c.h.b16 %v3990
    %v5031 = vunpack.c.l.b16 %v3991
    %v5032 = vunpack.c.h.b16 %v3991
    %v5033 = vunpack.c.l.b16 %v3992
    %v5034 = vunpack.c.l.b16 %v3993
    %v5035 = vunpack.c.h.b16 %v3993
    %v5036 = vunpack.c.l.b16 %v3994
    %v5037 = vunpack.c.h.b16 %v3994
    %v5038 = vunpack.c.l.b16 %v3995
    %v5039 = vunpack.c.h.b16 %v3995
    %v5040 = vunpack.c.l.b16 %v3996
    %v5041 = vunpack.c.l.b16 %v3997
    %v5042 = vunpack.c.h.b16 %v3997
    %v5043 = vunpack.c.l.b16 %v3998
    %v5044 = vunpack.c.h.b16 %v3998
    %v5045 = vunpack.c.l.b16 %v3999
    %v5046 = vunpack.c.h.b16 %v3999
    %v5047 = vunpack.c.l.b16 %v4000
    %v5048 = vunpack.c.l.b16 %v4001
    %v5049 = vunpack.c.h.b16 %v4001
    %v5050 = vunpack.c.l.b16 %v4002
    %v5051 = vunpack.c.h.b16 %v4002
    %v5052 = vunpack.c.l.b16 %v4003
    %v5053 = vunpack.c.h.b16 %v4003
    %v5054 = vunpack.c.l.b16 %v4004
    %v5055 = vunpack.c.l.b16 %v4005
    %v5056 = vunpack.c.h.b16 %v4005
    %v5057 = vunpack.c.l.b16 %v4006
    %v5058 = vunpack.c.h.b16 %v4006
    %v5059 = vunpack.c.l.b16 %v4007
    %v5060 = vunpack.c.h.b16 %v4007
    %v5061 = vunpack.c.l.b16 %v4008
    %v5062 = vunpack.c.l.b16 %v4009
    %v5063 = vunpack.c.h.b16 %v4009
    %v5064 = vunpack.c.l.b16 %v4010
    %v5065 = vunpack.c.h.b16 %v4010
    %v5066 = vunpack.c.l.b16 %v4011
    %v5067 = vunpack.c.h.b16 %v4011
    %v5068 = vunpack.c.l.b16 %v4012
    %v5069 = vunpack.c.l.b16 %v4013
    %v5070 = vunpack.c.h.b16 %v4013
    %v5071 = vunpack.c.l.b16 %v4014
    %v5072 = vunpack.c.h.b16 %v4014
    %v5073 = vunpack.c.l.b16 %v4015
    %v5074 = vunpack.c.h.b16 %v4015
    %v5075 = vunpack.c.l.b16 %v4016
    %v5076 = vunpack.c.l.b16 %v4017
    %v5077 = vunpack.c.h.b16 %v4017
    %v5078 = vunpack.c.l.b16 %v4018
    %v5079 = vunpack.c.h.b16 %v4018
    %v5080 = vunpack.c.l.b16 %v4019
    %v5081 = vunpack.c.h.b16 %v4019
    %v5082 = vunpack.c.l.b16 %v4020
    %v5083 = vunpack.c.l.b16 %v4021
    %v5084 = vunpack.c.h.b16 %v4021
    %v5085 = vunpack.c.l.b16 %v4022
    %v5086 = vunpack.c.h.b16 %v4022
    %v5087 = vunpack.c.l.b16 %v4023
    %v5088 = vunpack.c.h.b16 %v4023
    %v5089 = vunpack.c.l.b16 %v4024
    %v5090 = vunpack.c.l.b16 %v4025
    %v5091 = vunpack.c.h.b16 %v4025
    %v5092 = vunpack.c.l.b16 %v4026
    %v5093 = vunpack.c.h.b16 %v4026
    %v5094 = vunpack.c.l.b16 %v4027
    %v5095 = vunpack.c.h.b16 %v4027
    %v5096 = vunpack.c.l.b16 %v4028
    %v5097 = vunpack.c.l.b16 %v4029
    %v5098 = vunpack.c.h.b16 %v4029
    %v5099 = vunpack.c.l.b16 %v4030
    %v5100 = vunpack.c.h.b16 %v4030
    %v5101 = vunpack.c.l.b16 %v4031
    %v5102 = vunpack.c.h.b16 %v4031
    %v5103 = vunpack.c.l.b16 %v4032
    %v5104 = vunpack.c.l.b16 %v4033
    %v5105 = vunpack.c.h.b16 %v4033
    %v5106 = vunpack.c.l.b16 %v4034
    %v5107 = vunpack.c.h.b16 %v4034
    %v5108 = vunpack.c.l.b16 %v4035
    %v5109 = vunpack.c.h.b16 %v4035
    %v5110 = vunpack.c.l.b16 %v4036
    %v5111 = vunpack.c.l.b16 %v4037
    %v5112 = vunpack.c.h.b16 %v4037
    %v5113 = vunpack.c.l.b16 %v4038
    %v5114 = vunpack.c.h.b16 %v4038
    %v5115 = vunpack.c.l.b16 %v4039
    %v5116 = vunpack.c.h.b16 %v4039
    %v5117 = vunpack.c.l.b16 %v4040
    %v5118 = vunpack.c.l.b16 %v4041
    %v5119 = vunpack.c.h.b16 %v4041
    %v5120 = vunpack.c.l.b16 %v4042
    %v5121 = vunpack.c.h.b16 %v4042
    %v5122 = vunpack.c.l.b16 %v4043
    %v5123 = vunpack.c.h.b16 %v4043
    %v5124 = vunpack.c.l.b16 %v4044
    %v5125 = vunpack.c.l.b16 %v4045
    %v5126 = vunpack.c.h.b16 %v4045
    %v5127 = vunpack.c.l.b16 %v4046
    %v5128 = vunpack.c.h.b16 %v4046
    %v5129 = vunpack.c.l.b16 %v4047
    %v5130 = vunpack.c.h.b16 %v4047
    %v5131 = vunpack.c.l.b16 %v4048
    %v5132 = vunpack.c.l.b16 %v4049
    %v5133 = vunpack.c.h.b16 %v4049
    %v5134 = vunpack.c.l.b16 %v4050
    %v5135 = vunpack.c.h.b16 %v4050
    %v5136 = vunpack.c.l.b16 %v4051
    %v5137 = vunpack.c.h.b16 %v4051
    %v5138 = vunpack.c.l.b16 %v4052
    %v5139 = vunpack.c.l.b16 %v4053
    %v5140 = vunpack.c.h.b16 %v4053
    %v5141 = vunpack.c.l.b16 %v4054
    %v5142 = vunpack.c.h.b16 %v4054
    %v5143 = vunpack.c.l.b16 %v4055
    %v5144 = vunpack.c.h.b16 %v4055
    %v5145 = vunpack.c.l.b16 %v4056
    %v5146 = vunpack.c.l.b16 %v4057
    %v5147 = vunpack.c.h.b16 %v4057
    %v5148 = vunpack.c.l.b16 %v4058
    %v5149 = vunpack.c.h.b16 %v4058
    %v5150 = vunpack.c.l.b16 %v4059
    %v5151 = vunpack.c.h.b16 %v4059
    %v5152 = vunpack.c.l.b16 %v4060
    %v5153 = vunpack.c.l.b16 %v4061
    %v5154 = vunpack.c.h.b16 %v4061
    %v5155 = vunpack.c.l.b16 %v4062
    %v5156 = vunpack.c.h.b16 %v4062
    %v5157 = vunpack.c.l.b16 %v4063
    %v5158 = vunpack.c.h.b16 %v4063
    %v5159 = vunpack.c.l.b16 %v4064
    %v5160 = vunpack.c.l.b16 %v4065
    %v5161 = vunpack.c.h.b16 %v4065
    %v5162 = vunpack.c.l.b16 %v4066
    %v5163 = vunpack.c.h.b16 %v4066
    %v5164 = vunpack.c.l.b16 %v4067
    %v5165 = vunpack.c.h.b16 %v4067
    %v5166 = vunpack.c.l.b16 %v4068
    %v5167 = vunpack.c.l.b16 %v4069
    %v5168 = vunpack.c.h.b16 %v4069
    %v5169 = vunpack.c.l.b16 %v4070
    %v5170 = vunpack.c.h.b16 %v4070
    %v5171 = vunpack.c.l.b16 %v4071
    %v5172 = vunpack.c.h.b16 %v4071
    %v5173 = vunpack.c.l.b16 %v4072
    %v5174 = vunpack.c.l.b16 %v4073
    %v5175 = vunpack.c.h.b16 %v4073
    %v5176 = vunpack.c.l.b16 %v4074
    %v5177 = vunpack.c.h.b16 %v4074
    %v5178 = vunpack.c.l.b16 %v4075
    %v5179 = vunpack.c.h.b16 %v4075
    %v5180 = vunpack.c.l.b16 %v4076
    %v5181 = vunpack.c.l.b16 %v4077
    %v5182 = vunpack.c.h.b16 %v4077
    %v5183 = vunpack.c.l.b16 %v4078
    %v5184 = vunpack.c.h.b16 %v4078
    %v5185 = vunpack.c.l.b16 %v4079
    %v5186 = vunpack.c.h.b16 %v4079
    %v5187 = vunpack.c.l.b16 %v4080
    %v5188 = vunpack.c.l.b16 %v4081
    %v5189 = vunpack.c.h.b16 %v4081
    %v5190 = vunpack.c.l.b16 %v4082
    %v5191 = vunpack.c.h.b16 %v4082
    %v5192 = vunpack.c.l.b16 %v4083
    %v5193 = vunpack.c.h.b16 %v4083
    %v5194 = vunpack.c.l.b16 %v4084
    %v5195 = vunpack.c.l.b16 %v4085
    %v5196 = vunpack.c.h.b16 %v4085
    %v5197 = vunpack.c.l.b16 %v4086
    %v5198 = vunpack.c.h.b16 %v4086
    %v5199 = vunpack.c.l.b16 %v4087
    %v5200 = vunpack.c.h.b16 %v4087
    %v5201 = vunpack.c.l.b16 %v4088
    %v5202 = vunpack.c.l.b16 %v4089
    %v5203 = vunpack.c.h.b16 %v4089
    %v5204 = vunpack.c.l.b16 %v4090
    %v5205 = vunpack.c.h.b16 %v4090
    %v5206 = vunpack.c.l.b16 %v4091
    %v5207 = vunpack.c.h.b16 %v4091
    %v5208 = vunpack.c.l.b16 %v4092
    %v5209 = vunpack.c.l.b16 %v4093
    %v5210 = vunpack.c.h.b16 %v4093
    %v5211 = vunpack.c.l.b16 %v4094
    %v5212 = vunpack.c.h.b16 %v4094
    %v5213 = vunpack.c.l.b16 %v4095
    %v5214 = vunpack.c.h.b16 %v4095
    %v5215 = vunpack.c.l.b16 %v4096
    %v5216 = vunpack.c.l.b16 %v4097
    %v5217 = vunpack.c.h.b16 %v4097
    %v5218 = vunpack.c.l.b16 %v4098
    %v5219 = vunpack.c.h.b16 %v4098
    %v5220 = vunpack.c.l.b16 %v4099
    %v5221 = vunpack.c.h.b16 %v4099
    %v5222 = vunpack.c.l.b16 %v4100
    %v5223 = vunpack.c.l.b16 %v4101
    %v5224 = vunpack.c.h.b16 %v4101
    %v5225 = vunpack.c.l.b16 %v4102
    %v5226 = vunpack.c.h.b16 %v4102
    %v5227 = vunpack.c.l.b16 %v4103
    %v5228 = vunpack.c.h.b16 %v4103
    %v5229 = vunpack.c.l.b16 %v4104
    %v5230 = vunpack.c.l.b16 %v4105
    %v5231 = vunpack.c.h.b16 %v4105
    %v5232 = vunpack.c.l.b16 %v4106
    %v5233 = vunpack.c.h.b16 %v4106
    %v5234 = vunpack.c.l.b16 %v4107
    %v5235 = vunpack.c.h.b16 %v4107
    %v5236 = vunpack.c.l.b16 %v4108
    %v5237 = vunpack.c.l.b16 %v4109
    %v5238 = vunpack.c.h.b16 %v4109
    %v5239 = vunpack.c.l.b16 %v4110
    %v5240 = vunpack.c.h.b16 %v4110
    %v5241 = vunpack.c.l.b16 %v4111
    %v5242 = vunpack.c.h.b16 %v4111
    %v5243 = vunpack.c.l.b16 %v4112
    %v5244 = vunpack.c.l.b16 %v4113
    %v5245 = vunpack.c.h.b16 %v4113
    %v5246 = vunpack.c.l.b16 %v4114
    %v5247 = vunpack.c.h.b16 %v4114
    %v5248 = vunpack.c.l.b16 %v4115
    %v5249 = vunpack.c.h.b16 %v4115
    %v5250 = vunpack.c.l.b16 %v4116
    %v5251 = vunpack.c.l.b16 %v4117
    %v5252 = vunpack.c.h.b16 %v4117
    %v5253 = vunpack.c.l.b16 %v4118
    %v5254 = vunpack.c.h.b16 %v4118
    %v5255 = vunpack.c.l.b16 %v4119
    %v5256 = vunpack.c.h.b16 %v4119
    %v5257 = vunpack.c.l.b16 %v4120
    %v5258 = vunpack.c.l.b16 %v4121
    %v5259 = vunpack.c.h.b16 %v4121
    %v5260 = vunpack.c.l.b16 %v4122
    %v5261 = vunpack.c.h.b16 %v4122
    %v5262 = vunpack.c.l.b16 %v4123
    %v5263 = vunpack.c.h.b16 %v4123
    %v5264 = vunpack.c.l.b16 %v4124
    %v5265 = vunpack.c.l.b16 %v4125
    %v5266 = vunpack.c.h.b16 %v4125
    %v5267 = vunpack.c.l.b16 %v4126
    %v5268 = vunpack.c.h.b16 %v4126
    %v5269 = vunpack.c.l.b16 %v4127
    %v5270 = vunpack.c.h.b16 %v4127
    %v5271 = vunpack.c.l.b16 %v4128
    %v5272 = vunpack.c.l.b16 %v4129
    %v5273 = vunpack.c.h.b16 %v4129
    %v5274 = vunpack.c.l.b16 %v4130
    %v5275 = vunpack.c.h.b16 %v4130
    %v5276 = vunpack.c.l.b16 %v4131
    %v5277 = vunpack.c.h.b16 %v4131
    %v5278 = vunpack.c.l.b16 %v4132
    %v5279 = vunpack.c.l.b16 %v4133
    %v5280 = vunpack.c.h.b16 %v4133
    %v5281 = vunpack.c.l.b16 %v4134
    %v5282 = vunpack.c.h.b16 %v4134
    %v5283 = vunpack.c.l.b16 %v4135
    %v5284 = vunpack.c.h.b16 %v4135
    %v5285 = vunpack.c.l.b16 %v4136
    %v5286 = vunpack.c.l.b16 %v4137
    %v5287 = vunpack.c.h.b16 %v4137
    %v5288 = vunpack.c.l.b16 %v4138
    %v5289 = vunpack.c.h.b16 %v4138
    %v5290 = vunpack.c.l.b16 %v4139
    %v5291 = vunpack.c.h.b16 %v4139
    %v5292 = vunpack.c.l.b16 %v4140
    %v5293 = vunpack.c.l.b16 %v4141
    %v5294 = vunpack.c.h.b16 %v4141
    %v5295 = vunpack.c.l.b16 %v4142
    %v5296 = vunpack.c.h.b16 %v4142
    %v5297 = vunpack.c.l.b16 %v4143
    %v5298 = vunpack.c.h.b16 %v4143
    %v5299 = vunpack.c.l.b16 %v4144
    %v5300 = vunpack.c.l.b16 %v4145
    %v5301 = vunpack.c.h.b16 %v4145
    %v5302 = vunpack.c.l.b16 %v4146
    %v5303 = vunpack.c.h.b16 %v4146
    %v5304 = vunpack.c.l.b16 %v4147
    %v5305 = vunpack.c.h.b16 %v4147
    %v5306 = vunpack.c.l.b16 %v4148
    %v5307 = vunpack.c.l.b16 %v4149
    %v5308 = vunpack.c.h.b16 %v4149
    %v5309 = vunpack.c.l.b16 %v4150
    %v5310 = vunpack.c.h.b16 %v4150
    %v5311 = vunpack.c.l.b16 %v4151
    %v5312 = vunpack.c.h.b16 %v4151
    %v5313 = vunpack.c.l.b16 %v4152
    %v5314 = vunpack.c.l.b16 %v4153
    %v5315 = vunpack.c.h.b16 %v4153
    %v5316 = vunpack.c.l.b16 %v4154
    %v5317 = vunpack.c.h.b16 %v4154
    %v5318 = vunpack.c.l.b16 %v4155
    %v5319 = vunpack.c.h.b16 %v4155
    %v5320 = vunpack.c.l.b16 %v4156
    %v5321 = vunpack.c.l.b16 %v4157
    %v5322 = vunpack.c.h.b16 %v4157
    %v5323 = vunpack.c.l.b16 %v4158
    %v5324 = vunpack.c.h.b16 %v4158
    %v5325 = vunpack.c.l.b16 %v4159
    %v5326 = vunpack.c.h.b16 %v4159
    %v5327 = vunpack.c.l.b16 %v4160
    %v5328 = vunpack.c.l.b16 %v4161
    %v5329 = vunpack.c.h.b16 %v4161
    %v5330 = vunpack.c.l.b16 %v4162
    %v5331 = vunpack.c.h.b16 %v4162
    %v5332 = vunpack.c.l.b16 %v4163
    %v5333 = vunpack.c.h.b16 %v4163
    %v5334 = vunpack.c.l.b16 %v4164
    %v5335 = vunpack.c.l.b16 %v4165
    %v5336 = vunpack.c.h.b16 %v4165
    %v5337 = vunpack.c.l.b16 %v4166
    %v5338 = vunpack.c.h.b16 %v4166
    %v5339 = vunpack.c.l.b16 %v4167
    %v5340 = vunpack.c.h.b16 %v4167
    %v5341 = vunpack.c.l.b16 %v4168
    %v5342 = vunpack.c.l.b16 %v4169
    %v5343 = vunpack.c.h.b16 %v4169
    %v5344 = vunpack.c.l.b16 %v4170
    %v5345 = vunpack.c.h.b16 %v4170
    %v5346 = vunpack.c.l.b16 %v4171
    %v5347 = vunpack.c.h.b16 %v4171
    %v5348 = vunpack.c.l.b16 %v4172
    %v5349 = vunpack.c.l.b16 %v4173
    %v5350 = vunpack.c.h.b16 %v4173
    %v5351 = vunpack.c.l.b16 %v4174
    %v5352 = vunpack.c.h.b16 %v4174
    %v5353 = vunpack.c.l.b16 %v4175
    %v5354 = vunpack.c.h.b16 %v4175
    %v5355 = vunpack.c.l.b16 %v4176
    %v5356 = vunpack.c.l.b16 %v4177
    %v5357 = vunpack.c.h.b16 %v4177
    %v5358 = vunpack.c.l.b16 %v4178
    %v5359 = vunpack.c.h.b16 %v4178
    %v5360 = vunpack.c.l.b16 %v4179
    %v5361 = vunpack.c.h.b16 %v4179
    %v5362 = vunpack.c.l.b16 %v4180
    %v5363 = vunpack.c.l.b16 %v4181
    %v5364 = vunpack.c.h.b16 %v4181
    %v5365 = vunpack.c.l.b16 %v4182
    %v5366 = vunpack.c.h.b16 %v4182
    %v5367 = vunpack.c.l.b16 %v4183
    %v5368 = vunpack.c.h.b16 %v4183
    %v5369 = vunpack.c.l.b16 %v4184
    %v5370 = vunpack.c.l.b16 %v4185
    %v5371 = vunpack.c.h.b16 %v4185
    %v5372 = vunpack.c.l.b16 %v4186
    %v5373 = vunpack.c.h.b16 %v4186
    %v5374 = vunpack.c.l.b16 %v4187
    %v5375 = vunpack.c.h.b16 %v4187
    %v5376 = vunpack.c.l.b16 %v4188
    %v5377 = vunpack.c.l.b16 %v4189
    %v5378 = vunpack.c.h.b16 %v4189
    %v5379 = vunpack.c.l.b16 %v4190
    %v5380 = vunpack.c.h.b16 %v4190
    %v5381 = vunpack.c.l.b16 %v4191
    %v5382 = vunpack.c.h.b16 %v4191
    %v5383 = vunpack.c.l.b16 %v4192
    %v5384 = vunpack.c.l.b16 %v4193
    %v5385 = vunpack.c.h.b16 %v4193
    %v5386 = vunpack.c.l.b16 %v4194
    %v5387 = vunpack.c.h.b16 %v4194
    %v5388 = vunpack.c.l.b16 %v4195
    %v5389 = vunpack.c.h.b16 %v4195
    %v5390 = vunpack.c.l.b16 %v4196
    %v5391 = vunpack.c.l.b16 %v4197
    %v5392 = vunpack.c.h.b16 %v4197
    %v5393 = vunpack.c.l.b16 %v4198
    %v5394 = vunpack.c.h.b16 %v4198
    %v5395 = vunpack.c.l.b16 %v4199
    %v5396 = vunpack.c.h.b16 %v4199
    %v5397 = vunpack.c.l.b16 %v4200
    %v5398 = vunpack.c.l.b16 %v4201
    %v5399 = vunpack.c.h.b16 %v4201
    %v5400 = vunpack.c.l.b16 %v4202
    %v5401 = vunpack.c.h.b16 %v4202
    %v5402 = vunpack.c.l.b16 %v4203
    %v5403 = vunpack.c.h.b16 %v4203
    %v5404 = vunpack.c.l.b16 %v4204
    %v5405 = vunpack.c.l.b16 %v4205
    %v5406 = vunpack.c.h.b16 %v4205
    %v5407 = vunpack.c.l.b16 %v4206
    %v5408 = vunpack.c.h.b16 %v4206
    %v5409 = vunpack.c.l.b16 %v4207
    %v5410 = vunpack.c.h.b16 %v4207
    %v5411 = vunpack.c.l.b16 %v4208
    %v5412 = vunpack.c.l.b16 %v4209
    %v5413 = vunpack.c.h.b16 %v4209
    %v5414 = vunpack.c.l.b16 %v4210
    %v5415 = vunpack.c.h.b16 %v4210
    %v5416 = vunpack.c.l.b16 %v4211
    %v5417 = vunpack.c.h.b16 %v4211
    %v5418 = vunpack.c.l.b16 %v4212
    %v5419 = vunpack.c.l.b16 %v4213
    %v5420 = vunpack.c.h.b16 %v4213
    %v5421 = vunpack.c.l.b16 %v4214
    %v5422 = vunpack.c.h.b16 %v4214
    %v5423 = vunpack.c.l.b16 %v4215
    %v5424 = vunpack.c.h.b16 %v4215
    %v5425 = vunpack.c.l.b16 %v4216
    %v5426 = vunpack.c.l.b16 %v4217
    %v5427 = vunpack.c.h.b16 %v4217
    %v5428 = vunpack.c.l.b16 %v4218
    %v5429 = vunpack.c.h.b16 %v4218
    %v5430 = vunpack.c.l.b16 %v4219
    %v5431 = vunpack.c.h.b16 %v4219
    %v5432 = vunpack.c.l.b16 %v4220
    %v5433 = vunpack.c.l.b16 %v4221
    %v5434 = vunpack.c.h.b16 %v4221
    %v5435 = vunpack.c.l.b16 %v4222
    %v5436 = vunpack.c.h.b16 %v4222
    %v5437 = vunpack.c.l.b16 %v4223
    %v5438 = vunpack.c.h.b16 %v4223
    %v5439 = vunpack.c.l.b16 %v4224
    %v5440 = vunpack.c.l.b16 %v4225
    %v5441 = vunpack.c.h.b16 %v4225
    %v5442 = vunpack.c.l.b16 %v4226
    %v5443 = vunpack.c.h.b16 %v4226
    %v5444 = vunpack.c.l.b16 %v4227
    %v5445 = vunpack.c.h.b16 %v4227
    %v5446 = vunpack.c.l.b16 %v4228
    %v5447 = vunpack.c.l.b16 %v4229
    %v5448 = vunpack.c.h.b16 %v4229
    %v5449 = vunpack.c.l.b16 %v4230
    %v5450 = vunpack.c.h.b16 %v4230
    %v5451 = vunpack.c.l.b16 %v4231
    %v5452 = vunpack.c.h.b16 %v4231
    %v5453 = vunpack.c.l.b16 %v4232
    %v5454 = vunpack.c.l.b16 %v4233
    %v5455 = vunpack.c.h.b16 %v4233
    %v5456 = vunpack.c.l.b16 %v4234
    %v5457 = vunpack.c.h.b16 %v4234
    %v5458 = vunpack.c.l.b16 %v4235
    %v5459 = vunpack.c.h.b16 %v4235
    %v5460 = vunpack.c.l.b16 %v4236
    %v5461 = vunpack.c.l.b16 %v4237
    %v5462 = vunpack.c.h.b16 %v4237
    %v5463 = vunpack.c.l.b16 %v4238
    %v5464 = vunpack.c.h.b16 %v4238
    %v5465 = vunpack.c.l.b16 %v4239
    %v5466 = vunpack.c.h.b16 %v4239
    %v5467 = vunpack.c.l.b16 %v4240
    %v5468 = vunpack.c.l.b16 %v4241
    %v5469 = vunpack.c.h.b16 %v4241
    %v5470 = vunpack.c.l.b16 %v4242
    %v5471 = vunpack.c.h.b16 %v4242
    %v5472 = vunpack.c.l.b16 %v4243
    %v5473 = vunpack.c.h.b16 %v4243
    %v5474 = vunpack.c.l.b16 %v4244
    %v5475 = vunpack.c.l.b16 %v4245
    %v5476 = vunpack.c.h.b16 %v4245
    %v5477 = vunpack.c.l.b16 %v4246
    %v5478 = vunpack.c.h.b16 %v4246
    %v5479 = vunpack.c.l.b16 %v4247
    %v5480 = vunpack.c.h.b16 %v4247
    %v5481 = vunpack.c.l.b16 %v4248
    %v5482 = vunpack.c.l.b16 %v4249
    %v5483 = vunpack.c.h.b16 %v4249
    %v5484 = vunpack.c.l.b16 %v4250
    %v5485 = vunpack.c.h.b16 %v4250
    %v5486 = vunpack.c.l.b16 %v4251
    %v5487 = vunpack.c.h.b16 %v4251
    %v5488 = vunpack.c.l.b16 %v4252
    %v5489 = vunpack.c.l.b16 %v4253
    %v5490 = vunpack.c.h.b16 %v4253
    %v5491 = vunpack.c.l.b16 %v4254
    %v5492 = vunpack.c.h.b16 %v4254
    %v5493 = vunpack.c.l.b16 %v4255
    %v5494 = vunpack.c.h.b16 %v4255
    %v5495 = vunpack.c.l.b16 %v4256
    %v5496 = vunpack.c.l.b16 %v4257
    %v5497 = vunpack.c.h.b16 %v4257
    %v5498 = vunpack.c.l.b16 %v4258
    %v5499 = vunpack.c.h.b16 %v4258
    %v5500 = vunpack.c.l.b16 %v4259
    %v5501 = vunpack.c.h.b16 %v4259
    %v5502 = vunpack.c.l.b16 %v4260
    %v5503 = vunpack.c.l.b16 %v4261
    %v5504 = vunpack.c.h.b16 %v4261
    %v5505 = vunpack.c.l.b16 %v4262
    %v5506 = vunpack.c.h.b16 %v4262
    %v5507 = vunpack.c.l.b16 %v4263
    %v5508 = vunpack.c.h.b16 %v4263
    %v5509 = vunpack.c.l.b16 %v4264
    %v5510 = vunpack.c.l.b16 %v4265
    %v5511 = vunpack.c.h.b16 %v4265
    %v5512 = vunpack.c.l.b16 %v4266
    %v5513 = vunpack.c.h.b16 %v4266
    %v5514 = vunpack.c.l.b16 %v4267
    %v5515 = vunpack.c.h.b16 %v4267
    %v5516 = vunpack.c.l.b16 %v4268
    %v5517 = vunpack.c.l.b16 %v4269
    %v5518 = vunpack.c.h.b16 %v4269
    %v5519 = vunpack.c.l.b16 %v4270
    %v5520 = vunpack.c.h.b16 %v4270
    %v5521 = vunpack.c.l.b16 %v4271
    %v5522 = vunpack.c.h.b16 %v4271
    %v5523 = vunpack.c.l.b16 %v4272
    %v5524 = vunpack.c.l.b16 %v4273
    %v5525 = vunpack.c.h.b16 %v4273
    %v5526 = vunpack.c.l.b16 %v4274
    %v5527 = vunpack.c.h.b16 %v4274
    %v5528 = vunpack.c.l.b16 %v4275
    %v5529 = vunpack.c.h.b16 %v4275
    %v5530 = vunpack.c.l.b16 %v4276
    %v5531 = vunpack.c.l.b16 %v4277
    %v5532 = vunpack.c.h.b16 %v4277
    %v5533 = vunpack.c.l.b16 %v4278
    %v5534 = vunpack.c.h.b16 %v4278
    %v5535 = vunpack.c.l.b16 %v4279
    %v5536 = vunpack.c.h.b16 %v4279
    %v5537 = vunpack.c.l.b16 %v4280
    %v5538 = vunpack.c.l.b16 %v4281
    %v5539 = vunpack.c.h.b16 %v4281
    %v5540 = vunpack.c.l.b16 %v4282
    %v5541 = vunpack.c.h.b16 %v4282
    %v5542 = vunpack.c.l.b16 %v4283
    %v5543 = vunpack.c.h.b16 %v4283
    %v5544 = vunpack.c.l.b16 %v4284
    %v5545 = vunpack.c.l.b16 %v4285
    %v5546 = vunpack.c.h.b16 %v4285
    %v5547 = vunpack.c.l.b16 %v4286
    %v5548 = vunpack.c.h.b16 %v4286
    %v5549 = vunpack.c.l.b16 %v4287
    %v5550 = vunpack.c.h.b16 %v4287
    %v5551 = vunpack.c.l.b16 %v4288
    %v5552 = vunpack.c.l.b16 %v4289
    %v5553 = vunpack.c.h.b16 %v4289
    %v5554 = vunpack.c.l.b16 %v4290
    %v5555 = vunpack.c.h.b16 %v4290
    %v5556 = vunpack.c.l.b16 %v4291
    %v5557 = vunpack.c.h.b16 %v4291
    %v5558 = vunpack.c.l.b16 %v4292
    %v5559 = vunpack.c.l.b16 %v4293
    %v5560 = vunpack.c.h.b16 %v4293
    %v5561 = vunpack.c.l.b16 %v4294
    %v5562 = vunpack.c.h.b16 %v4294
    %v5563 = vunpack.c.l.b16 %v4295
    %v5564 = vunpack.c.h.b16 %v4295
    %v5565 = vunpack.c.l.b16 %v4296
    %v5566 = vpack.c.b16 %v4789, %v4782
    %v5567 = vpack.c.b16 %v4790, %v4783
    %v5568 = vpack.c.b16 %v4791, %v4784
    %v5569 = vpack.c.b16 %v4792, %v4785
    %v5570 = vpack.c.b16 %v4793, %v4786
    %v5571 = vpack.c.b16 %v4794, %v4787
    %v5572 = vpack.c.b16 %v4795, %v4788
    %v5573 = vpack.c.b16 %v4803, %v4796
    %v5574 = vpack.c.b16 %v4804, %v4797
    %v5575 = vpack.c.b16 %v4805, %v4798
    %v5576 = vpack.c.b16 %v4806, %v4799
    %v5577 = vpack.c.b16 %v4807, %v4800
    %v5578 = vpack.c.b16 %v4808, %v4801
    %v5579 = vpack.c.b16 %v4809, %v4802
    %v5580 = vpack.c.b16 %v4817, %v4810
    %v5581 = vpack.c.b16 %v4818, %v4811
    %v5582 = vpack.c.b16 %v4819, %v4812
    %v5583 = vpack.c.b16 %v4820, %v4813
    %v5584 = vpack.c.b16 %v4821, %v4814
    %v5585 = vpack.c.b16 %v4822, %v4815
    %v5586 = vpack.c.b16 %v4823, %v4816
    %v5587 = vpack.c.b16 %v4831, %v4824
    %v5588 = vpack.c.b16 %v4832, %v4825
    %v5589 = vpack.c.b16 %v4833, %v4826
    %v5590 = vpack.c.b16 %v4834, %v4827
    %v5591 = vpack.c.b16 %v4835, %v4828
    %v5592 = vpack.c.b16 %v4836, %v4829
    %v5593 = vpack.c.b16 %v4837, %v4830
    %v5594 = vpack.c.b16 %v4845, %v4838
    %v5595 = vpack.c.b16 %v4846, %v4839
    %v5596 = vpack.c.b16 %v4847, %v4840
    %v5597 = vpack.c.b16 %v4848, %v4841
    %v5598 = vpack.c.b16 %v4849, %v4842
    %v5599 = vpack.c.b16 %v4850, %v4843
    %v5600 = vpack.c.b16 %v4851, %v4844
    %v5601 = vpack.c.b16 %v4859, %v4852
    %v5602 = vpack.c.b16 %v4860, %v4853
    %v5603 = vpack.c.b16 %v4861, %v4854
    %v5604 = vpack.c.b16 %v4862, %v4855
    %v5605 = vpack.c.b16 %v4863, %v4856
    %v5606 = vpack.c.b16 %v4864, %v4857
    %v5607 = vpack.c.b16 %v4865, %v4858
    %v5608 = vpack.c.b16 %v4873, %v4866
    %v5609 = vpack.c.b16 %v4874, %v4867
    %v5610 = vpack.c.b16 %v4875, %v4868
    %v5611 = vpack.c.b16 %v4876, %v4869
    %v5612 = vpack.c.b16 %v4877, %v4870
    %v5613 = vpack.c.b16 %v4878, %v4871
    %v5614 = vpack.c.b16 %v4879, %v4872
    %v5615 = vpack.c.b16 %v4887, %v4880
    %v5616 = vpack.c.b16 %v4888, %v4881
    %v5617 = vpack.c.b16 %v4889, %v4882
    %v5618 = vpack.c.b16 %v4890, %v4883
    %v5619 = vpack.c.b16 %v4891, %v4884
    %v5620 = vpack.c.b16 %v4892, %v4885
    %v5621 = vpack.c.b16 %v4893, %v4886
    %v5622 = vpack.c.b16 %v4901, %v4894
    %v5623 = vpack.c.b16 %v4902, %v4895
    %v5624 = vpack.c.b16 %v4903, %v4896
    %v5625 = vpack.c.b16 %v4904, %v4897
    %v5626 = vpack.c.b16 %v4905, %v4898
    %v5627 = vpack.c.b16 %v4906, %v4899
    %v5628 = vpack.c.b16 %v4907, %v4900
    %v5629 = vpack.c.b16 %v4915, %v4908
    %v5630 = vpack.c.b16 %v4916, %v4909
    %v5631 = vpack.c.b16 %v4917, %v4910
    %v5632 = vpack.c.b16 %v4918, %v4911
    %v5633 = vpack.c.b16 %v4919, %v4912
    %v5634 = vpack.c.b16 %v4920, %v4913
    %v5635 = vpack.c.b16 %v4921, %v4914
    %v5636 = vpack.c.b16 %v4929, %v4922
    %v5637 = vpack.c.b16 %v4930, %v4923
    %v5638 = vpack.c.b16 %v4931, %v4924
    %v5639 = vpack.c.b16 %v4932, %v4925
    %v5640 = vpack.c.b16 %v4933, %v4926
    %v5641 = vpack.c.b16 %v4934, %v4927
    %v5642 = vpack.c.b16 %v4935, %v4928
    %v5643 = vpack.c.b16 %v4943, %v4936
    %v5644 = vpack.c.b16 %v4944, %v4937
    %v5645 = vpack.c.b16 %v4945, %v4938
    %v5646 = vpack.c.b16 %v4946, %v4939
    %v5647 = vpack.c.b16 %v4947, %v4940
    %v5648 = vpack.c.b16 %v4948, %v4941
    %v5649 = vpack.c.b16 %v4949, %v4942
    %v5650 = vpack.c.b16 %v4957, %v4950
    %v5651 = vpack.c.b16 %v4958, %v4951
    %v5652 = vpack.c.b16 %v4959, %v4952
    %v5653 = vpack.c.b16 %v4960, %v4953
    %v5654 = vpack.c.b16 %v4961, %v4954
    %v5655 = vpack.c.b16 %v4962, %v4955
    %v5656 = vpack.c.b16 %v4963, %v4956
    %v5657 = vpack.c.b16 %v4971, %v4964
    %v5658 = vpack.c.b16 %v4972, %v4965
    %v5659 = vpack.c.b16 %v4973, %v4966
    %v5660 = vpack.c.b16 %v4974, %v4967
    %v5661 = vpack.c.b16 %v4975, %v4968
    %v5662 = vpack.c.b16 %v4976, %v4969
    %v5663 = vpack.c.b16 %v4977, %v4970
    %v5664 = vpack.c.b16 %v4985, %v4978
    %v5665 = vpack.c.b16 %v4986, %v4979
    %v5666 = vpack.c.b16 %v4987, %v4980
    %v5667 = vpack.c.b16 %v4988, %v4981
    %v5668 = vpack.c.b16 %v4989, %v4982
    %v5669 = vpack.c.b16 %v4990, %v4983
    %v5670 = vpack.c.b16 %v4991, %v4984
    %v5671 = vpack.c.b16 %v4999, %v4992
    %v5672 = vpack.c.b16 %v5000, %v4993
    %v5673 = vpack.c.b16 %v5001, %v4994
    %v5674 = vpack.c.b16 %v5002, %v4995
    %v5675 = vpack.c.b16 %v5003, %v4996
    %v5676 = vpack.c.b16 %v5004, %v4997
    %v5677 = vpack.c.b16 %v5005, %v4998
    %v5678 = vpack.c.b16 %v5013, %v5006
    %v5679 = vpack.c.b16 %v5014, %v5007
    %v5680 = vpack.c.b16 %v5015, %v5008
    %v5681 = vpack.c.b16 %v5016, %v5009
    %v5682 = vpack.c.b16 %v5017, %v5010
    %v5683 = vpack.c.b16 %v5018, %v5011
    %v5684 = vpack.c.b16 %v5019, %v5012
    %v5685 = vpack.c.b16 %v5027, %v5020
    %v5686 = vpack.c.b16 %v5028, %v5021
    %v5687 = vpack.c.b16 %v5029, %v5022
    %v5688 = vpack.c.b16 %v5030, %v5023
    %v5689 = vpack.c.b16 %v5031, %v5024
    %v5690 = vpack.c.b16 %v5032, %v5025
    %v5691 = vpack.c.b16 %v5033, %v5026
    %v5692 = vpack.c.b16 %v5041, %v5034
    %v5693 = vpack.c.b16 %v5042, %v5035
    %v5694 = vpack.c.b16 %v5043, %v5036
    %v5695 = vpack.c.b16 %v5044, %v5037
    %v5696 = vpack.c.b16 %v5045, %v5038
    %v5697 = vpack.c.b16 %v5046, %v5039
    %v5698 = vpack.c.b16 %v5047, %v5040
    %v5699 = vpack.c.b16 %v5055, %v5048
    %v5700 = vpack.c.b16 %v5056, %v5049
    %v5701 = vpack.c.b16 %v5057, %v5050
    %v5702 = vpack.c.b16 %v5058, %v5051
    %v5703 = vpack.c.b16 %v5059, %v5052
    %v5704 = vpack.c.b16 %v5060, %v5053
    %v5705 = vpack.c.b16 %v5061, %v5054
    %v5706 = vpack.c.b16 %v5069, %v5062
    %v5707 = vpack.c.b16 %v5070, %v5063
    %v5708 = vpack.c.b16 %v5071, %v5064
    %v5709 = vpack.c.b16 %v5072, %v5065
    %v5710 = vpack.c.b16 %v5073, %v5066
    %v5711 = vpack.c.b16 %v5074, %v5067
    %v5712 = vpack.c.b16 %v5075, %v5068
    %v5713 = vpack.c.b16 %v5083, %v5076
    %v5714 = vpack.c.b16 %v5084, %v5077
    %v5715 = vpack.c.b16 %v5085, %v5078
    %v5716 = vpack.c.b16 %v5086, %v5079
    %v5717 = vpack.c.b16 %v5087, %v5080
    %v5718 = vpack.c.b16 %v5088, %v5081
    %v5719 = vpack.c.b16 %v5089, %v5082
    %v5720 = vpack.c.b16 %v5097, %v5090
    %v5721 = vpack.c.b16 %v5098, %v5091
    %v5722 = vpack.c.b16 %v5099, %v5092
    %v5723 = vpack.c.b16 %v5100, %v5093
    %v5724 = vpack.c.b16 %v5101, %v5094
    %v5725 = vpack.c.b16 %v5102, %v5095
    %v5726 = vpack.c.b16 %v5103, %v5096
    %v5727 = vpack.c.b16 %v5111, %v5104
    %v5728 = vpack.c.b16 %v5112, %v5105
    %v5729 = vpack.c.b16 %v5113, %v5106
    %v5730 = vpack.c.b16 %v5114, %v5107
    %v5731 = vpack.c.b16 %v5115, %v5108
    %v5732 = vpack.c.b16 %v5116, %v5109
    %v5733 = vpack.c.b16 %v5117, %v5110
    %v5734 = vpack.c.b16 %v5125, %v5118
    %v5735 = vpack.c.b16 %v5126, %v5119
    %v5736 = vpack.c.b16 %v5127, %v5120
    %v5737 = vpack.c.b16 %v5128, %v5121
    %v5738 = vpack.c.b16 %v5129, %v5122
    %v5739 = vpack.c.b16 %v5130, %v5123
    %v5740 = vpack.c.b16 %v5131, %v5124
    %v5741 = vpack.c.b16 %v5139, %v5132
    %v5742 = vpack.c.b16 %v5140, %v5133
    %v5743 = vpack.c.b16 %v5141, %v5134
    %v5744 = vpack.c.b16 %v5142, %v5135
    %v5745 = vpack.c.b16 %v5143, %v5136
    %v5746 = vpack.c.b16 %v5144, %v5137
    %v5747 = vpack.c.b16 %v5145, %v5138
    %v5748 = vpack.c.b16 %v5153, %v5146
    %v5749 = vpack.c.b16 %v5154, %v5147
    %v5750 = vpack.c.b16 %v5155, %v5148
    %v5751 = vpack.c.b16 %v5156, %v5149
    %v5752 = vpack.c.b16 %v5157, %v5150
    %v5753 = vpack.c.b16 %v5158, %v5151
    %v5754 = vpack.c.b16 %v5159, %v5152
    %v5755 = vpack.c.b16 %v5167, %v5160
    %v5756 = vpack.c.b16 %v5168, %v5161
    %v5757 = vpack.c.b16 %v5169, %v5162
    %v5758 = vpack.c.b16 %v5170, %v5163
    %v5759 = vpack.c.b16 %v5171, %v5164
    %v5760 = vpack.c.b16 %v5172, %v5165
    %v5761 = vpack.c.b16 %v5173, %v5166
    %v5762 = vpack.c.b16 %v5181, %v5174
    %v5763 = vpack.c.b16 %v5182, %v5175
    %v5764 = vpack.c.b16 %v5183, %v5176
    %v5765 = vpack.c.b16 %v5184, %v5177
    %v5766 = vpack.c.b16 %v5185, %v5178
    %v5767 = vpack.c.b16 %v5186, %v5179
    %v5768 = vpack.c.b16 %v5187, %v5180
    %v5769 = vpack.c.b16 %v5195, %v5188
    %v5770 = vpack.c.b16 %v5196, %v5189
    %v5771 = vpack.c.b16 %v5197, %v5190
    %v5772 = vpack.c.b16 %v5198, %v5191
    %v5773 = vpack.c.b16 %v5199, %v5192
    %v5774 = vpack.c.b16 %v5200, %v5193
    %v5775 = vpack.c.b16 %v5201, %v5194
    %v5776 = vpack.c.b16 %v5209, %v5202
    %v5777 = vpack.c.b16 %v5210, %v5203
    %v5778 = vpack.c.b16 %v5211, %v5204
    %v5779 = vpack.c.b16 %v5212, %v5205
    %v5780 = vpack.c.b16 %v5213, %v5206
    %v5781 = vpack.c.b16 %v5214, %v5207
    %v5782 = vpack.c.b16 %v5215, %v5208
    %v5783 = vpack.c.b16 %v5223, %v5216
    %v5784 = vpack.c.b16 %v5224, %v5217
    %v5785 = vpack.c.b16 %v5225, %v5218
    %v5786 = vpack.c.b16 %v5226, %v5219
    %v5787 = vpack.c.b16 %v5227, %v5220
    %v5788 = vpack.c.b16 %v5228, %v5221
    %v5789 = vpack.c.b16 %v5229, %v5222
    %v5790 = vpack.c.b16 %v5237, %v5230
    %v5791 = vpack.c.b16 %v5238, %v5231
    %v5792 = vpack.c.b16 %v5239, %v5232
    %v5793 = vpack.c.b16 %v5240, %v5233
    %v5794 = vpack.c.b16 %v5241, %v5234
    %v5795 = vpack.c.b16 %v5242, %v5235
    %v5796 = vpack.c.b16 %v5243, %v5236
    %v5797 = vpack.c.b16 %v5251, %v5244
    %v5798 = vpack.c.b16 %v5252, %v5245
    %v5799 = vpack.c.b16 %v5253, %v5246
    %v5800 = vpack.c.b16 %v5254, %v5247
    %v5801 = vpack.c.b16 %v5255, %v5248
    %v5802 = vpack.c.b16 %v5256, %v5249
    %v5803 = vpack.c.b16 %v5257, %v5250
    %v5804 = vpack.c.b16 %v5265, %v5258
    %v5805 = vpack.c.b16 %v5266, %v5259
    %v5806 = vpack.c.b16 %v5267, %v5260
    %v5807 = vpack.c.b16 %v5268, %v5261
    %v5808 = vpack.c.b16 %v5269, %v5262
    %v5809 = vpack.c.b16 %v5270, %v5263
    %v5810 = vpack.c.b16 %v5271, %v5264
    %v5811 = vpack.c.b16 %v5279, %v5272
    %v5812 = vpack.c.b16 %v5280, %v5273
    %v5813 = vpack.c.b16 %v5281, %v5274
    %v5814 = vpack.c.b16 %v5282, %v5275
    %v5815 = vpack.c.b16 %v5283, %v5276
    %v5816 = vpack.c.b16 %v5284, %v5277
    %v5817 = vpack.c.b16 %v5285, %v5278
    %v5818 = vpack.c.b16 %v5293, %v5286
    %v5819 = vpack.c.b16 %v5294, %v5287
    %v5820 = vpack.c.b16 %v5295, %v5288
    %v5821 = vpack.c.b16 %v5296, %v5289
    %v5822 = vpack.c.b16 %v5297, %v5290
    %v5823 = vpack.c.b16 %v5298, %v5291
    %v5824 = vpack.c.b16 %v5299, %v5292
    %v5825 = vpack.c.b16 %v5307, %v5300
    %v5826 = vpack.c.b16 %v5308, %v5301
    %v5827 = vpack.c.b16 %v5309, %v5302
    %v5828 = vpack.c.b16 %v5310, %v5303
    %v5829 = vpack.c.b16 %v5311, %v5304
    %v5830 = vpack.c.b16 %v5312, %v5305
    %v5831 = vpack.c.b16 %v5313, %v5306
    %v5832 = vpack.c.b16 %v5321, %v5314
    %v5833 = vpack.c.b16 %v5322, %v5315
    %v5834 = vpack.c.b16 %v5323, %v5316
    %v5835 = vpack.c.b16 %v5324, %v5317
    %v5836 = vpack.c.b16 %v5325, %v5318
    %v5837 = vpack.c.b16 %v5326, %v5319
    %v5838 = vpack.c.b16 %v5327, %v5320
    %v5839 = vpack.c.b16 %v5335, %v5328
    %v5840 = vpack.c.b16 %v5336, %v5329
    %v5841 = vpack.c.b16 %v5337, %v5330
    %v5842 = vpack.c.b16 %v5338, %v5331
    %v5843 = vpack.c.b16 %v5339, %v5332
    %v5844 = vpack.c.b16 %v5340, %v5333
    %v5845 = vpack.c.b16 %v5341, %v5334
    %v5846 = vpack.c.b16 %v5349, %v5342
    %v5847 = vpack.c.b16 %v5350, %v5343
    %v5848 = vpack.c.b16 %v5351, %v5344
    %v5849 = vpack.c.b16 %v5352, %v5345
    %v5850 = vpack.c.b16 %v5353, %v5346
    %v5851 = vpack.c.b16 %v5354, %v5347
    %v5852 = vpack.c.b16 %v5355, %v5348
    %v5853 = vpack.c.b16 %v5363, %v5356
    %v5854 = vpack.c.b16 %v5364, %v5357
    %v5855 = vpack.c.b16 %v5365, %v5358
    %v5856 = vpack.c.b16 %v5366, %v5359
    %v5857 = vpack.c.b16 %v5367, %v5360
    %v5858 = vpack.c.b16 %v5368, %v5361
    %v5859 = vpack.c.b16 %v5369, %v5362
    %v5860 = vpack.c.b16 %v5377, %v5370
    %v5861 = vpack.c.b16 %v5378, %v5371
    %v5862 = vpack.c.b16 %v5379, %v5372
    %v5863 = vpack.c.b16 %v5380, %v5373
    %v5864 = vpack.c.b16 %v5381, %v5374
    %v5865 = vpack.c.b16 %v5382, %v5375
    %v5866 = vpack.c.b16 %v5383, %v5376
    %v5867 = vpack.c.b16 %v5391, %v5384
    %v5868 = vpack.c.b16 %v5392, %v5385
    %v5869 = vpack.c.b16 %v5393, %v5386
    %v5870 = vpack.c.b16 %v5394, %v5387
    %v5871 = vpack.c.b16 %v5395, %v5388
    %v5872 = vpack.c.b16 %v5396, %v5389
    %v5873 = vpack.c.b16 %v5397, %v5390
    %v5874 = vpack.c.b16 %v5405, %v5398
    %v5875 = vpack.c.b16 %v5406, %v5399
    %v5876 = vpack.c.b16 %v5407, %v5400
    %v5877 = vpack.c.b16 %v5408, %v5401
    %v5878 = vpack.c.b16 %v5409, %v5402
    %v5879 = vpack.c.b16 %v5410, %v5403
    %v5880 = vpack.c.b16 %v5411, %v5404
    %v5881 = vpack.c.b16 %v5419, %v5412
    %v5882 = vpack.c.b16 %v5420, %v5413
    %v5883 = vpack.c.b16 %v5421, %v5414
    %v5884 = vpack.c.b16 %v5422, %v5415
    %v5885 = vpack.c.b16 %v5423, %v5416
    %v5886 = vpack.c.b16 %v5424, %v5417
    %v5887 = vpack.c.b16 %v5425, %v5418
    %v5888 = vpack.c.b16 %v5433, %v5426
    %v5889 = vpack.c.b16 %v5434, %v5427
    %v5890 = vpack.c.b16 %v5435, %v5428
    %v5891 = vpack.c.b16 %v5436, %v5429
    %v5892 = vpack.c.b16 %v5437, %v5430
    %v5893 = vpack.c.b16 %v5438, %v5431
    %v5894 = vpack.c.b16 %v5439, %v5432
    %v5895 = vpack.c.b16 %v5447, %v5440
    %v5896 = vpack.c.b16 %v5448, %v5441
    %v5897 = vpack.c.b16 %v5449, %v5442
    %v5898 = vpack.c.b16 %v5450, %v5443
    %v5899 = vpack.c.b16 %v5451, %v5444
    %v5900 = vpack.c.b16 %v5452, %v5445
    %v5901 = vpack.c.b16 %v5453, %v5446
    %v5902 = vpack.c.b16 %v5461, %v5454
    %v5903 = vpack.c.b16 %v5462, %v5455
    %v5904 = vpack.c.b16 %v5463, %v5456
    %v5905 = vpack.c.b16 %v5464, %v5457
    %v5906 = vpack.c.b16 %v5465, %v5458
    %v5907 = vpack.c.b16 %v5466, %v5459
    %v5908 = vpack.c.b16 %v5467, %v5460
    %v5909 = vpack.c.b16 %v5475, %v5468
    %v5910 = vpack.c.b16 %v5476, %v5469
    %v5911 = vpack.c.b16 %v5477, %v5470
    %v5912 = vpack.c.b16 %v5478, %v5471
    %v5913 = vpack.c.b16 %v5479, %v5472
    %v5914 = vpack.c.b16 %v5480, %v5473
    %v5915 = vpack.c.b16 %v5481, %v5474
    %v5916 = vpack.c.b16 %v5489, %v5482
    %v5917 = vpack.c.b16 %v5490, %v5483
    %v5918 = vpack.c.b16 %v5491, %v5484
    %v5919 = vpack.c.b16 %v5492, %v5485
    %v5920 = vpack.c.b16 %v5493, %v5486
    %v5921 = vpack.c.b16 %v5494, %v5487
    %v5922 = vpack.c.b16 %v5495, %v5488
    %v5923 = vpack.c.b16 %v5503, %v5496
    %v5924 = vpack.c.b16 %v5504, %v5497
    %v5925 = vpack.c.b16 %v5505, %v5498
    %v5926 = vpack.c.b16 %v5506, %v5499
    %v5927 = vpack.c.b16 %v5507, %v5500
    %v5928 = vpack.c.b16 %v5508, %v5501
    %v5929 = vpack.c.b16 %v5509, %v5502
    %v5930 = vpack.c.b16 %v5517, %v5510
    %v5931 = vpack.c.b16 %v5518, %v5511
    %v5932 = vpack.c.b16 %v5519, %v5512
    %v5933 = vpack.c.b16 %v5520, %v5513
    %v5934 = vpack.c.b16 %v5521, %v5514
    %v5935 = vpack.c.b16 %v5522, %v5515
    %v5936 = vpack.c.b16 %v5523, %v5516
    %v5937 = vpack.c.b16 %v5531, %v5524
    %v5938 = vpack.c.b16 %v5532, %v5525
    %v5939 = vpack.c.b16 %v5533, %v5526
    %v5940 = vpack.c.b16 %v5534, %v5527
    %v5941 = vpack.c.b16 %v5535, %v5528
    %v5942 = vpack.c.b16 %v5536, %v5529
    %v5943 = vpack.c.b16 %v5537, %v5530
    %v5944 = vpack.c.b16 %v5545, %v5538
    %v5945 = vpack.c.b16 %v5546, %v5539
    %v5946 = vpack.c.b16 %v5547, %v5540
    %v5947 = vpack.c.b16 %v5548, %v5541
    %v5948 = vpack.c.b16 %v5549, %v5542
    %v5949 = vpack.c.b16 %v5550, %v5543
    %v5950 = vpack.c.b16 %v5551, %v5544
    %v5951 = vpack.c.b16 %v5559, %v5552
    %v5952 = vpack.c.b16 %v5560, %v5553
    %v5953 = vpack.c.b16 %v5561, %v5554
    %v5954 = vpack.c.b16 %v5562, %v5555
    %v5955 = vpack.c.b16 %v5563, %v5556
    %v5956 = vpack.c.b16 %v5564, %v5557
    %v5957 = vpack.c.b16 %v5565, %v5558
    %6350 = vmatprep.subr.bf16.mxu0 %v5567
    %6351 = vmatpush1.bf16.msra.mxu0 %v5566
    %6352 = vmatprep.subr.bf16.mxu0 %v5574
    %6353 = vmatpush1.bf16.msra.mxu0 %v5573
    %6354 = vmatprep.subr.bf16.mxu0 %v5581
    %6355 = vmatpush1.bf16.msra.mxu0 %v5580
    %6356 = vmatprep.subr.bf16.mxu0 %v5588
    %6357 = vmatpush1.bf16.msra.mxu0 %v5587
    %6358 = vmatprep.subr.bf16.mxu0 %v5595
    %6359 = vmatpush1.bf16.msra.mxu0 %v5594
    %6360 = vmatprep.subr.bf16.mxu0 %v5602
    %6361 = vmatpush1.bf16.msra.mxu0 %v5601
    %6362 = vmatprep.subr.bf16.mxu0 %v5609
    %6363 = vmatpush1.bf16.msra.mxu0 %v5608
    %6364 = vmatprep.subr.bf16.mxu0 %v5616
    %6365 = vmatpush1.bf16.msra.mxu0 %v5615
    %6366 = vmatprep.subr.bf16.mxu0 %v5623
    %6367 = vmatpush1.bf16.msra.mxu0 %v5622
    %6368 = vmatprep.subr.bf16.mxu0 %v5630
    %6369 = vmatpush1.bf16.msra.mxu0 %v5629
    %6370 = vmatprep.subr.bf16.mxu0 %v5637
    %6371 = vmatpush1.bf16.msra.mxu0 %v5636
    %6372 = vmatprep.subr.bf16.mxu0 %v5644
    %6373 = vmatpush1.bf16.msra.mxu0 %v5643
    %6374 = vmatprep.subr.bf16.mxu0 %v5651
    %6375 = vmatpush1.bf16.msra.mxu0 %v5650
    %6376 = vmatprep.subr.bf16.mxu0 %v5658
    %6377 = vmatpush1.bf16.msra.mxu0 %v5657
    %6378 = vmatprep.subr.bf16.mxu0 %v5665
    %6379 = vmatpush1.bf16.msra.mxu0 %v5664
    %6380 = vmatprep.subr.bf16.mxu0 %v5672
    %6381 = vmatpush1.bf16.msra.mxu0 %v5671
    %6382 = vmatprep.mubr.bf16.mxu0 %v3843
    %6383 = vmatmul.mubr.bf16.gmra.mrb[0].mxu0 %v3842
    %v6384 = vpop.f32.mrb[0].mxu0
    %v6385 = vadd.f32 %v4302, %v6384
    %v6386 = vpop.f32.mrb[0].mxu0
    %v6387 = vadd.f32 %v4306, %v6386
    %v6388 = vpop.f32.mrb[0].mxu0
    %v6389 = vpop.f32.mrb[0].mxu0
    %6390 = vdwg.mxu0
    %6391 = vmatprep.subr.bf16.mxu0 %v5679
    %6392 = vmatpush1.bf16.msra.mxu0 %v5678
    %6393 = vmatprep.subr.bf16.mxu0 %v5686
    %6394 = vmatpush1.bf16.msra.mxu0 %v5685
    %6395 = vmatprep.subr.bf16.mxu0 %v5693
    %6396 = vmatpush1.bf16.msra.mxu0 %v5692
    %6397 = vmatprep.subr.bf16.mxu0 %v5700
    %6398 = vmatpush1.bf16.msra.mxu0 %v5699
    %6399 = vmatprep.subr.bf16.mxu0 %v5707
    %6400 = vmatpush1.bf16.msra.mxu0 %v5706
    %6401 = vmatprep.subr.bf16.mxu0 %v5714
    %6402 = vmatpush1.bf16.msra.mxu0 %v5713
    %6403 = vmatprep.subr.bf16.mxu0 %v5721
    %6404 = vmatpush1.bf16.msra.mxu0 %v5720
    %6405 = vmatprep.subr.bf16.mxu0 %v5728
    %6406 = vmatpush1.bf16.msra.mxu0 %v5727
    %6407 = vmatprep.subr.bf16.mxu0 %v5735
    %6408 = vmatpush1.bf16.msra.mxu0 %v5734
    %6409 = vmatprep.subr.bf16.mxu0 %v5742
    %6410 = vmatpush1.bf16.msra.mxu0 %v5741
    %6411 = vmatprep.subr.bf16.mxu0 %v5749
    %6412 = vmatpush1.bf16.msra.mxu0 %v5748
    %6413 = vmatprep.subr.bf16.mxu0 %v5756
    %6414 = vmatpush1.bf16.msra.mxu0 %v5755
    %6415 = vmatprep.subr.bf16.mxu0 %v5763
    %6416 = vmatpush1.bf16.msra.mxu0 %v5762
    %6417 = vmatprep.subr.bf16.mxu0 %v5770
    %6418 = vmatpush1.bf16.msra.mxu0 %v5769
    %6419 = vmatprep.subr.bf16.mxu0 %v5777
    %6420 = vmatpush1.bf16.msra.mxu0 %v5776
    %6421 = vmatprep.subr.bf16.mxu0 %v5784
    %6422 = vmatpush1.bf16.msra.mxu0 %v5783
    %6423 = vmatprep.mubr.bf16.mxu0 %v3845
    %6424 = vmatmul.mubr.bf16.gmra.mrb[0].mxu0 %v3844
    %v6425 = vpop.f32.mrb[0].mxu0
    %v6426 = vadd.f32 %v6385, %v6425
    %v6427 = vpop.f32.mrb[0].mxu0
    %v6428 = vadd.f32 %v6387, %v6427
    %v6429 = vpop.f32.mrb[0].mxu0
    %v6430 = vpop.f32.mrb[0].mxu0
    %6431 = vdwg.mxu0
    %6432 = vmatprep.subr.bf16.mxu0 %v5791
    %6433 = vmatpush1.bf16.msra.mxu0 %v5790
    %6434 = vmatprep.subr.bf16.mxu0 %v5798
    %6435 = vmatpush1.bf16.msra.mxu0 %v5797
    %6436 = vmatprep.subr.bf16.mxu0 %v5805
    %6437 = vmatpush1.bf16.msra.mxu0 %v5804
    %6438 = vmatprep.subr.bf16.mxu0 %v5812
    %6439 = vmatpush1.bf16.msra.mxu0 %v5811
    %6440 = vmatprep.subr.bf16.mxu0 %v5819
    %6441 = vmatpush1.bf16.msra.mxu0 %v5818
    %6442 = vmatprep.subr.bf16.mxu0 %v5826
    %6443 = vmatpush1.bf16.msra.mxu0 %v5825
    %6444 = vmatprep.subr.bf16.mxu0 %v5833
    %6445 = vmatpush1.bf16.msra.mxu0 %v5832
    %6446 = vmatprep.subr.bf16.mxu0 %v5840
    %6447 = vmatpush1.bf16.msra.mxu0 %v5839
    %6448 = vmatprep.subr.bf16.mxu0 %v5847
    %6449 = vmatpush1.bf16.msra.mxu0 %v5846
    %6450 = vmatprep.subr.bf16.mxu0 %v5854
    %6451 = vmatpush1.bf16.msra.mxu0 %v5853
    %6452 = vmatprep.subr.bf16.mxu0 %v5861
    %6453 = vmatpush1.bf16.msra.mxu0 %v5860
    %6454 = vmatprep.subr.bf16.mxu0 %v5868
    %6455 = vmatpush1.bf16.msra.mxu0 %v5867
    %6456 = vmatprep.subr.bf16.mxu0 %v5875
    %6457 = vmatpush1.bf16.msra.mxu0 %v5874
    %6458 = vmatprep.subr.bf16.mxu0 %v5882
    %6459 = vmatpush1.bf16.msra.mxu0 %v5881
    %6460 = vmatprep.subr.bf16.mxu0 %v5889
    %6461 = vmatpush1.bf16.msra.mxu0 %v5888
    %6462 = vmatprep.subr.bf16.mxu0 %v5896
    %6463 = vmatpush1.bf16.msra.mxu0 %v5895
    %6464 = vmatprep.mubr.bf16.mxu0 %v3847
    %6465 = vmatmul.mubr.bf16.gmra.mrb[0].mxu0 %v3846
    %v6466 = vpop.f32.mrb[0].mxu0
    %v6467 = vadd.f32 %v6426, %v6466
    %v6468 = vpop.f32.mrb[0].mxu0
    %v6469 = vadd.f32 %v6428, %v6468
    %v6470 = vpop.f32.mrb[0].mxu0
    %v6471 = vpop.f32.mrb[0].mxu0
    %6472 = vdwg.mxu0
    %6473 = vmatprep.subr.bf16.mxu0 %v5903
    %6474 = vmatpush1.bf16.msra.mxu0 %v5902
    %6475 = vmatprep.subr.bf16.mxu0 %v5910
    %6476 = vmatpush1.bf16.msra.mxu0 %v5909
    %6477 = vmatprep.subr.bf16.mxu0 %v5917
    %6478 = vmatpush1.bf16.msra.mxu0 %v5916
    %6479 = vmatprep.subr.bf16.mxu0 %v5924
    %6480 = vmatpush1.bf16.msra.mxu0 %v5923
    %6481 = vmatprep.subr.bf16.mxu0 %v5931
    %6482 = vmatpush1.bf16.msra.mxu0 %v5930
    %6483 = vmatprep.subr.bf16.mxu0 %v5938
    %6484 = vmatpush1.bf16.msra.mxu0 %v5937
    %6485 = vmatprep.subr.bf16.mxu0 %v5945
    %6486 = vmatpush1.bf16.msra.mxu0 %v5944
    %6487 = vmatprep.subr.bf16.mxu0 %v5952
    %6488 = vmatpush1.bf16.msra.mxu0 %v5951
    %6489 = vmatprep.subr.bf16.mxu0 0
    %6490 = vmatpush1.bf16.msra.mxu0 0
    %6491 = vmatprep.subr.bf16.mxu0 0
    %6492 = vmatpush1.bf16.msra.mxu0 0
    %6493 = vmatprep.subr.bf16.mxu0 0
    %6494 = vmatpush1.bf16.msra.mxu0 0
    %6495 = vmatprep.subr.bf16.mxu0 0
    %6496 = vmatpush1.bf16.msra.mxu0 0
    %6497 = vmatprep.subr.bf16.mxu0 0
    %6498 = vmatpush1.bf16.msra.mxu0 0
    %6499 = vmatprep.subr.bf16.mxu0 0
    %6500 = vmatpush1.bf16.msra.mxu0 0
    %6501 = vmatprep.subr.bf16.mxu0 0
    %6502 = vmatpush1.bf16.msra.mxu0 0
    %6503 = vmatprep.subr.bf16.mxu0 0
    %6504 = vmatpush1.bf16.msra.mxu0 0
    %6505 = vmatprep.mubr.bf16.mxu0 0
    %6506 = vmatmul.mubr.bf16.gmra.mrb[0].mxu0 %v3848
    %v6507 = vpop.f32.mrb[0].mxu0
    %v6508 = vadd.f32 %v6467, %v6507
    %v6509 = vpop.f32.mrb[0].mxu0
    %v6510 = vadd.f32 %v6469, %v6509
    %v6511 = vpop.f32.mrb[0].mxu0
    %v6512 = vpop.f32.mrb[0].mxu0
    %6513 = vdwg.mxu0
    %6514 = vmatprep.subr.bf16.mxu0 %v5569
    %6515 = vmatpush1.bf16.msra.mxu0 %v5568
    %6516 = vmatprep.subr.bf16.mxu0 %v5576
    %6517 = vmatpush1.bf16.msra.mxu0 %v5575
    %6518 = vmatprep.subr.bf16.mxu0 %v5583
    %6519 = vmatpush1.bf16.msra.mxu0 %v5582
    %6520 = vmatprep.subr.bf16.mxu0 %v5590
    %6521 = vmatpush1.bf16.msra.mxu0 %v5589
    %6522 = vmatprep.subr.bf16.mxu0 %v5597
    %6523 = vmatpush1.bf16.msra.mxu0 %v5596
    %6524 = vmatprep.subr.bf16.mxu0 %v5604
    %6525 = vmatpush1.bf16.msra.mxu0 %v5603
    %6526 = vmatprep.subr.bf16.mxu0 %v5611
    %6527 = vmatpush1.bf16.msra.mxu0 %v5610
    %6528 = vmatprep.subr.bf16.mxu0 %v5618
    %6529 = vmatpush1.bf16.msra.mxu0 %v5617
    %6530 = vmatprep.subr.bf16.mxu0 %v5625
    %6531 = vmatpush1.bf16.msra.mxu0 %v5624
    %6532 = vmatprep.subr.bf16.mxu0 %v5632
    %6533 = vmatpush1.bf16.msra.mxu0 %v5631
    %6534 = vmatprep.subr.bf16.mxu0 %v5639
    %6535 = vmatpush1.bf16.msra.mxu0 %v5638
    %6536 = vmatprep.subr.bf16.mxu0 %v5646
    %6537 = vmatpush1.bf16.msra.mxu0 %v5645
    %6538 = vmatprep.subr.bf16.mxu0 %v5653
    %6539 = vmatpush1.bf16.msra.mxu0 %v5652
    %6540 = vmatprep.subr.bf16.mxu0 %v5660
    %6541 = vmatpush1.bf16.msra.mxu0 %v5659
    %6542 = vmatprep.subr.bf16.mxu0 %v5667
    %6543 = vmatpush1.bf16.msra.mxu0 %v5666
    %6544 = vmatprep.subr.bf16.mxu0 %v5674
    %6545 = vmatpush1.bf16.msra.mxu0 %v5673
    %6546 = vmatprep.mubr.bf16.mxu0 %v3843
    %6547 = vmatmul.mubr.bf16.gmra.mrb[0].mxu0 %v3842
    %v6548 = vpop.f32.mrb[0].mxu0
    %v6549 = vadd.f32 %v4310, %v6548
    %v6550 = vpop.f32.mrb[0].mxu0
    %v6551 = vadd.f32 %v4314, %v6550
    %v6552 = vpop.f32.mrb[0].mxu0
    %v6553 = vpop.f32.mrb[0].mxu0
    %6554 = vdwg.mxu0
    %6555 = vmatprep.subr.bf16.mxu0 %v5681
    %6556 = vmatpush1.bf16.msra.mxu0 %v5680
    %6557 = vmatprep.subr.bf16.mxu0 %v5688
    %6558 = vmatpush1.bf16.msra.mxu0 %v5687
    %6559 = vmatprep.subr.bf16.mxu0 %v5695
    %6560 = vmatpush1.bf16.msra.mxu0 %v5694
    %6561 = vmatprep.subr.bf16.mxu0 %v5702
    %6562 = vmatpush1.bf16.msra.mxu0 %v5701
    %6563 = vmatprep.subr.bf16.mxu0 %v5709
    %6564 = vmatpush1.bf16.msra.mxu0 %v5708
    %6565 = vmatprep.subr.bf16.mxu0 %v5716
    %6566 = vmatpush1.bf16.msra.mxu0 %v5715
    %6567 = vmatprep.subr.bf16.mxu0 %v5723
    %6568 = vmatpush1.bf16.msra.mxu0 %v5722
    %6569 = vmatprep.subr.bf16.mxu0 %v5730
    %6570 = vmatpush1.bf16.msra.mxu0 %v5729
    %6571 = vmatprep.subr.bf16.mxu0 %v5737
    %6572 = vmatpush1.bf16.msra.mxu0 %v5736
    %6573 = vmatprep.subr.bf16.mxu0 %v5744
    %6574 = vmatpush1.bf16.msra.mxu0 %v5743
    %6575 = vmatprep.subr.bf16.mxu0 %v5751
    %6576 = vmatpush1.bf16.msra.mxu0 %v5750
    %6577 = vmatprep.subr.bf16.mxu0 %v5758
    %6578 = vmatpush1.bf16.msra.mxu0 %v5757
    %6579 = vmatprep.subr.bf16.mxu0 %v5765
    %6580 = vmatpush1.bf16.msra.mxu0 %v5764
    %6581 = vmatprep.subr.bf16.mxu0 %v5772
    %6582 = vmatpush1.bf16.msra.mxu0 %v5771
    %6583 = vmatprep.subr.bf16.mxu0 %v5779
    %6584 = vmatpush1.bf16.msra.mxu0 %v5778
    %6585 = vmatprep.subr.bf16.mxu0 %v5786
    %6586 = vmatpush1.bf16.msra.mxu0 %v5785
    %6587 = vmatprep.mubr.bf16.mxu0 %v3845
    %6588 = vmatmul.mubr.bf16.gmra.mrb[0].mxu0 %v3844
    %v6589 = vpop.f32.mrb[0].mxu0
    %v6590 = vadd.f32 %v6549, %v6589
    %v6591 = vpop.f32.mrb[0].mxu0
    %v6592 = vadd.f32 %v6551, %v6591
    %v6593 = vpop.f32.mrb[0].mxu0
    %v6594 = vpop.f32.mrb[0].mxu0
    %6595 = vdwg.mxu0
    %6596 = vmatprep.subr.bf16.mxu0 %v5793
    %6597 = vmatpush1.bf16.msra.mxu0 %v5792
    %6598 = vmatprep.subr.bf16.mxu0 %v5800
    %6599 = vmatpush1.bf16.msra.mxu0 %v5799
    %6600 = vmatprep.subr.bf16.mxu0 %v5807
    %6601 = vmatpush1.bf16.msra.mxu0 %v5806
    %6602 = vmatprep.subr.bf16.mxu0 %v5814
    %6603 = vmatpush1.bf16.msra.mxu0 %v5813
    %6604 = vmatprep.subr.bf16.mxu0 %v5821
    %6605 = vmatpush1.bf16.msra.mxu0 %v5820
    %6606 = vmatprep.subr.bf16.mxu0 %v5828
    %6607 = vmatpush1.bf16.msra.mxu0 %v5827
    %6608 = vmatprep.subr.bf16.mxu0 %v5835
    %6609 = vmatpush1.bf16.msra.mxu0 %v5834
    %6610 = vmatprep.subr.bf16.mxu0 %v5842
    %6611 = vmatpush1.bf16.msra.mxu0 %v5841
    %6612 = vmatprep.subr.bf16.mxu0 %v5849
    %6613 = vmatpush1.bf16.msra.mxu0 %v5848
    %6614 = vmatprep.subr.bf16.mxu0 %v5856
    %6615 = vmatpush1.bf16.msra.mxu0 %v5855
    %6616 = vmatprep.subr.bf16.mxu0 %v5863
    %6617 = vmatpush1.bf16.msra.mxu0 %v5862
    %6618 = vmatprep.subr.bf16.mxu0 %v5870
    %6619 = vmatpush1.bf16.msra.mxu0 %v5869
    %6620 = vmatprep.subr.bf16.mxu0 %v5877
    %6621 = vmatpush1.bf16.msra.mxu0 %v5876
    %6622 = vmatprep.subr.bf16.mxu0 %v5884
    %6623 = vmatpush1.bf16.msra.mxu0 %v5883
    %6624 = vmatprep.subr.bf16.mxu0 %v5891
    %6625 = vmatpush1.bf16.msra.mxu0 %v5890
    %6626 = vmatprep.subr.bf16.mxu0 %v5898
    %6627 = vmatpush1.bf16.msra.mxu0 %v5897
    %6628 = vmatprep.mubr.bf16.mxu0 %v3847
    %6629 = vmatmul.mubr.bf16.gmra.mrb[0].mxu0 %v3846
    %v6630 = vpop.f32.mrb[0].mxu0
    %v6631 = vadd.f32 %v6590, %v6630
    %v6632 = vpop.f32.mrb[0].mxu0
    %v6633 = vadd.f32 %v6592, %v6632
    %v6634 = vpop.f32.mrb[0].mxu0
    %v6635 = vpop.f32.mrb[0].mxu0
    %6636 = vdwg.mxu0
    %6637 = vmatprep.subr.bf16.mxu0 %v5905
    %6638 = vmatpush1.bf16.msra.mxu0 %v5904
    %6639 = vmatprep.subr.bf16.mxu0 %v5912
    %6640 = vmatpush1.bf16.msra.mxu0 %v5911
    %6641 = vmatprep.subr.bf16.mxu0 %v5919
    %6642 = vmatpush1.bf16.msra.mxu0 %v5918
    %6643 = vmatprep.subr.bf16.mxu0 %v5926
    %6644 = vmatpush1.bf16.msra.mxu0 %v5925
    %6645 = vmatprep.subr.bf16.mxu0 %v5933
    %6646 = vmatpush1.bf16.msra.mxu0 %v5932
    %6647 = vmatprep.subr.bf16.mxu0 %v5940
    %6648 = vmatpush1.bf16.msra.mxu0 %v5939
    %6649 = vmatprep.subr.bf16.mxu0 %v5947
    %6650 = vmatpush1.bf16.msra.mxu0 %v5946
    %6651 = vmatprep.subr.bf16.mxu0 %v5954
    %6652 = vmatpush1.bf16.msra.mxu0 %v5953
    %6653 = vmatprep.subr.bf16.mxu0 0
    %6654 = vmatpush1.bf16.msra.mxu0 0
    %6655 = vmatprep.subr.bf16.mxu0 0
    %6656 = vmatpush1.bf16.msra.mxu0 0
    %6657 = vmatprep.subr.bf16.mxu0 0
    %6658 = vmatpush1.bf16.msra.mxu0 0
    %6659 = vmatprep.subr.bf16.mxu0 0
    %6660 = vmatpush1.bf16.msra.mxu0 0
    %6661 = vmatprep.subr.bf16.mxu0 0
    %6662 = vmatpush1.bf16.msra.mxu0 0
    %6663 = vmatprep.subr.bf16.mxu0 0
    %6664 = vmatpush1.bf16.msra.mxu0 0
    %6665 = vmatprep.subr.bf16.mxu0 0
    %6666 = vmatpush1.bf16.msra.mxu0 0
    %6667 = vmatprep.subr.bf16.mxu0 0
    %6668 = vmatpush1.bf16.msra.mxu0 0
    %6669 = vmatprep.mubr.bf16.mxu0 0
    %6670 = vmatmul.mubr.bf16.gmra.mrb[0].mxu0 %v3848
    %v6671 = vpop.f32.mrb[0].mxu0
    %v6672 = vadd.f32 %v6631, %v6671
    %v6673 = vpop.f32.mrb[0].mxu0
    %v6674 = vadd.f32 %v6633, %v6673
    %v6675 = vpop.f32.mrb[0].mxu0
    %v6676 = vpop.f32.mrb[0].mxu0
    %6677 = vdwg.mxu0
    %6678 = vmatprep.subr.bf16.mxu0 %v5571
    %6679 = vmatpush1.bf16.msra.mxu0 %v5570
    %6680 = vmatprep.subr.bf16.mxu0 %v5578
    %6681 = vmatpush1.bf16.msra.mxu0 %v5577
    %6682 = vmatprep.subr.bf16.mxu0 %v5585
    %6683 = vmatpush1.bf16.msra.mxu0 %v5584
    %6684 = vmatprep.subr.bf16.mxu0 %v5592
    %6685 = vmatpush1.bf16.msra.mxu0 %v5591
    %6686 = vmatprep.subr.bf16.mxu0 %v5599
    %6687 = vmatpush1.bf16.msra.mxu0 %v5598
    %6688 = vmatprep.subr.bf16.mxu0 %v5606
    %6689 = vmatpush1.bf16.msra.mxu0 %v5605
    %6690 = vmatprep.subr.bf16.mxu0 %v5613
    %6691 = vmatpush1.bf16.msra.mxu0 %v5612
    %6692 = vmatprep.subr.bf16.mxu0 %v5620
    %6693 = vmatpush1.bf16.msra.mxu0 %v5619
    %6694 = vmatprep.subr.bf16.mxu0 %v5627
    %6695 = vmatpush1.bf16.msra.mxu0 %v5626
    %6696 = vmatprep.subr.bf16.mxu0 %v5634
    %6697 = vmatpush1.bf16.msra.mxu0 %v5633
    %6698 = vmatprep.subr.bf16.mxu0 %v5641
    %6699 = vmatpush1.bf16.msra.mxu0 %v5640
    %6700 = vmatprep.subr.bf16.mxu0 %v5648
    %6701 = vmatpush1.bf16.msra.mxu0 %v5647
    %6702 = vmatprep.subr.bf16.mxu0 %v5655
    %6703 = vmatpush1.bf16.msra.mxu0 %v5654
    %6704 = vmatprep.subr.bf16.mxu0 %v5662
    %6705 = vmatpush1.bf16.msra.mxu0 %v5661
    %6706 = vmatprep.subr.bf16.mxu0 %v5669
    %6707 = vmatpush1.bf16.msra.mxu0 %v5668
    %6708 = vmatprep.subr.bf16.mxu0 %v5676
    %6709 = vmatpush1.bf16.msra.mxu0 %v5675
    %6710 = vmatprep.mubr.bf16.mxu0 %v3843
    %6711 = vmatmul.mubr.bf16.gmra.mrb[0].mxu0 %v3842
    %v6712 = vpop.f32.mrb[0].mxu0
    %v6713 = vadd.f32 %v4318, %v6712
    %v6714 = vpop.f32.mrb[0].mxu0
    %v6715 = vadd.f32 %v4322, %v6714
    %v6716 = vpop.f32.mrb[0].mxu0
    %v6717 = vpop.f32.mrb[0].mxu0
    %6718 = vdwg.mxu0
    %6719 = vmatprep.subr.bf16.mxu0 %v5683
    %6720 = vmatpush1.bf16.msra.mxu0 %v5682
    %6721 = vmatprep.subr.bf16.mxu0 %v5690
    %6722 = vmatpush1.bf16.msra.mxu0 %v5689
    %6723 = vmatprep.subr.bf16.mxu0 %v5697
    %6724 = vmatpush1.bf16.msra.mxu0 %v5696
    %6725 = vmatprep.subr.bf16.mxu0 %v5704
    %6726 = vmatpush1.bf16.msra.mxu0 %v5703
    %6727 = vmatprep.subr.bf16.mxu0 %v5711
    %6728 = vmatpush1.bf16.msra.mxu0 %v5710
    %6729 = vmatprep.subr.bf16.mxu0 %v5718
    %6730 = vmatpush1.bf16.msra.mxu0 %v5717
    %6731 = vmatprep.subr.bf16.mxu0 %v5725
    %6732 = vmatpush1.bf16.msra.mxu0 %v5724
    %6733 = vmatprep.subr.bf16.mxu0 %v5732
    %6734 = vmatpush1.bf16.msra.mxu0 %v5731
    %6735 = vmatprep.subr.bf16.mxu0 %v5739
    %6736 = vmatpush1.bf16.msra.mxu0 %v5738
    %6737 = vmatprep.subr.bf16.mxu0 %v5746
    %6738 = vmatpush1.bf16.msra.mxu0 %v5745
    %6739 = vmatprep.subr.bf16.mxu0 %v5753
    %6740 = vmatpush1.bf16.msra.mxu0 %v5752
    %6741 = vmatprep.subr.bf16.mxu0 %v5760
    %6742 = vmatpush1.bf16.msra.mxu0 %v5759
    %6743 = vmatprep.subr.bf16.mxu0 %v5767
    %6744 = vmatpush1.bf16.msra.mxu0 %v5766
    %6745 = vmatprep.subr.bf16.mxu0 %v5774
    %6746 = vmatpush1.bf16.msra.mxu0 %v5773
    %6747 = vmatprep.subr.bf16.mxu0 %v5781
    %6748 = vmatpush1.bf16.msra.mxu0 %v5780
    %6749 = vmatprep.subr.bf16.mxu0 %v5788
    %6750 = vmatpush1.bf16.msra.mxu0 %v5787
    %6751 = vmatprep.mubr.bf16.mxu0 %v3845
    %6752 = vmatmul.mubr.bf16.gmra.mrb[0].mxu0 %v3844
    %v6753 = vpop.f32.mrb[0].mxu0
    %v6754 = vadd.f32 %v6713, %v6753
    %v6755 = vpop.f32.mrb[0].mxu0
    %v6756 = vadd.f32 %v6715, %v6755
    %v6757 = vpop.f32.mrb[0].mxu0
    %v6758 = vpop.f32.mrb[0].mxu0
    %6759 = vdwg.mxu0
    %6760 = vmatprep.subr.bf16.mxu0 %v5795
    %6761 = vmatpush1.bf16.msra.mxu0 %v5794
    %6762 = vmatprep.subr.bf16.mxu0 %v5802
    %6763 = vmatpush1.bf16.msra.mxu0 %v5801
    %6764 = vmatprep.subr.bf16.mxu0 %v5809
    %6765 = vmatpush1.bf16.msra.mxu0 %v5808
    %6766 = vmatprep.subr.bf16.mxu0 %v5816
    %6767 = vmatpush1.bf16.msra.mxu0 %v5815
    %6768 = vmatprep.subr.bf16.mxu0 %v5823
    %6769 = vmatpush1.bf16.msra.mxu0 %v5822
    %6770 = vmatprep.subr.bf16.mxu0 %v5830
    %6771 = vmatpush1.bf16.msra.mxu0 %v5829
    %6772 = vmatprep.subr.bf16.mxu0 %v5837
    %6773 = vmatpush1.bf16.msra.mxu0 %v5836
    %6774 = vmatprep.subr.bf16.mxu0 %v5844
    %6775 = vmatpush1.bf16.msra.mxu0 %v5843
    %6776 = vmatprep.subr.bf16.mxu0 %v5851
    %6777 = vmatpush1.bf16.msra.mxu0 %v5850
    %6778 = vmatprep.subr.bf16.mxu0 %v5858
    %6779 = vmatpush1.bf16.msra.mxu0 %v5857
    %6780 = vmatprep.subr.bf16.mxu0 %v5865
    %6781 = vmatpush1.bf16.msra.mxu0 %v5864
    %6782 = vmatprep.subr.bf16.mxu0 %v5872
    %6783 = vmatpush1.bf16.msra.mxu0 %v5871
    %6784 = vmatprep.subr.bf16.mxu0 %v5879
    %6785 = vmatpush1.bf16.msra.mxu0 %v5878
    %6786 = vmatprep.subr.bf16.mxu0 %v5886
    %6787 = vmatpush1.bf16.msra.mxu0 %v5885
    %6788 = vmatprep.subr.bf16.mxu0 %v5893
    %6789 = vmatpush1.bf16.msra.mxu0 %v5892
    %6790 = vmatprep.subr.bf16.mxu0 %v5900
    %6791 = vmatpush1.bf16.msra.mxu0 %v5899
    %6792 = vmatprep.mubr.bf16.mxu0 %v3847
    %6793 = vmatmul.mubr.bf16.gmra.mrb[0].mxu0 %v3846
    %v6794 = vpop.f32.mrb[0].mxu0
    %v6795 = vadd.f32 %v6754, %v6794
    %v6796 = vpop.f32.mrb[0].mxu0
    %v6797 = vadd.f32 %v6756, %v6796
    %v6798 = vpop.f32.mrb[0].mxu0
    %v6799 = vpop.f32.mrb[0].mxu0
    %6800 = vdwg.mxu0
    %6801 = vmatprep.subr.bf16.mxu0 %v5907
    %6802 = vmatpush1.bf16.msra.mxu0 %v5906
    %6803 = vmatprep.subr.bf16.mxu0 %v5914
    %6804 = vmatpush1.bf16.msra.mxu0 %v5913
    %6805 = vmatprep.subr.bf16.mxu0 %v5921
    %6806 = vmatpush1.bf16.msra.mxu0 %v5920
    %6807 = vmatprep.subr.bf16.mxu0 %v5928
    %6808 = vmatpush1.bf16.msra.mxu0 %v5927
    %6809 = vmatprep.subr.bf16.mxu0 %v5935
    %6810 = vmatpush1.bf16.msra.mxu0 %v5934
    %6811 = vmatprep.subr.bf16.mxu0 %v5942
    %6812 = vmatpush1.bf16.msra.mxu0 %v5941
    %6813 = vmatprep.subr.bf16.mxu0 %v5949
    %6814 = vmatpush1.bf16.msra.mxu0 %v5948
    %6815 = vmatprep.subr.bf16.mxu0 %v5956
    %6816 = vmatpush1.bf16.msra.mxu0 %v5955
    %6817 = vmatprep.subr.bf16.mxu0 0
    %6818 = vmatpush1.bf16.msra.mxu0 0
    %6819 = vmatprep.subr.bf16.mxu0 0
    %6820 = vmatpush1.bf16.msra.mxu0 0
    %6821 = vmatprep.subr.bf16.mxu0 0
    %6822 = vmatpush1.bf16.msra.mxu0 0
    %6823 = vmatprep.subr.bf16.mxu0 0
    %6824 = vmatpush1.bf16.msra.mxu0 0
    %6825 = vmatprep.subr.bf16.mxu0 0
    %6826 = vmatpush1.bf16.msra.mxu0 0
    %6827 = vmatprep.subr.bf16.mxu0 0
    %6828 = vmatpush1.bf16.msra.mxu0 0
    %6829 = vmatprep.subr.bf16.mxu0 0
    %6830 = vmatpush1.bf16.msra.mxu0 0
    %6831 = vmatprep.subr.bf16.mxu0 0
    %6832 = vmatpush1.bf16.msra.mxu0 0
    %6833 = vmatprep.mubr.bf16.mxu0 0
    %6834 = vmatmul.mubr.bf16.gmra.mrb[0].mxu0 %v3848
    %v6835 = vpop.f32.mrb[0].mxu0
    %v6836 = vadd.f32 %v6795, %v6835
    %v6837 = vpop.f32.mrb[0].mxu0
    %v6838 = vadd.f32 %v6797, %v6837
    %v6839 = vpop.f32.mrb[0].mxu0
    %v6840 = vpop.f32.mrb[0].mxu0
    %6841 = vdwg.mxu0
    %6842 = vmatprep.subr.bf16.mxu0 0
    %6843 = vmatpush1.bf16.msra.mxu0 %v5572
    %6844 = vmatprep.subr.bf16.mxu0 0
    %6845 = vmatpush1.bf16.msra.mxu0 %v5579
    %6846 = vmatprep.subr.bf16.mxu0 0
    %6847 = vmatpush1.bf16.msra.mxu0 %v5586
    %6848 = vmatprep.subr.bf16.mxu0 0
    %6849 = vmatpush1.bf16.msra.mxu0 %v5593
    %6850 = vmatprep.subr.bf16.mxu0 0
    %6851 = vmatpush1.bf16.msra.mxu0 %v5600
    %6852 = vmatprep.subr.bf16.mxu0 0
    %6853 = vmatpush1.bf16.msra.mxu0 %v5607
    %6854 = vmatprep.subr.bf16.mxu0 0
    %6855 = vmatpush1.bf16.msra.mxu0 %v5614
    %6856 = vmatprep.subr.bf16.mxu0 0
    %6857 = vmatpush1.bf16.msra.mxu0 %v5621
    %6858 = vmatprep.subr.bf16.mxu0 0
    %6859 = vmatpush1.bf16.msra.mxu0 %v5628
    %6860 = vmatprep.subr.bf16.mxu0 0
    %6861 = vmatpush1.bf16.msra.mxu0 %v5635
    %6862 = vmatprep.subr.bf16.mxu0 0
    %6863 = vmatpush1.bf16.msra.mxu0 %v5642
    %6864 = vmatprep.subr.bf16.mxu0 0
    %6865 = vmatpush1.bf16.msra.mxu0 %v5649
    %6866 = vmatprep.subr.bf16.mxu0 0
    %6867 = vmatpush1.bf16.msra.mxu0 %v5656
    %6868 = vmatprep.subr.bf16.mxu0 0
    %6869 = vmatpush1.bf16.msra.mxu0 %v5663
    %6870 = vmatprep.subr.bf16.mxu0 0
    %6871 = vmatpush1.bf16.msra.mxu0 %v5670
    %6872 = vmatprep.subr.bf16.mxu0 0
    %6873 = vmatpush1.bf16.msra.mxu0 %v5677
    %6874 = vmatprep.mubr.bf16.mxu0 %v3843
    %6875 = vmatmul.mubr.bf16.gmra.mrb[0].mxu0 %v3842
    %v6876 = vpop.f32.mrb[0].mxu0
    %v6877 = vadd.f32 %v4326, %v6876
    %v6878 = vpop.f32.mrb[0].mxu0
    %v6879 = vpop.f32.mrb[0].mxu0
    %v6880 = vpop.f32.mrb[0].mxu0
    %6881 = vdwg.mxu0
    %6882 = vmatprep.subr.bf16.mxu0 0
    %6883 = vmatpush1.bf16.msra.mxu0 %v5684
    %6884 = vmatprep.subr.bf16.mxu0 0
    %6885 = vmatpush1.bf16.msra.mxu0 %v5691
    %6886 = vmatprep.subr.bf16.mxu0 0
    %6887 = vmatpush1.bf16.msra.mxu0 %v5698
    %6888 = vmatprep.subr.bf16.mxu0 0
    %6889 = vmatpush1.bf16.msra.mxu0 %v5705
    %6890 = vmatprep.subr.bf16.mxu0 0
    %6891 = vmatpush1.bf16.msra.mxu0 %v5712
    %6892 = vmatprep.subr.bf16.mxu0 0
    %6893 = vmatpush1.bf16.msra.mxu0 %v5719
    %6894 = vmatprep.subr.bf16.mxu0 0
    %6895 = vmatpush1.bf16.msra.mxu0 %v5726
    %6896 = vmatprep.subr.bf16.mxu0 0
    %6897 = vmatpush1.bf16.msra.mxu0 %v5733
    %6898 = vmatprep.subr.bf16.mxu0 0
    %6899 = vmatpush1.bf16.msra.mxu0 %v5740
    %6900 = vmatprep.subr.bf16.mxu0 0
    %6901 = vmatpush1.bf16.msra.mxu0 %v5747
    %6902 = vmatprep.subr.bf16.mxu0 0
    %6903 = vmatpush1.bf16.msra.mxu0 %v5754
    %6904 = vmatprep.subr.bf16.mxu0 0
    %6905 = vmatpush1.bf16.msra.mxu0 %v5761
    %6906 = vmatprep.subr.bf16.mxu0 0
    %6907 = vmatpush1.bf16.msra.mxu0 %v5768
    %6908 = vmatprep.subr.bf16.mxu0 0
    %6909 = vmatpush1.bf16.msra.mxu0 %v5775
    %6910 = vmatprep.subr.bf16.mxu0 0
    %6911 = vmatpush1.bf16.msra.mxu0 %v5782
    %6912 = vmatprep.subr.bf16.mxu0 0
    %6913 = vmatpush1.bf16.msra.mxu0 %v5789
    %6914 = vmatprep.mubr.bf16.mxu0 %v3845
    %6915 = vmatmul.mubr.bf16.gmra.mrb[0].mxu0 %v3844
    %v6916 = vpop.f32.mrb[0].mxu0
    %v6917 = vadd.f32 %v6877, %v6916
    %v6918 = vpop.f32.mrb[0].mxu0
    %v6919 = vpop.f32.mrb[0].mxu0
    %v6920 = vpop.f32.mrb[0].mxu0
    %6921 = vdwg.mxu0
    %6922 = vmatprep.subr.bf16.mxu0 0
    %6923 = vmatpush1.bf16.msra.mxu0 %v5796
    %6924 = vmatprep.subr.bf16.mxu0 0
    %6925 = vmatpush1.bf16.msra.mxu0 %v5803
    %6926 = vmatprep.subr.bf16.mxu0 0
    %6927 = vmatpush1.bf16.msra.mxu0 %v5810
    %6928 = vmatprep.subr.bf16.mxu0 0
    %6929 = vmatpush1.bf16.msra.mxu0 %v5817
    %6930 = vmatprep.subr.bf16.mxu0 0
    %6931 = vmatpush1.bf16.msra.mxu0 %v5824
    %6932 = vmatprep.subr.bf16.mxu0 0
    %6933 = vmatpush1.bf16.msra.mxu0 %v5831
    %6934 = vmatprep.subr.bf16.mxu0 0
    %6935 = vmatpush1.bf16.msra.mxu0 %v5838
    %6936 = vmatprep.subr.bf16.mxu0 0
    %6937 = vmatpush1.bf16.msra.mxu0 %v5845
    %6938 = vmatprep.subr.bf16.mxu0 0
    %6939 = vmatpush1.bf16.msra.mxu0 %v5852
    %6940 = vmatprep.subr.bf16.mxu0 0
    %6941 = vmatpush1.bf16.msra.mxu0 %v5859
    %6942 = vmatprep.subr.bf16.mxu0 0
    %6943 = vmatpush1.bf16.msra.mxu0 %v5866
    %6944 = vmatprep.subr.bf16.mxu0 0
    %6945 = vmatpush1.bf16.msra.mxu0 %v5873
    %6946 = vmatprep.subr.bf16.mxu0 0
    %6947 = vmatpush1.bf16.msra.mxu0 %v5880
    %6948 = vmatprep.subr.bf16.mxu0 0
    %6949 = vmatpush1.bf16.msra.mxu0 %v5887
    %6950 = vmatprep.subr.bf16.mxu0 0
    %6951 = vmatpush1.bf16.msra.mxu0 %v5894
    %6952 = vmatprep.subr.bf16.mxu0 0
    %6953 = vmatpush1.bf16.msra.mxu0 %v5901
    %6954 = vmatprep.mubr.bf16.mxu0 %v3847
    %6955 = vmatmul.mubr.bf16.gmra.mrb[0].mxu0 %v3846
    %v6956 = vpop.f32.mrb[0].mxu0
    %v6957 = vadd.f32 %v6917, %v6956
    %v6958 = vpop.f32.mrb[0].mxu0
    %v6959 = vpop.f32.mrb[0].mxu0
    %v6960 = vpop.f32.mrb[0].mxu0
    %6961 = vdwg.mxu0
    %6962 = vmatprep.subr.bf16.mxu0 0
    %6963 = vmatpush1.bf16.msra.mxu0 %v5908
    %6964 = vmatprep.subr.bf16.mxu0 0
    %6965 = vmatpush1.bf16.msra.mxu0 %v5915
    %6966 = vmatprep.subr.bf16.mxu0 0
    %6967 = vmatpush1.bf16.msra.mxu0 %v5922
    %6968 = vmatprep.subr.bf16.mxu0 0
    %6969 = vmatpush1.bf16.msra.mxu0 %v5929
    %6970 = vmatprep.subr.bf16.mxu0 0
    %6971 = vmatpush1.bf16.msra.mxu0 %v5936
    %6972 = vmatprep.subr.bf16.mxu0 0
    %6973 = vmatpush1.bf16.msra.mxu0 %v5943
    %6974 = vmatprep.subr.bf16.mxu0 0
    %6975 = vmatpush1.bf16.msra.mxu0 %v5950
    %6976 = vmatprep.subr.bf16.mxu0 0
    %6977 = vmatpush1.bf16.msra.mxu0 %v5957
    %6978 = vmatprep.subr.bf16.mxu0 0
    %6979 = vmatpush1.bf16.msra.mxu0 0
    %6980 = vmatprep.subr.bf16.mxu0 0
    %6981 = vmatpush1.bf16.msra.mxu0 0
    %6982 = vmatprep.subr.bf16.mxu0 0
    %6983 = vmatpush1.bf16.msra.mxu0 0
    %6984 = vmatprep.subr.bf16.mxu0 0
    %6985 = vmatpush1.bf16.msra.mxu0 0
    %6986 = vmatprep.subr.bf16.mxu0 0
    %6987 = vmatpush1.bf16.msra.mxu0 0
    %6988 = vmatprep.subr.bf16.mxu0 0
    %6989 = vmatpush1.bf16.msra.mxu0 0
    %6990 = vmatprep.subr.bf16.mxu0 0
    %6991 = vmatpush1.bf16.msra.mxu0 0
    %6992 = vmatprep.subr.bf16.mxu0 0
    %6993 = vmatpush1.bf16.msra.mxu0 0
    %6994 = vmatprep.mubr.bf16.mxu0 0
    %6995 = vmatmul.mubr.bf16.gmra.mrb[0].mxu0 %v3848
    %v6996 = vpop.f32.mrb[0].mxu0
    %v6997 = vadd.f32 %v6957, %v6996
    %v6998 = vpop.f32.mrb[0].mxu0
    %v6999 = vpop.f32.mrb[0].mxu0
    %v7000 = vpop.f32.mrb[0].mxu0
    %7001 = vdwg.mxu0
    %v7002 = vtanh.pop %v6508
    %v7003 = vtanh.pop %v6510
    %v7004 = vtanh.pop %v6672
    %v7005 = vtanh.pop %v6674
    %v7006 = vtanh.pop %v6836
    %v7007 = vtanh.pop %v6838
    %v7008 = vtanh.pop %v6997
    %7009 = vst [vmem:[#allocation14] sm:$0xff] %v7002
    %7010 = vst [vmem:[#allocation14 + $0x8] sm:$0xff] %v7003
    %7011 = vst [vmem:[#allocation14 + $0x10] sm:$0xff] %v7004
    %7012 = vst [vmem:[#allocation14 + $0x18] sm:$0xff] %v7005
    %7013 = vst [vmem:[#allocation14 + $0x20] sm:$0xff] %v7006
    %7014 = vst [vmem:[#allocation14 + $0x28] sm:$0xff] %v7007
    %7015 = vst [vmem:[#allocation14 + $0x30] sm:$0xff] %v7008
    // Predicated region
    $region58: #{tpu_custom_call.1} parent=1 // pred_check
      _
    $region59: #{tpu_custom_call.1} parent=1 // pred_check_branch
      %7017 = sbr.rel (0) target = $region61
    $region60: #{tpu_custom_call.1} parent=1 // pred_region
      %s7019 = ssub.s32 896, 896
      %7020 = vsyncadd [#allocation4], %s7019
      %s7022 = sshll.u32 [#allocation14], 4
      %s7023 = int_to_ptr.vmem [resolvable:$true] %s7022
      %7025 = dma.vmem_to_hbm [thread:$0]  %s7023, 896, %s7, [#allocation4]
    $region61: #{tpu_custom_call.1} parent=1 // pred_fallthru
      _
    // Predicated region
    $region62: #{tpu_custom_call.1} parent=1 // pred_check
      _
    $region63: #{tpu_custom_call.1} parent=1 // pred_check_branch
      %7027 = sbr.rel (0) target = $region65
    $region64: #{tpu_custom_call.1} parent=1 // pred_region
      %7028 = dma.done [#allocation4], 896
    $region65: #{tpu_custom_call.1} parent=1 // pred_fallthru
      _
    %7029 = vsyncpa [#allocation3], 1
    %7030 = vsyncpa [#allocation6], 1
    %7031 = vsyncpa [#allocation9], 1
    %7032 = vsyncpa [#allocation12], 1
    %7033 = vsyncpa [#allocation4], 1

</llo_original>
